<compile_context>
chip_gen: v5e
topology: v5e:2x2
jax: 0.10.0
libtpu: 0.0.40
codegen_flags: <defaults>
</compile_context>

<pallas_src>
import functools

import numpy as np

import jax
import jax.numpy as jnp
from jax.experimental import pallas as pl
from jax.experimental.pallas import tpu as pltpu

LEAKY_SLOPE = 0.01  # torch.nn.LeakyReLU default


def _round_up(x, m):
    return (x + m - 1) // m * m


def _leaky_relu(x):
    return jnp.where(x > 0, x, LEAKY_SLOPE * x)


# -----------------------------------------------------------------------------
# Kernel
# -----------------------------------------------------------------------------
def fcsae_kernel(x_ref, w0_ref, b0_ref, w_ref, b_ref, out_ref):
    """Fused FcSAE forward for one (TB, in_features) batch tile.

    x_ref  : (TB, in_features)   f32
    w0_ref : (in_features, COL)  bf16   first encoder layer (in -> 64, zero padded)
    b0_ref : (1, COL)            f32
    w_ref  : (10, COL, COL)      bf16   remaining layers, zero padded / placed
    b_ref  : (10, 1, COL)        f32
    out_ref: (TB, COL)           f32    [enc | dec | logit | zero pad] slab
    """

    def lin(h, l):
        # bf16 MXU matmul with f32 accumulation; bias add in f32.
        return (jnp.dot(h.astype(jnp.bfloat16), w_ref[l],
                        preferred_element_type=jnp.float32) + b_ref[l])

    x = x_ref[...].astype(jnp.float32)

    # --- encoder ---
    h = _leaky_relu(jnp.dot(x.astype(jnp.bfloat16), w0_ref[...],
                            preferred_element_type=jnp.float32) + b0_ref[...])
    h = _leaky_relu(lin(h, 0))        # 64 -> 32
    h = _leaky_relu(lin(h, 1))        # 32 -> 16
    enc = lin(h, 2)                   # 16 -> latent, placed at cols [0, latent)

    # --- fused decoder[0] + classifier[0] (both consume `enc`) ---
    hdc = _leaky_relu(lin(enc, 3))    # dec h at cols [0,16), cls h at cols [16,48)

    # --- decoder ---
    hd = _leaky_relu(lin(hdc, 4))     # 16 -> 32
    hd = _leaky_relu(lin(hd, 5))      # 32 -> 64
    dec = lin(hd, 6)                  # 64 -> in, placed at cols [latent, latent+in)

    # --- classifier ---
    hc = _leaky_relu(lin(hdc, 7))     # 32 -> 16 (weight rows offset by 16)
    hc = _leaky_relu(lin(hc, 8))      # 16 -> 8
    logit = lin(hc, 9)                # 8 -> classes, placed at [latent+in, ...)

    # Non-zero column ranges of enc/dec/logit are disjoint -> sum == concat.
    out_ref[...] = (enc + dec + logit).astype(out_ref.dtype)


# -----------------------------------------------------------------------------
# Parameter init (torch.nn.Linear-style) and host-side packing
# -----------------------------------------------------------------------------
def init_fcsae_params(key, in_features, latent_dim, num_classes, dtype=jnp.float32):
    """Flat list [ew0, eb0, ..., cw3, cb3] (24 arrays), torch default uniform init."""
    dims_enc = [in_features, 64, 32, 16, latent_dim]
    dims_dec = [latent_dim, 16, 32, 64, in_features]
    dims_cls = [latent_dim, 32, 16, 8, num_classes]

    params = []
    for dims in (dims_enc, dims_dec, dims_cls):
        for fan_in, fan_out in zip(dims[:-1], dims[1:]):
            key, kw, kb = jax.random.split(key, 3)
            bound = 1.0 / (fan_in ** 0.5)
            params.append(jax.random.uniform(kw, (fan_in, fan_out), dtype, -bound, bound))
            params.append(jax.random.uniform(kb, (1, fan_out), dtype, -bound, bound))
    return params


def pack_fcsae_params(params, *, in_features, latent_dim, num_classes,
                      weight_dtype=jnp.bfloat16):
    """Pack the 24 arrays into (w0, b0, wstack, bstack), zero-padded to COL lanes.

    Final-layer weights are placed at the column offsets of the fused output
    slab: enc -> [0, latent), dec -> [latent, latent+in), logit -> [latent+in, +classes).
    """
    (ew0, eb0, ew1, eb1, ew2, eb2, ew3, eb3,
     dw0, db0, dw1, db1, dw2, db2, dw3, db3,
     cw0, cb0, cw1, cb1, cw2, cb2, cw3, cb3) = [np.asarray(p, np.float32) for p in params]

    col = _round_up(max(latent_dim + in_features + num_classes, 64), 128)
    dec_off = latent_dim
    cls_off = latent_dim + in_features

    w0 = np.zeros((in_features, col), np.float32)
    b0 = np.zeros((1, col), np.float32)
    w0[:, :ew0.shape[1]] = ew0
    b0[0, :ew0.shape[1]] = eb0.reshape(-1)

    ws = np.zeros((10, col, col), np.float32)
    bs = np.zeros((10, 1, col), np.float32)

    def put(slot, w, b, row_off=0, col_off=0):
        fi, fo = w.shape
        ws[slot, row_off:row_off + fi, col_off:col_off + fo] = w
        bs[slot, 0, col_off:col_off + fo] = b.reshape(-1)

    put(0, ew1, eb1)                         # enc 64 -> 32
    put(1, ew2, eb2)                         # enc 32 -> 16
    put(2, ew3, eb3)                         # enc 16 -> latent  (cols [0, latent))
    put(3, dw0, db0)                         # dec latent -> 16  (cols [0, 16))
    ws[3, :latent_dim, 16:16 + cw0.shape[1]] = cw0   # cls latent -> 32 (cols [16, 48))
    bs[3, 0, 16:16 + cw0.shape[1]] = cb0.reshape(-1)
    put(4, dw1, db1)                         # dec 16 -> 32
    put(5, dw2, db2)                         # dec 32 -> 64
    put(6, dw3, db3, col_off=dec_off)        # dec 64 -> in   (cols [latent, latent+in))
    put(7, cw1, cb1, row_off=16)             # cls 32 -> 16   (reads cols [16, 48))
    put(8, cw2, cb2)                         # cls 16 -> 8
    put(9, cw3, cb3, col_off=cls_off)        # cls 8 -> classes (cols [latent+in, ...))

    return (jnp.asarray(w0, weight_dtype), jnp.asarray(b0, jnp.float32),
            jnp.asarray(ws, weight_dtype), jnp.asarray(bs, jnp.float32))


# -----------------------------------------------------------------------------
# Forward wrapper
# -----------------------------------------------------------------------------
@functools.partial(
    jax.jit,
    static_argnames=("in_features", "latent_dim", "num_classes", "batch_tile"))
def fcsae_forward(x, packed_params, *, in_features, latent_dim, num_classes,
                  batch_tile=512):
    w0, b0, ws, bs = packed_params
    col = ws.shape[-1]

    x2d = x.reshape(-1, in_features).astype(jnp.float32)   # x.view(-1, in_features)
    B = x2d.shape[0]

    # Large batch tile (multiple of 8 sublanes); pad batch so any B works.
    TB = _round_up(min(batch_tile, _round_up(B, 8)), 8)
    Bp = _round_up(B, TB)
    if Bp != B:
        x2d = jnp.pad(x2d, ((0, Bp - B), (0, 0)))
    grid = (Bp // TB,)

    flops = 2 * Bp * (in_features * col + 10 * col * col)
    bytes_accessed = (Bp * in_features * 4 + Bp * col * 4
                      + (w0.size + ws.size) * 2 + (b0.size + bs.size) * 4)

    slab = pl.pallas_call(
        fcsae_kernel,
        out_shape=jax.ShapeDtypeStruct((Bp, col), jnp.float32),
        grid_spec=pltpu.PrefetchScalarGridSpec(
            num_scalar_prefetch=0,
            grid=grid,
            in_specs=[
                pl.BlockSpec((TB, in_features), lambda i: (i, 0)),   # x tile
                pl.BlockSpec(w0.shape, lambda i: (0, 0)),            # params: full,
                pl.BlockSpec(b0.shape, lambda i: (0, 0)),            # constant index
                pl.BlockSpec(ws.shape, lambda i: (0, 0, 0)),         # -> fetched once
                pl.BlockSpec(bs.shape, lambda i: (0, 0, 0)),
            ],
            out_specs=pl.BlockSpec((TB, col), lambda i: (i, 0)),     # lane-dense slab
        ),
        compiler_params=pltpu.CompilerParams(
            dimension_semantics=("parallel",)),
        cost_estimate=pl.CostEstimate(
            flops=flops, transcendentals=0, bytes_accessed=bytes_accessed),
    )(x2d, w0, b0, ws, bs)

    slab = slab[:B]
    enc = slab[:, :latent_dim]
    dec = slab[:, latent_dim:latent_dim + in_features]
    logit = slab[:, latent_dim + in_features:latent_dim + in_features + num_classes]
    return enc, dec, logit


# -----------------------------------------------------------------------------
# Pure-JAX reference
# -----------------------------------------------------------------------------
def fcsae_reference(x, params, in_features, *, bf16_matmul=False):
    x = x.reshape(-1, in_features).astype(jnp.float32)
    (ew0, eb0, ew1, eb1, ew2, eb2, ew3, eb3,
     dw0, db0, dw1, db1, dw2, db2, dw3, db3,
     cw0, cb0, cw1, cb1, cw2, cb2, cw3, cb3) = params

    def lin(h, w, b):
        if bf16_matmul:
            return jnp.dot(h.astype(jnp.bfloat16), w.astype(jnp.bfloat16),
                           preferred_element_type=jnp.float32) + b
        return jnp.dot(h, w, preferred_element_type=jnp.float32) + b

    h = _leaky_relu(lin(x, ew0, eb0))
    h = _leaky_relu(lin(h, ew1, eb1))
    h = _leaky_relu(lin(h, ew2, eb2))
    enc = lin(h, ew3, eb3)

    h = _leaky_relu(lin(enc, dw0, db0))
    h = _leaky_relu(lin(h, dw1, db1))
    h = _leaky_relu(lin(h, dw2, db2))
    dec = lin(h, dw3, db3)

    h = _leaky_relu(lin(enc, cw0, cb0))
    h = _leaky_relu(lin(h, cw1, cb1))
    h = _leaky_relu(lin(h, cw2, cb2))
    logit = lin(h, cw3, cb3)
    return enc, dec, logit


# -----------------------------------------------------------------------------
# Demo / correctness check
# -----------------------------------------------------------------------------
if __name__ == "__main__":
    IN_FEATURES = 64
    LATENT_DIM = 2
    NUM_CLASSES = 4
    BATCH = 512          # still tiny data; large enough to exercise the batch tiling
    BATCH_TILE = 256     # grid of 2 steps (lets v7x use both TensorCores)

    key = jax.random.PRNGKey(0)
    k_params, k_x = jax.random.split(key)
    params = init_fcsae_params(k_params, IN_FEATURES, LATENT_DIM, NUM_CLASSES)
    packed = pack_fcsae_params(params, in_features=IN_FEATURES,
                               latent_dim=LATENT_DIM, num_classes=NUM_CLASSES)

    x = jax.random.normal(k_x, (BATCH, IN_FEATURES), dtype=jnp.float32)

    encoded, decoded, logit = fcsae_forward(
        x, packed,
        in_features=IN_FEATURES, latent_dim=LATENT_DIM, num_classes=NUM_CLASSES,
        batch_tile=BATCH_TILE,
    )
    jax.block_until_ready((encoded, decoded, logit))

    assert encoded.shape == (BATCH, LATENT_DIM)
    assert decoded.shape == (BATCH, IN_FEATURES)
    assert logit.shape == (BATCH, NUM_CLASSES)

    # Structural check vs. a reference that mirrors the kernel's bf16 matmul inputs.
    enc_bf, dec_bf, log_bf = fcsae_reference(x, params, IN_FEATURES, bf16_matmul=True)
    assert jnp.allclose(encoded, enc_bf, atol=2e-3, rtol=2e-3)
    assert jnp.allclose(decoded, dec_bf, atol=2e-3, rtol=2e-3)
    assert jnp.allclose(logit, log_bf, atol=2e-3, rtol=2e-3)

    # Semantic check vs. full-f32 reference (bf16 weights introduce only small error).
    enc_f, dec_f, log_f = fcsae_reference(x, params, IN_FEATURES, bf16_matmul=False)
    assert jnp.allclose(encoded, enc_f, atol=5e-2, rtol=5e-2)
    assert jnp.allclose(decoded, dec_f, atol=5e-2, rtol=5e-2)
    assert jnp.allclose(logit, log_f, atol=5e-2, rtol=5e-2)

    print("KERNEL_OK")
</pallas_src>

<mosaic_0001>
module attributes {stable_mosaic.version = 11 : i64} {
  func.func @fcsae_kernel(%arg0: i32, %arg1: memref<256x64xf32, #tpu.memory_space<vmem>>, %arg2: memref<64x128xbf16, #tpu.memory_space<vmem>>, %arg3: memref<1x128xf32, #tpu.memory_space<vmem>>, %arg4: memref<10x128x128xbf16, #tpu.memory_space<vmem>>, %arg5: memref<10x1x128xf32, #tpu.memory_space<vmem>>, %arg6: memref<256x128xf32, #tpu.memory_space<vmem>>) attributes {dimension_semantics = [#tpu.dimension_semantics<parallel>], iteration_bounds = array<i64: 2>, scalar_prefetch = 0 : i64, scratch_operands = 0 : i64, tpu.core_type = #tpu.core_type<tc>, window_params = [{transform_indices = @transform_0, window_bounds = array<i64: 256, 64>}, {pipeline_mode = #tpu.pipeline_mode<synchronous>, transform_indices = @transform_1, window_bounds = array<i64: 64, 128>}, {pipeline_mode = #tpu.pipeline_mode<synchronous>, transform_indices = @transform_2, window_bounds = array<i64: 1, 128>}, {pipeline_mode = #tpu.pipeline_mode<synchronous>, transform_indices = @transform_3, window_bounds = array<i64: 10, 128, 128>}, {pipeline_mode = #tpu.pipeline_mode<synchronous>, transform_indices = @transform_4, window_bounds = array<i64: 10, 1, 128>}, {transform_indices = @transform_5, window_bounds = array<i64: 256, 128>}]} {
    %c0 = arith.constant 0 : index
    %c0_0 = arith.constant 0 : index
    %0 = vector.load %arg1[%c0, %c0_0] : memref<256x64xf32, #tpu.memory_space<vmem>>, vector<256x64xf32>
    %1 = arith.truncf %0 : vector<256x64xf32> to vector<256x64xbf16>
    %c0_1 = arith.constant 0 : index
    %c0_2 = arith.constant 0 : index
    %2 = vector.load %arg2[%c0_1, %c0_2] : memref<64x128xbf16, #tpu.memory_space<vmem>>, vector<64x128xbf16>
    %cst = arith.constant dense<0.000000e+00> : vector<256x128xf32>
    %3 = tpu.matmul %1, %2, %cst {dimension_numbers = #tpu.dot_dimension_numbers<[1], [0], [0], [1], [0, 0, 1, 1], [], []>} : vector<256x64xbf16>, vector<64x128xbf16>, vector<256x128xf32> -> vector<256x128xf32>
    %c0_3 = arith.constant 0 : index
    %c0_4 = arith.constant 0 : index
    %4 = vector.load %arg3[%c0_3, %c0_4] : memref<1x128xf32, #tpu.memory_space<vmem>>, vector<1x128xf32>
    %5 = vector.broadcast %4 : vector<1x128xf32> to vector<256x128xf32>
    %6 = arith.addf %3, %5 : vector<256x128xf32>
    %cst_5 = arith.constant 0.000000e+00 : f32
    %7 = vector.broadcast %cst_5 : f32 to vector<256x128xf32>
    %8 = arith.cmpf ogt, %6, %7 : vector<256x128xf32>
    %cst_6 = arith.constant 0.00999999977 : f32
    %9 = vector.broadcast %cst_6 : f32 to vector<256x128xf32>
    %10 = arith.mulf %9, %6 : vector<256x128xf32>
    %11 = arith.select %8, %6, %10 : vector<256x128xi1>, vector<256x128xf32>
    %12 = arith.truncf %11 : vector<256x128xf32> to vector<256x128xbf16>
    %c0_7 = arith.constant 0 : index
    %c0_8 = arith.constant 0 : index
    %c0_9 = arith.constant 0 : index
    %13 = vector.load %arg4[%c0_7, %c0_8, %c0_9] : memref<10x128x128xbf16, #tpu.memory_space<vmem>>, vector<1x128x128xbf16>
    %14 = vector.shape_cast %13 : vector<1x128x128xbf16> to vector<128x128xbf16>
    %cst_10 = arith.constant dense<0.000000e+00> : vector<256x128xf32>
    %15 = tpu.matmul %12, %14, %cst_10 {dimension_numbers = #tpu.dot_dimension_numbers<[1], [0], [0], [1], [0, 0, 1, 1], [], []>} : vector<256x128xbf16>, vector<128x128xbf16>, vector<256x128xf32> -> vector<256x128xf32>
    %c0_11 = arith.constant 0 : index
    %c0_12 = arith.constant 0 : index
    %c0_13 = arith.constant 0 : index
    %16 = vector.load %arg5[%c0_11, %c0_12, %c0_13] : memref<10x1x128xf32, #tpu.memory_space<vmem>>, vector<1x1x128xf32>
    %17 = vector.shape_cast %16 : vector<1x1x128xf32> to vector<1x128xf32>
    %18 = vector.broadcast %17 : vector<1x128xf32> to vector<256x128xf32>
    %19 = arith.addf %15, %18 : vector<256x128xf32>
    %cst_14 = arith.constant 0.000000e+00 : f32
    %20 = vector.broadcast %cst_14 : f32 to vector<256x128xf32>
    %21 = arith.cmpf ogt, %19, %20 : vector<256x128xf32>
    %cst_15 = arith.constant 0.00999999977 : f32
    %22 = vector.broadcast %cst_15 : f32 to vector<256x128xf32>
    %23 = arith.mulf %22, %19 : vector<256x128xf32>
    %24 = arith.select %21, %19, %23 : vector<256x128xi1>, vector<256x128xf32>
    %25 = arith.truncf %24 : vector<256x128xf32> to vector<256x128xbf16>
    %c1 = arith.constant 1 : index
    %c0_16 = arith.constant 0 : index
    %c0_17 = arith.constant 0 : index
    %26 = vector.load %arg4[%c1, %c0_16, %c0_17] : memref<10x128x128xbf16, #tpu.memory_space<vmem>>, vector<1x128x128xbf16>
    %27 = vector.shape_cast %26 : vector<1x128x128xbf16> to vector<128x128xbf16>
    %cst_18 = arith.constant dense<0.000000e+00> : vector<256x128xf32>
    %28 = tpu.matmul %25, %27, %cst_18 {dimension_numbers = #tpu.dot_dimension_numbers<[1], [0], [0], [1], [0, 0, 1, 1], [], []>} : vector<256x128xbf16>, vector<128x128xbf16>, vector<256x128xf32> -> vector<256x128xf32>
    %c1_19 = arith.constant 1 : index
    %c0_20 = arith.constant 0 : index
    %c0_21 = arith.constant 0 : index
    %29 = vector.load %arg5[%c1_19, %c0_20, %c0_21] : memref<10x1x128xf32, #tpu.memory_space<vmem>>, vector<1x1x128xf32>
    %30 = vector.shape_cast %29 : vector<1x1x128xf32> to vector<1x128xf32>
    %31 = vector.broadcast %30 : vector<1x128xf32> to vector<256x128xf32>
    %32 = arith.addf %28, %31 : vector<256x128xf32>
    %cst_22 = arith.constant 0.000000e+00 : f32
    %33 = vector.broadcast %cst_22 : f32 to vector<256x128xf32>
    %34 = arith.cmpf ogt, %32, %33 : vector<256x128xf32>
    %cst_23 = arith.constant 0.00999999977 : f32
    %35 = vector.broadcast %cst_23 : f32 to vector<256x128xf32>
    %36 = arith.mulf %35, %32 : vector<256x128xf32>
    %37 = arith.select %34, %32, %36 : vector<256x128xi1>, vector<256x128xf32>
    %38 = arith.truncf %37 : vector<256x128xf32> to vector<256x128xbf16>
    %c2 = arith.constant 2 : index
    %c0_24 = arith.constant 0 : index
    %c0_25 = arith.constant 0 : index
    %39 = vector.load %arg4[%c2, %c0_24, %c0_25] : memref<10x128x128xbf16, #tpu.memory_space<vmem>>, vector<1x128x128xbf16>
    %40 = vector.shape_cast %39 : vector<1x128x128xbf16> to vector<128x128xbf16>
    %cst_26 = arith.constant dense<0.000000e+00> : vector<256x128xf32>
    %41 = tpu.matmul %38, %40, %cst_26 {dimension_numbers = #tpu.dot_dimension_numbers<[1], [0], [0], [1], [0, 0, 1, 1], [], []>} : vector<256x128xbf16>, vector<128x128xbf16>, vector<256x128xf32> -> vector<256x128xf32>
    %c2_27 = arith.constant 2 : index
    %c0_28 = arith.constant 0 : index
    %c0_29 = arith.constant 0 : index
    %42 = vector.load %arg5[%c2_27, %c0_28, %c0_29] : memref<10x1x128xf32, #tpu.memory_space<vmem>>, vector<1x1x128xf32>
    %43 = vector.shape_cast %42 : vector<1x1x128xf32> to vector<1x128xf32>
    %44 = vector.broadcast %43 : vector<1x128xf32> to vector<256x128xf32>
    %45 = arith.addf %41, %44 : vector<256x128xf32>
    %46 = arith.truncf %45 : vector<256x128xf32> to vector<256x128xbf16>
    %c3 = arith.constant 3 : index
    %c0_30 = arith.constant 0 : index
    %c0_31 = arith.constant 0 : index
    %47 = vector.load %arg4[%c3, %c0_30, %c0_31] : memref<10x128x128xbf16, #tpu.memory_space<vmem>>, vector<1x128x128xbf16>
    %48 = vector.shape_cast %47 : vector<1x128x128xbf16> to vector<128x128xbf16>
    %cst_32 = arith.constant dense<0.000000e+00> : vector<256x128xf32>
    %49 = tpu.matmul %46, %48, %cst_32 {dimension_numbers = #tpu.dot_dimension_numbers<[1], [0], [0], [1], [0, 0, 1, 1], [], []>} : vector<256x128xbf16>, vector<128x128xbf16>, vector<256x128xf32> -> vector<256x128xf32>
    %c3_33 = arith.constant 3 : index
    %c0_34 = arith.constant 0 : index
    %c0_35 = arith.constant 0 : index
    %50 = vector.load %arg5[%c3_33, %c0_34, %c0_35] : memref<10x1x128xf32, #tpu.memory_space<vmem>>, vector<1x1x128xf32>
    %51 = vector.shape_cast %50 : vector<1x1x128xf32> to vector<1x128xf32>
    %52 = vector.broadcast %51 : vector<1x128xf32> to vector<256x128xf32>
    %53 = arith.addf %49, %52 : vector<256x128xf32>
    %cst_36 = arith.constant 0.000000e+00 : f32
    %54 = vector.broadcast %cst_36 : f32 to vector<256x128xf32>
    %55 = arith.cmpf ogt, %53, %54 : vector<256x128xf32>
    %cst_37 = arith.constant 0.00999999977 : f32
    %56 = vector.broadcast %cst_37 : f32 to vector<256x128xf32>
    %57 = arith.mulf %56, %53 : vector<256x128xf32>
    %58 = arith.select %55, %53, %57 : vector<256x128xi1>, vector<256x128xf32>
    %59 = arith.truncf %58 : vector<256x128xf32> to vector<256x128xbf16>
    %c4 = arith.constant 4 : index
    %c0_38 = arith.constant 0 : index
    %c0_39 = arith.constant 0 : index
    %60 = vector.load %arg4[%c4, %c0_38, %c0_39] : memref<10x128x128xbf16, #tpu.memory_space<vmem>>, vector<1x128x128xbf16>
    %61 = vector.shape_cast %60 : vector<1x128x128xbf16> to vector<128x128xbf16>
    %cst_40 = arith.constant dense<0.000000e+00> : vector<256x128xf32>
    %62 = tpu.matmul %59, %61, %cst_40 {dimension_numbers = #tpu.dot_dimension_numbers<[1], [0], [0], [1], [0, 0, 1, 1], [], []>} : vector<256x128xbf16>, vector<128x128xbf16>, vector<256x128xf32> -> vector<256x128xf32>
    %c4_41 = arith.constant 4 : index
    %c0_42 = arith.constant 0 : index
    %c0_43 = arith.constant 0 : index
    %63 = vector.load %arg5[%c4_41, %c0_42, %c0_43] : memref<10x1x128xf32, #tpu.memory_space<vmem>>, vector<1x1x128xf32>
    %64 = vector.shape_cast %63 : vector<1x1x128xf32> to vector<1x128xf32>
    %65 = vector.broadcast %64 : vector<1x128xf32> to vector<256x128xf32>
    %66 = arith.addf %62, %65 : vector<256x128xf32>
    %cst_44 = arith.constant 0.000000e+00 : f32
    %67 = vector.broadcast %cst_44 : f32 to vector<256x128xf32>
    %68 = arith.cmpf ogt, %66, %67 : vector<256x128xf32>
    %cst_45 = arith.constant 0.00999999977 : f32
    %69 = vector.broadcast %cst_45 : f32 to vector<256x128xf32>
    %70 = arith.mulf %69, %66 : vector<256x128xf32>
    %71 = arith.select %68, %66, %70 : vector<256x128xi1>, vector<256x128xf32>
    %72 = arith.truncf %71 : vector<256x128xf32> to vector<256x128xbf16>
    %c5 = arith.constant 5 : index
    %c0_46 = arith.constant 0 : index
    %c0_47 = arith.constant 0 : index
    %73 = vector.load %arg4[%c5, %c0_46, %c0_47] : memref<10x128x128xbf16, #tpu.memory_space<vmem>>, vector<1x128x128xbf16>
    %74 = vector.shape_cast %73 : vector<1x128x128xbf16> to vector<128x128xbf16>
    %cst_48 = arith.constant dense<0.000000e+00> : vector<256x128xf32>
    %75 = tpu.matmul %72, %74, %cst_48 {dimension_numbers = #tpu.dot_dimension_numbers<[1], [0], [0], [1], [0, 0, 1, 1], [], []>} : vector<256x128xbf16>, vector<128x128xbf16>, vector<256x128xf32> -> vector<256x128xf32>
    %c5_49 = arith.constant 5 : index
    %c0_50 = arith.constant 0 : index
    %c0_51 = arith.constant 0 : index
    %76 = vector.load %arg5[%c5_49, %c0_50, %c0_51] : memref<10x1x128xf32, #tpu.memory_space<vmem>>, vector<1x1x128xf32>
    %77 = vector.shape_cast %76 : vector<1x1x128xf32> to vector<1x128xf32>
    %78 = vector.broadcast %77 : vector<1x128xf32> to vector<256x128xf32>
    %79 = arith.addf %75, %78 : vector<256x128xf32>
    %cst_52 = arith.constant 0.000000e+00 : f32
    %80 = vector.broadcast %cst_52 : f32 to vector<256x128xf32>
    %81 = arith.cmpf ogt, %79, %80 : vector<256x128xf32>
    %cst_53 = arith.constant 0.00999999977 : f32
    %82 = vector.broadcast %cst_53 : f32 to vector<256x128xf32>
    %83 = arith.mulf %82, %79 : vector<256x128xf32>
    %84 = arith.select %81, %79, %83 : vector<256x128xi1>, vector<256x128xf32>
    %85 = arith.truncf %84 : vector<256x128xf32> to vector<256x128xbf16>
    %c6 = arith.constant 6 : index
    %c0_54 = arith.constant 0 : index
    %c0_55 = arith.constant 0 : index
    %86 = vector.load %arg4[%c6, %c0_54, %c0_55] : memref<10x128x128xbf16, #tpu.memory_space<vmem>>, vector<1x128x128xbf16>
    %87 = vector.shape_cast %86 : vector<1x128x128xbf16> to vector<128x128xbf16>
    %cst_56 = arith.constant dense<0.000000e+00> : vector<256x128xf32>
    %88 = tpu.matmul %85, %87, %cst_56 {dimension_numbers = #tpu.dot_dimension_numbers<[1], [0], [0], [1], [0, 0, 1, 1], [], []>} : vector<256x128xbf16>, vector<128x128xbf16>, vector<256x128xf32> -> vector<256x128xf32>
    %c6_57 = arith.constant 6 : index
    %c0_58 = arith.constant 0 : index
    %c0_59 = arith.constant 0 : index
    %89 = vector.load %arg5[%c6_57, %c0_58, %c0_59] : memref<10x1x128xf32, #tpu.memory_space<vmem>>, vector<1x1x128xf32>
    %90 = vector.shape_cast %89 : vector<1x1x128xf32> to vector<1x128xf32>
    %91 = vector.broadcast %90 : vector<1x128xf32> to vector<256x128xf32>
    %92 = arith.addf %88, %91 : vector<256x128xf32>
    %93 = arith.truncf %58 : vector<256x128xf32> to vector<256x128xbf16>
    %c7 = arith.constant 7 : index
    %c0_60 = arith.constant 0 : index
    %c0_61 = arith.constant 0 : index
    %94 = vector.load %arg4[%c7, %c0_60, %c0_61] : memref<10x128x128xbf16, #tpu.memory_space<vmem>>, vector<1x128x128xbf16>
    %95 = vector.shape_cast %94 : vector<1x128x128xbf16> to vector<128x128xbf16>
    %cst_62 = arith.constant dense<0.000000e+00> : vector<256x128xf32>
    %96 = tpu.matmul %93, %95, %cst_62 {dimension_numbers = #tpu.dot_dimension_numbers<[1], [0], [0], [1], [0, 0, 1, 1], [], []>} : vector<256x128xbf16>, vector<128x128xbf16>, vector<256x128xf32> -> vector<256x128xf32>
    %c7_63 = arith.constant 7 : index
    %c0_64 = arith.constant 0 : index
    %c0_65 = arith.constant 0 : index
    %97 = vector.load %arg5[%c7_63, %c0_64, %c0_65] : memref<10x1x128xf32, #tpu.memory_space<vmem>>, vector<1x1x128xf32>
    %98 = vector.shape_cast %97 : vector<1x1x128xf32> to vector<1x128xf32>
    %99 = vector.broadcast %98 : vector<1x128xf32> to vector<256x128xf32>
    %100 = arith.addf %96, %99 : vector<256x128xf32>
    %cst_66 = arith.constant 0.000000e+00 : f32
    %101 = vector.broadcast %cst_66 : f32 to vector<256x128xf32>
    %102 = arith.cmpf ogt, %100, %101 : vector<256x128xf32>
    %cst_67 = arith.constant 0.00999999977 : f32
    %103 = vector.broadcast %cst_67 : f32 to vector<256x128xf32>
    %104 = arith.mulf %103, %100 : vector<256x128xf32>
    %105 = arith.select %102, %100, %104 : vector<256x128xi1>, vector<256x128xf32>
    %106 = arith.truncf %105 : vector<256x128xf32> to vector<256x128xbf16>
    %c8 = arith.constant 8 : index
    %c0_68 = arith.constant 0 : index
    %c0_69 = arith.constant 0 : index
    %107 = vector.load %arg4[%c8, %c0_68, %c0_69] : memref<10x128x128xbf16, #tpu.memory_space<vmem>>, vector<1x128x128xbf16>
    %108 = vector.shape_cast %107 : vector<1x128x128xbf16> to vector<128x128xbf16>
    %cst_70 = arith.constant dense<0.000000e+00> : vector<256x128xf32>
    %109 = tpu.matmul %106, %108, %cst_70 {dimension_numbers = #tpu.dot_dimension_numbers<[1], [0], [0], [1], [0, 0, 1, 1], [], []>} : vector<256x128xbf16>, vector<128x128xbf16>, vector<256x128xf32> -> vector<256x128xf32>
    %c8_71 = arith.constant 8 : index
    %c0_72 = arith.constant 0 : index
    %c0_73 = arith.constant 0 : index
    %110 = vector.load %arg5[%c8_71, %c0_72, %c0_73] : memref<10x1x128xf32, #tpu.memory_space<vmem>>, vector<1x1x128xf32>
    %111 = vector.shape_cast %110 : vector<1x1x128xf32> to vector<1x128xf32>
    %112 = vector.broadcast %111 : vector<1x128xf32> to vector<256x128xf32>
    %113 = arith.addf %109, %112 : vector<256x128xf32>
    %cst_74 = arith.constant 0.000000e+00 : f32
    %114 = vector.broadcast %cst_74 : f32 to vector<256x128xf32>
    %115 = arith.cmpf ogt, %113, %114 : vector<256x128xf32>
    %cst_75 = arith.constant 0.00999999977 : f32
    %116 = vector.broadcast %cst_75 : f32 to vector<256x128xf32>
    %117 = arith.mulf %116, %113 : vector<256x128xf32>
    %118 = arith.select %115, %113, %117 : vector<256x128xi1>, vector<256x128xf32>
    %119 = arith.truncf %118 : vector<256x128xf32> to vector<256x128xbf16>
    %c9 = arith.constant 9 : index
    %c0_76 = arith.constant 0 : index
    %c0_77 = arith.constant 0 : index
    %120 = vector.load %arg4[%c9, %c0_76, %c0_77] : memref<10x128x128xbf16, #tpu.memory_space<vmem>>, vector<1x128x128xbf16>
    %121 = vector.shape_cast %120 : vector<1x128x128xbf16> to vector<128x128xbf16>
    %cst_78 = arith.constant dense<0.000000e+00> : vector<256x128xf32>
    %122 = tpu.matmul %119, %121, %cst_78 {dimension_numbers = #tpu.dot_dimension_numbers<[1], [0], [0], [1], [0, 0, 1, 1], [], []>} : vector<256x128xbf16>, vector<128x128xbf16>, vector<256x128xf32> -> vector<256x128xf32>
    %c9_79 = arith.constant 9 : index
    %c0_80 = arith.constant 0 : index
    %c0_81 = arith.constant 0 : index
    %123 = vector.load %arg5[%c9_79, %c0_80, %c0_81] : memref<10x1x128xf32, #tpu.memory_space<vmem>>, vector<1x1x128xf32>
    %124 = vector.shape_cast %123 : vector<1x1x128xf32> to vector<1x128xf32>
    %125 = vector.broadcast %124 : vector<1x128xf32> to vector<256x128xf32>
    %126 = arith.addf %122, %125 : vector<256x128xf32>
    %127 = arith.addf %45, %92 : vector<256x128xf32>
    %128 = arith.addf %127, %126 : vector<256x128xf32>
    %c0_82 = arith.constant 0 : index
    %c0_83 = arith.constant 0 : index
    %129 = vector.load %arg6[%c0_82, %c0_83] : memref<256x128xf32, #tpu.memory_space<vmem>>, vector<256x128xf32>
    tpu.vector_store %arg6[%c0_82, %c0_83], %128 {strides = array<i32>} : memref<256x128xf32, #tpu.memory_space<vmem>>, vector<256x128xf32>,
    return
  }
  func.func @transform_0(%arg0: i32) -> (i32, i32) {
    %c0_i32 = arith.constant 0 : i32
    %c0_i32_0 = arith.constant 0 : i32
    return %arg0, %c0_i32 : i32, i32
  }
  func.func @transform_1(%arg0: i32) -> (i32, i32) {
    %c0_i32 = arith.constant 0 : i32
    %c0_i32_0 = arith.constant 0 : i32
    %c0_i32_1 = arith.constant 0 : i32
    return %c0_i32, %c0_i32_0 : i32, i32
  }
  func.func @transform_2(%arg0: i32) -> (i32, i32) {
    %c0_i32 = arith.constant 0 : i32
    %c0_i32_0 = arith.constant 0 : i32
    %c0_i32_1 = arith.constant 0 : i32
    return %c0_i32, %c0_i32_0 : i32, i32
  }
  func.func @transform_3(%arg0: i32) -> (i32, i32, i32) {
    %c0_i32 = arith.constant 0 : i32
    %c0_i32_0 = arith.constant 0 : i32
    %c0_i32_1 = arith.constant 0 : i32
    %c0_i32_2 = arith.constant 0 : i32
    return %c0_i32, %c0_i32_0, %c0_i32_1 : i32, i32, i32
  }
  func.func @transform_4(%arg0: i32) -> (i32, i32, i32) {
    %c0_i32 = arith.constant 0 : i32
    %c0_i32_0 = arith.constant 0 : i32
    %c0_i32_1 = arith.constant 0 : i32
    %c0_i32_2 = arith.constant 0 : i32
    return %c0_i32, %c0_i32_0, %c0_i32_1 : i32, i32, i32
  }
  func.func @transform_5(%arg0: i32) -> (i32, i32) {
    %c0_i32 = arith.constant 0 : i32
    %c0_i32_0 = arith.constant 0 : i32
    return %arg0, %c0_i32 : i32, i32
  }
}

</mosaic_0001>

<llo_original>
// kernel: fcsae_forward.1
$region0: #{fcsae_forward.1}
  #allocation0 [shape = 'u32[]', space=smem, size = 0x4, offset = 0x4, fixed_abs, tag = 'smem constant byte address 0x4 - core index']
  #allocation1 [shape = 'u32[72,128]{1,0:T(1,128)}', space=vmem, size = 0x9000, scoped, tag = 'internal scratch']
  %s0 = inlined_call_operand.vmem [shape: f32[512,64], index: 0, kind: input, shape index: {}]
  %s1 = inlined_call_operand.vmem [shape: bf16[64,128], index: 1, kind: input, shape index: {}]
  %s2 = inlined_call_operand.vmem [shape: f32[1,128], index: 2, kind: input, shape index: {}]
  %s3 = inlined_call_operand.vmem [shape: bf16[10,128,128], index: 3, kind: input, shape index: {}]
  %s4 = inlined_call_operand.vmem [shape: f32[10,1,128], index: 4, kind: input, shape index: {}]
  %s5 = inlined_call_operand.vmem [shape: f32[512,128], index: 5, kind: output, shape index: {}]
  %s6 = sld [smem:[#allocation0]]
  $region53: #{fcsae_forward.1} parent=0
    _
  %s8 = ssub.s32 1, %s6
  %s9 = scalar_select 0, %s8, %s6
  loop: start=0, step=1, limit=4
  $region2: #{fcsae_forward.1} parent=0 // loop_pre_header
    _
  $region3: #{fcsae_forward.1} parent=0 // loop_header
    %s11 = sphi 0, %s15
    %p12 = scmp.ge.s32.totalorder %s11, 4
    %s21 = sphi 0, %s23
    %s24 = sphi 0, %s21
    %s25 = sphi 0, %s24
    %s41 = sphi 0, %s25
    %s45 = sphi 0, %s45
    %s47 = sphi 0, %s45
    %s48 = sphi 0, %s47
    %s62 = sphi 0, %s48
    %s66 = sphi 0, %s66
    %s68 = sphi 0, %s66
    %s69 = sphi 0, %s68
    %s83 = sphi 0, %s69
    %s87 = sphi 0, %s87
    %s89 = sphi 0, %s87
    %s90 = sphi 0, %s89
    %s104 = sphi 0, %s90
    %s108 = sphi 0, %s108
    %s110 = sphi 0, %s108
    %s111 = sphi 0, %s110
    %s125 = sphi 0, %s111
    %s131 = sphi 0, %s133
    %s134 = sphi 0, %s131
    %s135 = sphi 0, %s134
    %s151 = sphi 0, %s135
  $region4: #{fcsae_forward.1} parent=0 // loop_header_branch
    %14 = sbr.rel (%p12) target = $region8
  $region5: #{fcsae_forward.1} parent=0 // loop_body
    %s16 = ssub.s32 %s11, 1
    %s17 = ssub.s32 %s11, 2
    %s18 = sadd.s32 %s11, 1
    %s19 = ssub.s32 %s11, %s18
    %p20 = scmp.eq.s32.totalorder %s19, 0
    %s22 = sadd.s32 %s21, 1
    %s23 = scalar_select %p20, %s21, %s22
    %p26 = pneg %p20
    %p27 = scmp.eq.s32.totalorder %s11, 1
    %p28 = por %p26, %p27
    %p29 = scmp.ne.s32.totalorder %s21, %s24
    %p30 = scmp.eq.s32.totalorder %s11, 0
    %p31 = por %p29, %p30
    %p32 = scmp.ne.s32.totalorder %s21, %s24
    %p33 = scmp.eq.s32.totalorder %s16, 1
    %p34 = por %p32, %p33
    %p35 = scmp.ne.s32.totalorder %s24, %s25
    %p36 = scmp.eq.s32.totalorder %s16, 0
    %p37 = por %p35, %p36
    %p38 = scmp.ne.s32.totalorder %s24, %s25
    %p39 = scmp.eq.s32.totalorder %s17, 1
    %p40 = por %p38, %p39
    %p42 = scmp.ne.s32.totalorder %s25, %s41
    %p43 = scmp.eq.s32.totalorder %s17, 0
    %p44 = por %p42, %p43
    %s46 = sadd.s32 %s45, 1
    %p49 = scmp.eq.s32.totalorder %s11, 1
    %p50 = scmp.ne.s32.totalorder %s45, %s47
    %p51 = scmp.eq.s32.totalorder %s11, 0
    %p52 = por %p50, %p51
    %p53 = scmp.ne.s32.totalorder %s45, %s47
    %p54 = scmp.eq.s32.totalorder %s16, 1
    %p55 = por %p53, %p54
    %p56 = scmp.ne.s32.totalorder %s47, %s48
    %p57 = scmp.eq.s32.totalorder %s16, 0
    %p58 = por %p56, %p57
    %p59 = scmp.ne.s32.totalorder %s47, %s48
    %p60 = scmp.eq.s32.totalorder %s17, 1
    %p61 = por %p59, %p60
    %p63 = scmp.ne.s32.totalorder %s48, %s62
    %p64 = scmp.eq.s32.totalorder %s17, 0
    %p65 = por %p63, %p64
    %s67 = sadd.s32 %s66, 1
    %p70 = scmp.eq.s32.totalorder %s11, 1
    %p71 = scmp.ne.s32.totalorder %s66, %s68
    %p72 = scmp.eq.s32.totalorder %s11, 0
    %p73 = por %p71, %p72
    %p74 = scmp.ne.s32.totalorder %s66, %s68
    %p75 = scmp.eq.s32.totalorder %s16, 1
    %p76 = por %p74, %p75
    %p77 = scmp.ne.s32.totalorder %s68, %s69
    %p78 = scmp.eq.s32.totalorder %s16, 0
    %p79 = por %p77, %p78
    %p80 = scmp.ne.s32.totalorder %s68, %s69
    %p81 = scmp.eq.s32.totalorder %s17, 1
    %p82 = por %p80, %p81
    %p84 = scmp.ne.s32.totalorder %s69, %s83
    %p85 = scmp.eq.s32.totalorder %s17, 0
    %p86 = por %p84, %p85
    %s88 = sadd.s32 %s87, 1
    %p91 = scmp.eq.s32.totalorder %s11, 1
    %p92 = scmp.ne.s32.totalorder %s87, %s89
    %p93 = scmp.eq.s32.totalorder %s11, 0
    %p94 = por %p92, %p93
    %p95 = scmp.ne.s32.totalorder %s87, %s89
    %p96 = scmp.eq.s32.totalorder %s16, 1
    %p97 = por %p95, %p96
    %p98 = scmp.ne.s32.totalorder %s89, %s90
    %p99 = scmp.eq.s32.totalorder %s16, 0
    %p100 = por %p98, %p99
    %p101 = scmp.ne.s32.totalorder %s89, %s90
    %p102 = scmp.eq.s32.totalorder %s17, 1
    %p103 = por %p101, %p102
    %p105 = scmp.ne.s32.totalorder %s90, %s104
    %p106 = scmp.eq.s32.totalorder %s17, 0
    %p107 = por %p105, %p106
    %s109 = sadd.s32 %s108, 1
    %p112 = scmp.eq.s32.totalorder %s11, 1
    %p113 = scmp.ne.s32.totalorder %s108, %s110
    %p114 = scmp.eq.s32.totalorder %s11, 0
    %p115 = por %p113, %p114
    %p116 = scmp.ne.s32.totalorder %s108, %s110
    %p117 = scmp.eq.s32.totalorder %s16, 1
    %p118 = por %p116, %p117
    %p119 = scmp.ne.s32.totalorder %s110, %s111
    %p120 = scmp.eq.s32.totalorder %s16, 0
    %p121 = por %p119, %p120
    %p122 = scmp.ne.s32.totalorder %s110, %s111
    %p123 = scmp.eq.s32.totalorder %s17, 1
    %p124 = por %p122, %p123
    %p126 = scmp.ne.s32.totalorder %s111, %s125
    %p127 = scmp.eq.s32.totalorder %s17, 0
    %p128 = por %p126, %p127
    %s129 = ssub.s32 %s11, %s18
    %p130 = scmp.eq.s32.totalorder %s129, 0
    %s132 = sadd.s32 %s131, 1
    %s133 = scalar_select %p130, %s131, %s132
    %p136 = pneg %p130
    %p137 = scmp.eq.s32.totalorder %s11, 1
    %p138 = por %p136, %p137
    %p139 = scmp.ne.s32.totalorder %s131, %s134
    %p140 = scmp.eq.s32.totalorder %s11, 0
    %p141 = por %p139, %p140
    %p142 = scmp.ne.s32.totalorder %s131, %s134
    %p143 = scmp.eq.s32.totalorder %s16, 1
    %p144 = por %p142, %p143
    %p145 = scmp.ne.s32.totalorder %s134, %s135
    %p146 = scmp.eq.s32.totalorder %s16, 0
    %p147 = por %p145, %p146
    %p148 = scmp.ne.s32.totalorder %s134, %s135
    %p149 = scmp.eq.s32.totalorder %s17, 1
    %p150 = por %p148, %p149
    %p152 = scmp.ne.s32.totalorder %s135, %s151
    %p153 = scmp.eq.s32.totalorder %s17, 0
    %p154 = por %p152, %p153
    %p155 = scmp.le.s32.totalorder 1, %s11
    %p156 = scmp.lt.s32.totalorder %s11, 3
    %p157 = pnand %p155, %p156
    %p158 = pneg %p157
    // Predicated region
    $region9: #{fcsae_forward.1} parent=5 // pred_check
      _
    $region10: #{fcsae_forward.1} parent=5 // pred_check_branch
      %160 = sbr.rel (%p157) target = $region12
    $region11: #{fcsae_forward.1} parent=5 // pred_region
      %s161 = ssub.s32 %s11, 1
      // Predicated region
      $region13: #{fcsae_forward.1} parent=11 // pred_check
        %p162 = pneg %p58
      $region14: #{fcsae_forward.1} parent=11 // pred_check_branch
        %164 = sbr.rel (%p162) target = $region16
      $region15: #{fcsae_forward.1} parent=11 // pred_region
        _
      $region16: #{fcsae_forward.1} parent=11 // pred_fallthru
        _
      // Predicated region
      $region17: #{fcsae_forward.1} parent=11 // pred_check
        %p165 = pneg %p79
      $region18: #{fcsae_forward.1} parent=11 // pred_check_branch
        %167 = sbr.rel (%p165) target = $region20
      $region19: #{fcsae_forward.1} parent=11 // pred_region
        _
      $region20: #{fcsae_forward.1} parent=11 // pred_fallthru
        _
      // Predicated region
      $region21: #{fcsae_forward.1} parent=11 // pred_check
        %p168 = pneg %p100
      $region22: #{fcsae_forward.1} parent=11 // pred_check_branch
        %170 = sbr.rel (%p168) target = $region24
      $region23: #{fcsae_forward.1} parent=11 // pred_region
        _
      $region24: #{fcsae_forward.1} parent=11 // pred_fallthru
        _
      // Predicated region
      $region25: #{fcsae_forward.1} parent=11 // pred_check
        %p171 = pneg %p121
      $region26: #{fcsae_forward.1} parent=11 // pred_check_branch
        %173 = sbr.rel (%p171) target = $region28
      $region27: #{fcsae_forward.1} parent=11 // pred_region
        _
      $region28: #{fcsae_forward.1} parent=11 // pred_fallthru
        _
    $region12: #{fcsae_forward.1} parent=5 // pred_fallthru
      _
    %p174 = scmp.lt.s32.totalorder %s11, 2
    // Predicated region
    $region29: #{fcsae_forward.1} parent=5 // pred_check
      %p175 = pneg %p174
    $region30: #{fcsae_forward.1} parent=5 // pred_check_branch
      %177 = sbr.rel (%p175) target = $region32
    $region31: #{fcsae_forward.1} parent=5 // pred_region
      // Predicated region
      $region33: #{fcsae_forward.1} parent=31 // pred_check
        %p178 = pneg %p31
      $region34: #{fcsae_forward.1} parent=31 // pred_check_branch
        %180 = sbr.rel (%p178) target = $region36
      $region35: #{fcsae_forward.1} parent=31 // pred_region
        %s181 = smul.u32 32, %s11
        %p182 = scmp.lt.s32.totalorder %s181, 63
        %s183 = scalar_select %p182, %s181, 63
        %s184 = smul.addr %s183, 8
        %s185 = scalar_lea.vmem %s0, %s184
        %s186 = smul.u32 32, %s11
      $region36: #{fcsae_forward.1} parent=31 // pred_fallthru
        _
    $region32: #{fcsae_forward.1} parent=5 // pred_fallthru
      _
    %p187 = scmp.le.s32.totalorder 1, %s11
    %p188 = scmp.lt.s32.totalorder %s11, 3
    %p189 = pnand %p187, %p188
    %p190 = pneg %p189
    // Predicated region
    $region37: #{fcsae_forward.1} parent=5 // pred_check
      _
    $region38: #{fcsae_forward.1} parent=5 // pred_check_branch
      %192 = sbr.rel (%p189) target = $region40
    $region39: #{fcsae_forward.1} parent=5 // pred_region
      %s193 = ssub.s32 %s11, 1
      %s194 = smul.u32 32, %s16
      %p195 = scmp.lt.s32.totalorder %s194, 63
      %s196 = scalar_select %p195, %s194, 63
      %s197 = smul.addr %s196, 8
      %s198 = scalar_lea.vmem %s0, %s197
      %p199 = pneg %p37
      %p200 = pneg %p34
      %p201 = pneg %p58
      %p202 = pneg %p55
      %p203 = pneg %p79
      %p204 = pneg %p76
      %p205 = pneg %p100
      %p206 = pneg %p97
      %p207 = pneg %p121
      %p208 = pneg %p118
      %p209 = pneg %p147
      %p210 = pneg %p144
      %s211 = smul.u32 32, %s16
      %p212 = scmp.lt.s32.totalorder %s211, 63
      %s213 = scalar_select %p212, %s211, 63
      %s214 = smul.addr %s213, 8
      %s215 = scalar_lea.vmem %s5, %s214
      %s216 = smul.u32 32, %s16
      %p217 = scmp.lt.s32.totalorder %s216, 63
      %s218 = scalar_select %p217, %s216, 63
      %s219 = smul.addr %s218, 8
      %s220 = scalar_lea.vmem %s0, %s219
      %s221 = smul.u32 32, %s16
      %s222 = smul.u32 32, %s16
      %p223 = scmp.lt.s32.totalorder %s222, 63
      %s224 = scalar_select %p223, %s222, 63
      %s225 = smul.addr %s224, 8
      %s226 = scalar_lea.vmem %s5, %s225
      %s227 = smul.u32 32, %s16
      %v229 = vld [vmem:[%s220] sm:$0xff]
      %v230 = vld [vmem:[%s220 + $0x8] sm:$0xff]
      %v231 = vld [vmem:[%s220 + $0x10] sm:$0xff]
      %v232 = vld [vmem:[%s220 + $0x18] sm:$0xff]
      %v233 = vld [vmem:[%s220 + $0x20] sm:$0xff]
      %v234 = vld [vmem:[%s220 + $0x28] sm:$0xff]
      %v235 = vld [vmem:[%s220 + $0x30] sm:$0xff]
      %v236 = vld [vmem:[%s220 + $0x38] sm:$0xff]
      %v237 = vld [vmem:[%s220 + $0x40] sm:$0xff]
      %v238 = vld [vmem:[%s220 + $0x48] sm:$0xff]
      %v239 = vld [vmem:[%s220 + $0x50] sm:$0xff]
      %v240 = vld [vmem:[%s220 + $0x58] sm:$0xff]
      %v241 = vld [vmem:[%s220 + $0x60] sm:$0xff]
      %v242 = vld [vmem:[%s220 + $0x68] sm:$0xff]
      %v243 = vld [vmem:[%s220 + $0x70] sm:$0xff]
      %v244 = vld [vmem:[%s220 + $0x78] sm:$0xff]
      %v245 = vld [vmem:[%s220 + $0x80] sm:$0xff]
      %v246 = vld [vmem:[%s220 + $0x88] sm:$0xff]
      %v247 = vld [vmem:[%s220 + $0x90] sm:$0xff]
      %v248 = vld [vmem:[%s220 + $0x98] sm:$0xff]
      %v249 = vld [vmem:[%s220 + $0xa0] sm:$0xff]
      %v250 = vld [vmem:[%s220 + $0xa8] sm:$0xff]
      %v251 = vld [vmem:[%s220 + $0xb0] sm:$0xff]
      %v252 = vld [vmem:[%s220 + $0xb8] sm:$0xff]
      %v253 = vld [vmem:[%s220 + $0xc0] sm:$0xff]
      %v254 = vld [vmem:[%s220 + $0xc8] sm:$0xff]
      %v255 = vld [vmem:[%s220 + $0xd0] sm:$0xff]
      %v256 = vld [vmem:[%s220 + $0xd8] sm:$0xff]
      %v257 = vld [vmem:[%s220 + $0xe0] sm:$0xff]
      %v258 = vld [vmem:[%s220 + $0xe8] sm:$0xff]
      %v259 = vld [vmem:[%s220 + $0xf0] sm:$0xff]
      %v260 = vld [vmem:[%s220 + $0xf8] sm:$0xff]
      %v261 = vpack.c.bf16 %v230, %v229
      %v262 = vpack.c.bf16 %v232, %v231
      %v263 = vpack.c.bf16 %v234, %v233
      %v264 = vpack.c.bf16 %v236, %v235
      %v265 = vpack.c.bf16 %v238, %v237
      %v266 = vpack.c.bf16 %v240, %v239
      %v267 = vpack.c.bf16 %v242, %v241
      %v268 = vpack.c.bf16 %v244, %v243
      %v269 = vpack.c.bf16 %v246, %v245
      %v270 = vpack.c.bf16 %v248, %v247
      %v271 = vpack.c.bf16 %v250, %v249
      %v272 = vpack.c.bf16 %v252, %v251
      %v273 = vpack.c.bf16 %v254, %v253
      %v274 = vpack.c.bf16 %v256, %v255
      %v275 = vpack.c.bf16 %v258, %v257
      %v276 = vpack.c.bf16 %v260, %v259
      %v277 = vld [vmem:[%s1] sm:$0xf]
      %v278 = vld [vmem:[%s1 + $0x4] sm:$0xf]
      %v279 = vld [vmem:[%s1 + $0x8] sm:$0xf]
      %v280 = vld [vmem:[%s1 + $0xc] sm:$0xf]
      %v281 = vld [vmem:[%s1 + $0x10] sm:$0xf]
      %v282 = vld [vmem:[%s1 + $0x14] sm:$0xf]
      %v283 = vld [vmem:[%s1 + $0x18] sm:$0xf]
      %v284 = vld [vmem:[%s1 + $0x1c] sm:$0xf]
      %v285 = vld [vmem:[%s2] sm:$0x1]
      %v287 = vperm.slane %v285, 0
      %v297 = vunpack.c.l.b16 %v277
      %v298 = vunpack.c.l.b16 %v278
      %v299 = vunpack.c.l.b16 %v279
      %v300 = vunpack.c.l.b16 %v280
      %v301 = vunpack.c.l.b16 %v281
      %v302 = vunpack.c.l.b16 %v282
      %v303 = vunpack.c.l.b16 %v283
      %v304 = vunpack.c.l.b16 %v284
      %v305 = vpack.c.b16 %v298, %v297
      %v306 = vpack.c.b16 %v300, %v299
      %v307 = vpack.c.b16 %v302, %v301
      %v308 = vpack.c.b16 %v304, %v303
      %vm313 = vcmask 523264
      %v315 = vsel %vm313, %v261, 0
      %v318 = vsel %vm313, %v262, 0
      %v321 = vsel %vm313, %v263, 0
      %v324 = vsel %vm313, %v264, 0
      %v327 = vsel %vm313, %v265, 0
      %v330 = vsel %vm313, %v266, 0
      %v333 = vsel %vm313, %v267, 0
      %v336 = vsel %vm313, %v268, 0
      %v339 = vsel %vm313, %v269, 0
      %v342 = vsel %vm313, %v270, 0
      %v345 = vsel %vm313, %v271, 0
      %v348 = vsel %vm313, %v272, 0
      %v351 = vsel %vm313, %v273, 0
      %v354 = vsel %vm313, %v274, 0
      %v357 = vsel %vm313, %v275, 0
      %v360 = vsel %vm313, %v276, 0
      %362 = vmatpush.bf16.msra.mxu0 0
      %363 = vmatpush.bf16.msra.mxu0 0
      %364 = vmatpush.bf16.msra.mxu0 0
      %365 = vmatpush.bf16.msra.mxu0 0
      %366 = vmatpush.bf16.msra.mxu0 %v308
      %367 = vmatpush.bf16.msra.mxu0 %v307
      %368 = vmatpush.bf16.msra.mxu0 %v306
      %369 = vmatpush.bf16.msra.mxu0 %v305
      %370 = vmatmul.bf16.gmra.mxu0 %v315
      %v371 = vpop.f32.mrf.mxu0
      %v372 = vadd.f32 %v287, %v371
      %v373 = vpop.f32.mrf.mxu0
      %v374 = vadd.f32 %v287, %v373
      %375 = vmatmul.bf16.gmra.mxu0 %v318
      %v376 = vpop.f32.mrf.mxu0
      %v377 = vadd.f32 %v287, %v376
      %v378 = vpop.f32.mrf.mxu0
      %v379 = vadd.f32 %v287, %v378
      %380 = vmatmul.bf16.gmra.mxu0 %v321
      %v381 = vpop.f32.mrf.mxu0
      %v382 = vadd.f32 %v287, %v381
      %v383 = vpop.f32.mrf.mxu0
      %v384 = vadd.f32 %v287, %v383
      %385 = vmatmul.bf16.gmra.mxu0 %v324
      %v386 = vpop.f32.mrf.mxu0
      %v387 = vadd.f32 %v287, %v386
      %v388 = vpop.f32.mrf.mxu0
      %v389 = vadd.f32 %v287, %v388
      %390 = vmatmul.bf16.gmra.mxu0 %v327
      %v391 = vpop.f32.mrf.mxu0
      %v392 = vadd.f32 %v287, %v391
      %v393 = vpop.f32.mrf.mxu0
      %v394 = vadd.f32 %v287, %v393
      %395 = vmatmul.bf16.gmra.mxu0 %v330
      %v396 = vpop.f32.mrf.mxu0
      %v397 = vadd.f32 %v287, %v396
      %v398 = vpop.f32.mrf.mxu0
      %v399 = vadd.f32 %v287, %v398
      %400 = vmatmul.bf16.gmra.mxu0 %v333
      %v401 = vpop.f32.mrf.mxu0
      %v402 = vadd.f32 %v287, %v401
      %v403 = vpop.f32.mrf.mxu0
      %v404 = vadd.f32 %v287, %v403
      %405 = vmatmul.bf16.gmra.mxu0 %v336
      %v406 = vpop.f32.mrf.mxu0
      %v407 = vadd.f32 %v287, %v406
      %v408 = vpop.f32.mrf.mxu0
      %v409 = vadd.f32 %v287, %v408
      %410 = vmatmul.bf16.gmra.mxu0 %v339
      %v411 = vpop.f32.mrf.mxu0
      %v412 = vadd.f32 %v287, %v411
      %v413 = vpop.f32.mrf.mxu0
      %v414 = vadd.f32 %v287, %v413
      %415 = vmatmul.bf16.gmra.mxu0 %v342
      %v416 = vpop.f32.mrf.mxu0
      %v417 = vadd.f32 %v287, %v416
      %v418 = vpop.f32.mrf.mxu0
      %v419 = vadd.f32 %v287, %v418
      %420 = vmatmul.bf16.gmra.mxu0 %v345
      %v421 = vpop.f32.mrf.mxu0
      %v422 = vadd.f32 %v287, %v421
      %v423 = vpop.f32.mrf.mxu0
      %v424 = vadd.f32 %v287, %v423
      %425 = vmatmul.bf16.gmra.mxu0 %v348
      %v426 = vpop.f32.mrf.mxu0
      %v427 = vadd.f32 %v287, %v426
      %v428 = vpop.f32.mrf.mxu0
      %v429 = vadd.f32 %v287, %v428
      %430 = vmatmul.bf16.gmra.mxu0 %v351
      %v431 = vpop.f32.mrf.mxu0
      %v432 = vadd.f32 %v287, %v431
      %v433 = vpop.f32.mrf.mxu0
      %v434 = vadd.f32 %v287, %v433
      %435 = vmatmul.bf16.gmra.mxu0 %v354
      %v436 = vpop.f32.mrf.mxu0
      %v437 = vadd.f32 %v287, %v436
      %v438 = vpop.f32.mrf.mxu0
      %v439 = vadd.f32 %v287, %v438
      %440 = vmatmul.bf16.gmra.mxu0 %v357
      %v441 = vpop.f32.mrf.mxu0
      %v442 = vadd.f32 %v287, %v441
      %v443 = vpop.f32.mrf.mxu0
      %v444 = vadd.f32 %v287, %v443
      %445 = vmatmul.bf16.gmra.mxu0 %v360
      %v446 = vpop.f32.mrf.mxu0
      %v447 = vadd.f32 %v287, %v446
      %v448 = vpop.f32.mrf.mxu0
      %v449 = vadd.f32 %v287, %v448
      %450 = vdwg.mxu0
      %vm451 = vcmp.gt.f32.partialorder %v372, 0.0
      %vm452 = vcmp.gt.f32.partialorder %v374, 0.0
      %vm453 = vcmp.gt.f32.partialorder %v377, 0.0
      %vm454 = vcmp.gt.f32.partialorder %v379, 0.0
      %vm455 = vcmp.gt.f32.partialorder %v382, 0.0
      %vm456 = vcmp.gt.f32.partialorder %v384, 0.0
      %vm457 = vcmp.gt.f32.partialorder %v387, 0.0
      %vm458 = vcmp.gt.f32.partialorder %v389, 0.0
      %vm459 = vcmp.gt.f32.partialorder %v392, 0.0
      %vm460 = vcmp.gt.f32.partialorder %v394, 0.0
      %vm461 = vcmp.gt.f32.partialorder %v397, 0.0
      %vm462 = vcmp.gt.f32.partialorder %v399, 0.0
      %vm463 = vcmp.gt.f32.partialorder %v402, 0.0
      %vm464 = vcmp.gt.f32.partialorder %v404, 0.0
      %vm465 = vcmp.gt.f32.partialorder %v407, 0.0
      %vm466 = vcmp.gt.f32.partialorder %v409, 0.0
      %vm467 = vcmp.gt.f32.partialorder %v412, 0.0
      %vm468 = vcmp.gt.f32.partialorder %v414, 0.0
      %vm469 = vcmp.gt.f32.partialorder %v417, 0.0
      %vm470 = vcmp.gt.f32.partialorder %v419, 0.0
      %vm471 = vcmp.gt.f32.partialorder %v422, 0.0
      %vm472 = vcmp.gt.f32.partialorder %v424, 0.0
      %vm473 = vcmp.gt.f32.partialorder %v427, 0.0
      %vm474 = vcmp.gt.f32.partialorder %v429, 0.0
      %vm475 = vcmp.gt.f32.partialorder %v432, 0.0
      %vm476 = vcmp.gt.f32.partialorder %v434, 0.0
      %vm477 = vcmp.gt.f32.partialorder %v437, 0.0
      %vm478 = vcmp.gt.f32.partialorder %v439, 0.0
      %vm479 = vcmp.gt.f32.partialorder %v442, 0.0
      %vm480 = vcmp.gt.f32.partialorder %v444, 0.0
      %vm481 = vcmp.gt.f32.partialorder %v447, 0.0
      %vm482 = vcmp.gt.f32.partialorder %v449, 0.0
      %v483 = vmul.f32 %v372, 0.01
      %v484 = vmul.f32 %v374, 0.01
      %v485 = vmul.f32 %v377, 0.01
      %v486 = vmul.f32 %v379, 0.01
      %v487 = vmul.f32 %v382, 0.01
      %v488 = vmul.f32 %v384, 0.01
      %v489 = vmul.f32 %v387, 0.01
      %v490 = vmul.f32 %v389, 0.01
      %v491 = vmul.f32 %v392, 0.01
      %v492 = vmul.f32 %v394, 0.01
      %v493 = vmul.f32 %v397, 0.01
      %v494 = vmul.f32 %v399, 0.01
      %v495 = vmul.f32 %v402, 0.01
      %v496 = vmul.f32 %v404, 0.01
      %v497 = vmul.f32 %v407, 0.01
      %v498 = vmul.f32 %v409, 0.01
      %v499 = vmul.f32 %v412, 0.01
      %v500 = vmul.f32 %v414, 0.01
      %v501 = vmul.f32 %v417, 0.01
      %v502 = vmul.f32 %v419, 0.01
      %v503 = vmul.f32 %v422, 0.01
      %v504 = vmul.f32 %v424, 0.01
      %v505 = vmul.f32 %v427, 0.01
      %v506 = vmul.f32 %v429, 0.01
      %v507 = vmul.f32 %v432, 0.01
      %v508 = vmul.f32 %v434, 0.01
      %v509 = vmul.f32 %v437, 0.01
      %v510 = vmul.f32 %v439, 0.01
      %v511 = vmul.f32 %v442, 0.01
      %v512 = vmul.f32 %v444, 0.01
      %v513 = vmul.f32 %v447, 0.01
      %v514 = vmul.f32 %v449, 0.01
      %v515 = vsel %vm451, %v372, %v483
      %v516 = vsel %vm452, %v374, %v484
      %v517 = vsel %vm453, %v377, %v485
      %v518 = vsel %vm454, %v379, %v486
      %v519 = vsel %vm455, %v382, %v487
      %v520 = vsel %vm456, %v384, %v488
      %v521 = vsel %vm457, %v387, %v489
      %v522 = vsel %vm458, %v389, %v490
      %v523 = vsel %vm459, %v392, %v491
      %v524 = vsel %vm460, %v394, %v492
      %v525 = vsel %vm461, %v397, %v493
      %v526 = vsel %vm462, %v399, %v494
      %v527 = vsel %vm463, %v402, %v495
      %v528 = vsel %vm464, %v404, %v496
      %v529 = vsel %vm465, %v407, %v497
      %v530 = vsel %vm466, %v409, %v498
      %v531 = vsel %vm467, %v412, %v499
      %v532 = vsel %vm468, %v414, %v500
      %v533 = vsel %vm469, %v417, %v501
      %v534 = vsel %vm470, %v419, %v502
      %v535 = vsel %vm471, %v422, %v503
      %v536 = vsel %vm472, %v424, %v504
      %v537 = vsel %vm473, %v427, %v505
      %v538 = vsel %vm474, %v429, %v506
      %v539 = vsel %vm475, %v432, %v507
      %v540 = vsel %vm476, %v434, %v508
      %v541 = vsel %vm477, %v437, %v509
      %v542 = vsel %vm478, %v439, %v510
      %v543 = vsel %vm479, %v442, %v511
      %v544 = vsel %vm480, %v444, %v512
      %v545 = vsel %vm481, %v447, %v513
      %v546 = vsel %vm482, %v449, %v514
      %v547 = vpack.c.bf16 %v516, %v515
      %v548 = vpack.c.bf16 %v518, %v517
      %v549 = vpack.c.bf16 %v520, %v519
      %v550 = vpack.c.bf16 %v522, %v521
      %v551 = vpack.c.bf16 %v524, %v523
      %v552 = vpack.c.bf16 %v526, %v525
      %v553 = vpack.c.bf16 %v528, %v527
      %v554 = vpack.c.bf16 %v530, %v529
      %v555 = vpack.c.bf16 %v532, %v531
      %v556 = vpack.c.bf16 %v534, %v533
      %v557 = vpack.c.bf16 %v536, %v535
      %v558 = vpack.c.bf16 %v538, %v537
      %v559 = vpack.c.bf16 %v540, %v539
      %v560 = vpack.c.bf16 %v542, %v541
      %v561 = vpack.c.bf16 %v544, %v543
      %v562 = vpack.c.bf16 %v546, %v545
      %v563 = vld [vmem:[%s3] sm:$0xf]
      %v564 = vld [vmem:[%s3 + $0x4] sm:$0xf]
      %v565 = vld [vmem:[%s3 + $0x8] sm:$0xf]
      %v566 = vld [vmem:[%s3 + $0xc] sm:$0xf]
      %v567 = vld [vmem:[%s3 + $0x10] sm:$0xf]
      %v568 = vld [vmem:[%s3 + $0x14] sm:$0xf]
      %v569 = vld [vmem:[%s3 + $0x18] sm:$0xf]
      %v570 = vld [vmem:[%s3 + $0x1c] sm:$0xf]
      %v571 = vld [vmem:[%s3 + $0x20] sm:$0xf]
      %v572 = vld [vmem:[%s3 + $0x24] sm:$0xf]
      %v573 = vld [vmem:[%s3 + $0x28] sm:$0xf]
      %v574 = vld [vmem:[%s3 + $0x2c] sm:$0xf]
      %v575 = vld [vmem:[%s3 + $0x30] sm:$0xf]
      %v576 = vld [vmem:[%s3 + $0x34] sm:$0xf]
      %v577 = vld [vmem:[%s3 + $0x38] sm:$0xf]
      %v578 = vld [vmem:[%s3 + $0x3c] sm:$0xf]
      %v579 = vld [vmem:[%s4] sm:$0x1]
      %v581 = vperm.slane %v579, 0
      %v599 = vunpack.c.l.b16 %v563
      %v600 = vunpack.c.l.b16 %v564
      %v601 = vunpack.c.l.b16 %v565
      %v602 = vunpack.c.l.b16 %v566
      %v603 = vunpack.c.l.b16 %v567
      %v604 = vunpack.c.l.b16 %v568
      %v605 = vunpack.c.l.b16 %v569
      %v606 = vunpack.c.l.b16 %v570
      %v607 = vunpack.c.l.b16 %v571
      %v608 = vunpack.c.l.b16 %v572
      %v609 = vunpack.c.l.b16 %v573
      %v610 = vunpack.c.l.b16 %v574
      %v611 = vunpack.c.l.b16 %v575
      %v612 = vunpack.c.l.b16 %v576
      %v613 = vunpack.c.l.b16 %v577
      %v614 = vunpack.c.l.b16 %v578
      %v615 = vpack.c.b16 %v600, %v599
      %v616 = vpack.c.b16 %v602, %v601
      %v617 = vpack.c.b16 %v604, %v603
      %v618 = vpack.c.b16 %v606, %v605
      %v619 = vpack.c.b16 %v608, %v607
      %v620 = vpack.c.b16 %v610, %v609
      %v621 = vpack.c.b16 %v612, %v611
      %v622 = vpack.c.b16 %v614, %v613
      %631 = vmatpush.bf16.msra.mxu0 %v622
      %632 = vmatpush.bf16.msra.mxu0 %v621
      %633 = vmatpush.bf16.msra.mxu0 %v620
      %634 = vmatpush.bf16.msra.mxu0 %v619
      %635 = vmatpush.bf16.msra.mxu0 %v618
      %636 = vmatpush.bf16.msra.mxu0 %v617
      %637 = vmatpush.bf16.msra.mxu0 %v616
      %638 = vmatpush.bf16.msra.mxu0 %v615
      %639 = vmatmul.bf16.gmra.mxu0 %v547
      %v640 = vpop.f32.mrf.mxu0
      %v641 = vadd.f32 %v581, %v640
      %v642 = vpop.f32.mrf.mxu0
      %v643 = vadd.f32 %v581, %v642
      %644 = vmatmul.bf16.gmra.mxu0 %v548
      %v645 = vpop.f32.mrf.mxu0
      %v646 = vadd.f32 %v581, %v645
      %v647 = vpop.f32.mrf.mxu0
      %v648 = vadd.f32 %v581, %v647
      %649 = vmatmul.bf16.gmra.mxu0 %v549
      %v650 = vpop.f32.mrf.mxu0
      %v651 = vadd.f32 %v581, %v650
      %v652 = vpop.f32.mrf.mxu0
      %v653 = vadd.f32 %v581, %v652
      %654 = vmatmul.bf16.gmra.mxu0 %v550
      %v655 = vpop.f32.mrf.mxu0
      %v656 = vadd.f32 %v581, %v655
      %v657 = vpop.f32.mrf.mxu0
      %v658 = vadd.f32 %v581, %v657
      %659 = vmatmul.bf16.gmra.mxu0 %v551
      %v660 = vpop.f32.mrf.mxu0
      %v661 = vadd.f32 %v581, %v660
      %v662 = vpop.f32.mrf.mxu0
      %v663 = vadd.f32 %v581, %v662
      %664 = vmatmul.bf16.gmra.mxu0 %v552
      %v665 = vpop.f32.mrf.mxu0
      %v666 = vadd.f32 %v581, %v665
      %v667 = vpop.f32.mrf.mxu0
      %v668 = vadd.f32 %v581, %v667
      %669 = vmatmul.bf16.gmra.mxu0 %v553
      %v670 = vpop.f32.mrf.mxu0
      %v671 = vadd.f32 %v581, %v670
      %v672 = vpop.f32.mrf.mxu0
      %v673 = vadd.f32 %v581, %v672
      %674 = vmatmul.bf16.gmra.mxu0 %v554
      %v675 = vpop.f32.mrf.mxu0
      %v676 = vadd.f32 %v581, %v675
      %v677 = vpop.f32.mrf.mxu0
      %v678 = vadd.f32 %v581, %v677
      %679 = vmatmul.bf16.gmra.mxu0 %v555
      %v680 = vpop.f32.mrf.mxu0
      %v681 = vadd.f32 %v581, %v680
      %v682 = vpop.f32.mrf.mxu0
      %v683 = vadd.f32 %v581, %v682
      %684 = vmatmul.bf16.gmra.mxu0 %v556
      %v685 = vpop.f32.mrf.mxu0
      %v686 = vadd.f32 %v581, %v685
      %v687 = vpop.f32.mrf.mxu0
      %v688 = vadd.f32 %v581, %v687
      %689 = vmatmul.bf16.gmra.mxu0 %v557
      %v690 = vpop.f32.mrf.mxu0
      %v691 = vadd.f32 %v581, %v690
      %v692 = vpop.f32.mrf.mxu0
      %v693 = vadd.f32 %v581, %v692
      %694 = vmatmul.bf16.gmra.mxu0 %v558
      %v695 = vpop.f32.mrf.mxu0
      %v696 = vadd.f32 %v581, %v695
      %v697 = vpop.f32.mrf.mxu0
      %v698 = vadd.f32 %v581, %v697
      %699 = vmatmul.bf16.gmra.mxu0 %v559
      %v700 = vpop.f32.mrf.mxu0
      %v701 = vadd.f32 %v581, %v700
      %v702 = vpop.f32.mrf.mxu0
      %v703 = vadd.f32 %v581, %v702
      %704 = vmatmul.bf16.gmra.mxu0 %v560
      %v705 = vpop.f32.mrf.mxu0
      %v706 = vadd.f32 %v581, %v705
      %v707 = vpop.f32.mrf.mxu0
      %v708 = vadd.f32 %v581, %v707
      %709 = vmatmul.bf16.gmra.mxu0 %v561
      %v710 = vpop.f32.mrf.mxu0
      %v711 = vadd.f32 %v581, %v710
      %v712 = vpop.f32.mrf.mxu0
      %v713 = vadd.f32 %v581, %v712
      %714 = vmatmul.bf16.gmra.mxu0 %v562
      %v715 = vpop.f32.mrf.mxu0
      %v716 = vadd.f32 %v581, %v715
      %v717 = vpop.f32.mrf.mxu0
      %v718 = vadd.f32 %v581, %v717
      %719 = vdwg.mxu0
      %vm720 = vcmp.gt.f32.partialorder %v641, 0.0
      %vm721 = vcmp.gt.f32.partialorder %v643, 0.0
      %vm722 = vcmp.gt.f32.partialorder %v646, 0.0
      %vm723 = vcmp.gt.f32.partialorder %v648, 0.0
      %vm724 = vcmp.gt.f32.partialorder %v651, 0.0
      %vm725 = vcmp.gt.f32.partialorder %v653, 0.0
      %vm726 = vcmp.gt.f32.partialorder %v656, 0.0
      %vm727 = vcmp.gt.f32.partialorder %v658, 0.0
      %vm728 = vcmp.gt.f32.partialorder %v661, 0.0
      %vm729 = vcmp.gt.f32.partialorder %v663, 0.0
      %vm730 = vcmp.gt.f32.partialorder %v666, 0.0
      %vm731 = vcmp.gt.f32.partialorder %v668, 0.0
      %vm732 = vcmp.gt.f32.partialorder %v671, 0.0
      %vm733 = vcmp.gt.f32.partialorder %v673, 0.0
      %vm734 = vcmp.gt.f32.partialorder %v676, 0.0
      %vm735 = vcmp.gt.f32.partialorder %v678, 0.0
      %vm736 = vcmp.gt.f32.partialorder %v681, 0.0
      %vm737 = vcmp.gt.f32.partialorder %v683, 0.0
      %vm738 = vcmp.gt.f32.partialorder %v686, 0.0
      %vm739 = vcmp.gt.f32.partialorder %v688, 0.0
      %vm740 = vcmp.gt.f32.partialorder %v691, 0.0
      %vm741 = vcmp.gt.f32.partialorder %v693, 0.0
      %vm742 = vcmp.gt.f32.partialorder %v696, 0.0
      %vm743 = vcmp.gt.f32.partialorder %v698, 0.0
      %vm744 = vcmp.gt.f32.partialorder %v701, 0.0
      %vm745 = vcmp.gt.f32.partialorder %v703, 0.0
      %vm746 = vcmp.gt.f32.partialorder %v706, 0.0
      %vm747 = vcmp.gt.f32.partialorder %v708, 0.0
      %vm748 = vcmp.gt.f32.partialorder %v711, 0.0
      %vm749 = vcmp.gt.f32.partialorder %v713, 0.0
      %vm750 = vcmp.gt.f32.partialorder %v716, 0.0
      %vm751 = vcmp.gt.f32.partialorder %v718, 0.0
      %v752 = vmul.f32 %v641, 0.01
      %v753 = vmul.f32 %v643, 0.01
      %v754 = vmul.f32 %v646, 0.01
      %v755 = vmul.f32 %v648, 0.01
      %v756 = vmul.f32 %v651, 0.01
      %v757 = vmul.f32 %v653, 0.01
      %v758 = vmul.f32 %v656, 0.01
      %v759 = vmul.f32 %v658, 0.01
      %v760 = vmul.f32 %v661, 0.01
      %v761 = vmul.f32 %v663, 0.01
      %v762 = vmul.f32 %v666, 0.01
      %v763 = vmul.f32 %v668, 0.01
      %v764 = vmul.f32 %v671, 0.01
      %v765 = vmul.f32 %v673, 0.01
      %v766 = vmul.f32 %v676, 0.01
      %v767 = vmul.f32 %v678, 0.01
      %v768 = vmul.f32 %v681, 0.01
      %v769 = vmul.f32 %v683, 0.01
      %v770 = vmul.f32 %v686, 0.01
      %v771 = vmul.f32 %v688, 0.01
      %v772 = vmul.f32 %v691, 0.01
      %v773 = vmul.f32 %v693, 0.01
      %v774 = vmul.f32 %v696, 0.01
      %v775 = vmul.f32 %v698, 0.01
      %v776 = vmul.f32 %v701, 0.01
      %v777 = vmul.f32 %v703, 0.01
      %v778 = vmul.f32 %v706, 0.01
      %v779 = vmul.f32 %v708, 0.01
      %v780 = vmul.f32 %v711, 0.01
      %v781 = vmul.f32 %v713, 0.01
      %v782 = vmul.f32 %v716, 0.01
      %v783 = vmul.f32 %v718, 0.01
      %v784 = vsel %vm720, %v641, %v752
      %v785 = vsel %vm721, %v643, %v753
      %v786 = vsel %vm722, %v646, %v754
      %v787 = vsel %vm723, %v648, %v755
      %v788 = vsel %vm724, %v651, %v756
      %v789 = vsel %vm725, %v653, %v757
      %v790 = vsel %vm726, %v656, %v758
      %v791 = vsel %vm727, %v658, %v759
      %v792 = vsel %vm728, %v661, %v760
      %v793 = vsel %vm729, %v663, %v761
      %v794 = vsel %vm730, %v666, %v762
      %v795 = vsel %vm731, %v668, %v763
      %v796 = vsel %vm732, %v671, %v764
      %v797 = vsel %vm733, %v673, %v765
      %v798 = vsel %vm734, %v676, %v766
      %v799 = vsel %vm735, %v678, %v767
      %v800 = vsel %vm736, %v681, %v768
      %v801 = vsel %vm737, %v683, %v769
      %v802 = vsel %vm738, %v686, %v770
      %v803 = vsel %vm739, %v688, %v771
      %v804 = vsel %vm740, %v691, %v772
      %v805 = vsel %vm741, %v693, %v773
      %v806 = vsel %vm742, %v696, %v774
      %v807 = vsel %vm743, %v698, %v775
      %v808 = vsel %vm744, %v701, %v776
      %v809 = vsel %vm745, %v703, %v777
      %v810 = vsel %vm746, %v706, %v778
      %v811 = vsel %vm747, %v708, %v779
      %v812 = vsel %vm748, %v711, %v780
      %v813 = vsel %vm749, %v713, %v781
      %v814 = vsel %vm750, %v716, %v782
      %v815 = vsel %vm751, %v718, %v783
      %v816 = vpack.c.bf16 %v785, %v784
      %v817 = vpack.c.bf16 %v787, %v786
      %v818 = vpack.c.bf16 %v789, %v788
      %v819 = vpack.c.bf16 %v791, %v790
      %v820 = vpack.c.bf16 %v793, %v792
      %v821 = vpack.c.bf16 %v795, %v794
      %v822 = vpack.c.bf16 %v797, %v796
      %v823 = vpack.c.bf16 %v799, %v798
      %v824 = vpack.c.bf16 %v801, %v800
      %v825 = vpack.c.bf16 %v803, %v802
      %v826 = vpack.c.bf16 %v805, %v804
      %v827 = vpack.c.bf16 %v807, %v806
      %v828 = vpack.c.bf16 %v809, %v808
      %v829 = vpack.c.bf16 %v811, %v810
      %v830 = vpack.c.bf16 %v813, %v812
      %v831 = vpack.c.bf16 %v815, %v814
      %s832 = scalar_lea.vmem %s3, 64
      %v833 = vld [vmem:[%s832] sm:$0xf]
      %v834 = vld [vmem:[%s832 + $0x4] sm:$0xf]
      %v835 = vld [vmem:[%s832 + $0x8] sm:$0xf]
      %v836 = vld [vmem:[%s832 + $0xc] sm:$0xf]
      %v837 = vld [vmem:[%s832 + $0x10] sm:$0xf]
      %v838 = vld [vmem:[%s832 + $0x14] sm:$0xf]
      %v839 = vld [vmem:[%s832 + $0x18] sm:$0xf]
      %v840 = vld [vmem:[%s832 + $0x1c] sm:$0xf]
      %v841 = vld [vmem:[%s832 + $0x20] sm:$0xf]
      %v842 = vld [vmem:[%s832 + $0x24] sm:$0xf]
      %v843 = vld [vmem:[%s832 + $0x28] sm:$0xf]
      %v844 = vld [vmem:[%s832 + $0x2c] sm:$0xf]
      %v845 = vld [vmem:[%s832 + $0x30] sm:$0xf]
      %v846 = vld [vmem:[%s832 + $0x34] sm:$0xf]
      %v847 = vld [vmem:[%s832 + $0x38] sm:$0xf]
      %v848 = vld [vmem:[%s832 + $0x3c] sm:$0xf]
      %s849 = scalar_lea.vmem %s4, 1
      %v850 = vld [vmem:[%s849] sm:$0x1]
      %v852 = vperm.slane %v850, 0
      %v870 = vunpack.c.l.b16 %v833
      %v871 = vunpack.c.l.b16 %v834
      %v872 = vunpack.c.l.b16 %v835
      %v873 = vunpack.c.l.b16 %v836
      %v874 = vunpack.c.l.b16 %v837
      %v875 = vunpack.c.l.b16 %v838
      %v876 = vunpack.c.l.b16 %v839
      %v877 = vunpack.c.l.b16 %v840
      %v878 = vunpack.c.l.b16 %v841
      %v879 = vunpack.c.l.b16 %v842
      %v880 = vunpack.c.l.b16 %v843
      %v881 = vunpack.c.l.b16 %v844
      %v882 = vunpack.c.l.b16 %v845
      %v883 = vunpack.c.l.b16 %v846
      %v884 = vunpack.c.l.b16 %v847
      %v885 = vunpack.c.l.b16 %v848
      %v886 = vpack.c.b16 %v871, %v870
      %v887 = vpack.c.b16 %v873, %v872
      %v888 = vpack.c.b16 %v875, %v874
      %v889 = vpack.c.b16 %v877, %v876
      %v890 = vpack.c.b16 %v879, %v878
      %v891 = vpack.c.b16 %v881, %v880
      %v892 = vpack.c.b16 %v883, %v882
      %v893 = vpack.c.b16 %v885, %v884
      %902 = vmatpush.bf16.msra.mxu0 %v893
      %903 = vmatpush.bf16.msra.mxu0 %v892
      %904 = vmatpush.bf16.msra.mxu0 %v891
      %905 = vmatpush.bf16.msra.mxu0 %v890
      %906 = vmatpush.bf16.msra.mxu0 %v889
      %907 = vmatpush.bf16.msra.mxu0 %v888
      %908 = vmatpush.bf16.msra.mxu0 %v887
      %909 = vmatpush.bf16.msra.mxu0 %v886
      %910 = vmatmul.bf16.gmra.mxu0 %v816
      %v911 = vpop.f32.mrf.mxu0
      %v912 = vadd.f32 %v852, %v911
      %v913 = vpop.f32.mrf.mxu0
      %v914 = vadd.f32 %v852, %v913
      %915 = vmatmul.bf16.gmra.mxu0 %v817
      %v916 = vpop.f32.mrf.mxu0
      %v917 = vadd.f32 %v852, %v916
      %v918 = vpop.f32.mrf.mxu0
      %v919 = vadd.f32 %v852, %v918
      %920 = vmatmul.bf16.gmra.mxu0 %v818
      %v921 = vpop.f32.mrf.mxu0
      %v922 = vadd.f32 %v852, %v921
      %v923 = vpop.f32.mrf.mxu0
      %v924 = vadd.f32 %v852, %v923
      %925 = vmatmul.bf16.gmra.mxu0 %v819
      %v926 = vpop.f32.mrf.mxu0
      %v927 = vadd.f32 %v852, %v926
      %v928 = vpop.f32.mrf.mxu0
      %v929 = vadd.f32 %v852, %v928
      %930 = vmatmul.bf16.gmra.mxu0 %v820
      %v931 = vpop.f32.mrf.mxu0
      %v932 = vadd.f32 %v852, %v931
      %v933 = vpop.f32.mrf.mxu0
      %v934 = vadd.f32 %v852, %v933
      %935 = vmatmul.bf16.gmra.mxu0 %v821
      %v936 = vpop.f32.mrf.mxu0
      %v937 = vadd.f32 %v852, %v936
      %v938 = vpop.f32.mrf.mxu0
      %v939 = vadd.f32 %v852, %v938
      %940 = vmatmul.bf16.gmra.mxu0 %v822
      %v941 = vpop.f32.mrf.mxu0
      %v942 = vadd.f32 %v852, %v941
      %v943 = vpop.f32.mrf.mxu0
      %v944 = vadd.f32 %v852, %v943
      %945 = vmatmul.bf16.gmra.mxu0 %v823
      %v946 = vpop.f32.mrf.mxu0
      %v947 = vadd.f32 %v852, %v946
      %v948 = vpop.f32.mrf.mxu0
      %v949 = vadd.f32 %v852, %v948
      %950 = vmatmul.bf16.gmra.mxu0 %v824
      %v951 = vpop.f32.mrf.mxu0
      %v952 = vadd.f32 %v852, %v951
      %v953 = vpop.f32.mrf.mxu0
      %v954 = vadd.f32 %v852, %v953
      %955 = vmatmul.bf16.gmra.mxu0 %v825
      %v956 = vpop.f32.mrf.mxu0
      %v957 = vadd.f32 %v852, %v956
      %v958 = vpop.f32.mrf.mxu0
      %v959 = vadd.f32 %v852, %v958
      %960 = vmatmul.bf16.gmra.mxu0 %v826
      %v961 = vpop.f32.mrf.mxu0
      %v962 = vadd.f32 %v852, %v961
      %v963 = vpop.f32.mrf.mxu0
      %v964 = vadd.f32 %v852, %v963
      %965 = vmatmul.bf16.gmra.mxu0 %v827
      %v966 = vpop.f32.mrf.mxu0
      %v967 = vadd.f32 %v852, %v966
      %v968 = vpop.f32.mrf.mxu0
      %v969 = vadd.f32 %v852, %v968
      %970 = vmatmul.bf16.gmra.mxu0 %v828
      %v971 = vpop.f32.mrf.mxu0
      %v972 = vadd.f32 %v852, %v971
      %v973 = vpop.f32.mrf.mxu0
      %v974 = vadd.f32 %v852, %v973
      %975 = vmatmul.bf16.gmra.mxu0 %v829
      %v976 = vpop.f32.mrf.mxu0
      %v977 = vadd.f32 %v852, %v976
      %v978 = vpop.f32.mrf.mxu0
      %v979 = vadd.f32 %v852, %v978
      %980 = vmatmul.bf16.gmra.mxu0 %v830
      %v981 = vpop.f32.mrf.mxu0
      %v982 = vadd.f32 %v852, %v981
      %v983 = vpop.f32.mrf.mxu0
      %v984 = vadd.f32 %v852, %v983
      %985 = vmatmul.bf16.gmra.mxu0 %v831
      %v986 = vpop.f32.mrf.mxu0
      %v987 = vadd.f32 %v852, %v986
      %v988 = vpop.f32.mrf.mxu0
      %v989 = vadd.f32 %v852, %v988
      %990 = vdwg.mxu0
      %vm991 = vcmp.gt.f32.partialorder %v912, 0.0
      %vm992 = vcmp.gt.f32.partialorder %v914, 0.0
      %vm993 = vcmp.gt.f32.partialorder %v917, 0.0
      %vm994 = vcmp.gt.f32.partialorder %v919, 0.0
      %vm995 = vcmp.gt.f32.partialorder %v922, 0.0
      %vm996 = vcmp.gt.f32.partialorder %v924, 0.0
      %vm997 = vcmp.gt.f32.partialorder %v927, 0.0
      %vm998 = vcmp.gt.f32.partialorder %v929, 0.0
      %vm999 = vcmp.gt.f32.partialorder %v932, 0.0
      %vm1000 = vcmp.gt.f32.partialorder %v934, 0.0
      %vm1001 = vcmp.gt.f32.partialorder %v937, 0.0
      %vm1002 = vcmp.gt.f32.partialorder %v939, 0.0
      %vm1003 = vcmp.gt.f32.partialorder %v942, 0.0
      %vm1004 = vcmp.gt.f32.partialorder %v944, 0.0
      %vm1005 = vcmp.gt.f32.partialorder %v947, 0.0
      %vm1006 = vcmp.gt.f32.partialorder %v949, 0.0
      %vm1007 = vcmp.gt.f32.partialorder %v952, 0.0
      %vm1008 = vcmp.gt.f32.partialorder %v954, 0.0
      %vm1009 = vcmp.gt.f32.partialorder %v957, 0.0
      %vm1010 = vcmp.gt.f32.partialorder %v959, 0.0
      %vm1011 = vcmp.gt.f32.partialorder %v962, 0.0
      %vm1012 = vcmp.gt.f32.partialorder %v964, 0.0
      %vm1013 = vcmp.gt.f32.partialorder %v967, 0.0
      %vm1014 = vcmp.gt.f32.partialorder %v969, 0.0
      %vm1015 = vcmp.gt.f32.partialorder %v972, 0.0
      %vm1016 = vcmp.gt.f32.partialorder %v974, 0.0
      %vm1017 = vcmp.gt.f32.partialorder %v977, 0.0
      %vm1018 = vcmp.gt.f32.partialorder %v979, 0.0
      %vm1019 = vcmp.gt.f32.partialorder %v982, 0.0
      %vm1020 = vcmp.gt.f32.partialorder %v984, 0.0
      %vm1021 = vcmp.gt.f32.partialorder %v987, 0.0
      %vm1022 = vcmp.gt.f32.partialorder %v989, 0.0
      %v1023 = vmul.f32 %v912, 0.01
      %v1024 = vmul.f32 %v914, 0.01
      %v1025 = vmul.f32 %v917, 0.01
      %v1026 = vmul.f32 %v919, 0.01
      %v1027 = vmul.f32 %v922, 0.01
      %v1028 = vmul.f32 %v924, 0.01
      %v1029 = vmul.f32 %v927, 0.01
      %v1030 = vmul.f32 %v929, 0.01
      %v1031 = vmul.f32 %v932, 0.01
      %v1032 = vmul.f32 %v934, 0.01
      %v1033 = vmul.f32 %v937, 0.01
      %v1034 = vmul.f32 %v939, 0.01
      %v1035 = vmul.f32 %v942, 0.01
      %v1036 = vmul.f32 %v944, 0.01
      %v1037 = vmul.f32 %v947, 0.01
      %v1038 = vmul.f32 %v949, 0.01
      %v1039 = vmul.f32 %v952, 0.01
      %v1040 = vmul.f32 %v954, 0.01
      %v1041 = vmul.f32 %v957, 0.01
      %v1042 = vmul.f32 %v959, 0.01
      %v1043 = vmul.f32 %v962, 0.01
      %v1044 = vmul.f32 %v964, 0.01
      %v1045 = vmul.f32 %v967, 0.01
      %v1046 = vmul.f32 %v969, 0.01
      %v1047 = vmul.f32 %v972, 0.01
      %v1048 = vmul.f32 %v974, 0.01
      %v1049 = vmul.f32 %v977, 0.01
      %v1050 = vmul.f32 %v979, 0.01
      %v1051 = vmul.f32 %v982, 0.01
      %v1052 = vmul.f32 %v984, 0.01
      %v1053 = vmul.f32 %v987, 0.01
      %v1054 = vmul.f32 %v989, 0.01
      %v1055 = vsel %vm991, %v912, %v1023
      %v1056 = vsel %vm992, %v914, %v1024
      %v1057 = vsel %vm993, %v917, %v1025
      %v1058 = vsel %vm994, %v919, %v1026
      %v1059 = vsel %vm995, %v922, %v1027
      %v1060 = vsel %vm996, %v924, %v1028
      %v1061 = vsel %vm997, %v927, %v1029
      %v1062 = vsel %vm998, %v929, %v1030
      %v1063 = vsel %vm999, %v932, %v1031
      %v1064 = vsel %vm1000, %v934, %v1032
      %v1065 = vsel %vm1001, %v937, %v1033
      %v1066 = vsel %vm1002, %v939, %v1034
      %v1067 = vsel %vm1003, %v942, %v1035
      %v1068 = vsel %vm1004, %v944, %v1036
      %v1069 = vsel %vm1005, %v947, %v1037
      %v1070 = vsel %vm1006, %v949, %v1038
      %v1071 = vsel %vm1007, %v952, %v1039
      %v1072 = vsel %vm1008, %v954, %v1040
      %v1073 = vsel %vm1009, %v957, %v1041
      %v1074 = vsel %vm1010, %v959, %v1042
      %v1075 = vsel %vm1011, %v962, %v1043
      %v1076 = vsel %vm1012, %v964, %v1044
      %v1077 = vsel %vm1013, %v967, %v1045
      %v1078 = vsel %vm1014, %v969, %v1046
      %v1079 = vsel %vm1015, %v972, %v1047
      %v1080 = vsel %vm1016, %v974, %v1048
      %v1081 = vsel %vm1017, %v977, %v1049
      %v1082 = vsel %vm1018, %v979, %v1050
      %v1083 = vsel %vm1019, %v982, %v1051
      %v1084 = vsel %vm1020, %v984, %v1052
      %v1085 = vsel %vm1021, %v987, %v1053
      %v1086 = vsel %vm1022, %v989, %v1054
      %v1087 = vpack.c.bf16 %v1056, %v1055
      %v1088 = vpack.c.bf16 %v1058, %v1057
      %v1089 = vpack.c.bf16 %v1060, %v1059
      %v1090 = vpack.c.bf16 %v1062, %v1061
      %v1091 = vpack.c.bf16 %v1064, %v1063
      %v1092 = vpack.c.bf16 %v1066, %v1065
      %v1093 = vpack.c.bf16 %v1068, %v1067
      %v1094 = vpack.c.bf16 %v1070, %v1069
      %v1095 = vpack.c.bf16 %v1072, %v1071
      %v1096 = vpack.c.bf16 %v1074, %v1073
      %v1097 = vpack.c.bf16 %v1076, %v1075
      %v1098 = vpack.c.bf16 %v1078, %v1077
      %v1099 = vpack.c.bf16 %v1080, %v1079
      %v1100 = vpack.c.bf16 %v1082, %v1081
      %v1101 = vpack.c.bf16 %v1084, %v1083
      %v1102 = vpack.c.bf16 %v1086, %v1085
      %s1103 = scalar_lea.vmem %s3, 128
      %v1104 = vld [vmem:[%s1103] sm:$0xf]
      %v1105 = vld [vmem:[%s1103 + $0x4] sm:$0xf]
      %v1106 = vld [vmem:[%s1103 + $0x8] sm:$0xf]
      %v1107 = vld [vmem:[%s1103 + $0xc] sm:$0xf]
      %v1108 = vld [vmem:[%s1103 + $0x10] sm:$0xf]
      %v1109 = vld [vmem:[%s1103 + $0x14] sm:$0xf]
      %v1110 = vld [vmem:[%s1103 + $0x18] sm:$0xf]
      %v1111 = vld [vmem:[%s1103 + $0x1c] sm:$0xf]
      %v1112 = vld [vmem:[%s1103 + $0x20] sm:$0xf]
      %v1113 = vld [vmem:[%s1103 + $0x24] sm:$0xf]
      %v1114 = vld [vmem:[%s1103 + $0x28] sm:$0xf]
      %v1115 = vld [vmem:[%s1103 + $0x2c] sm:$0xf]
      %v1116 = vld [vmem:[%s1103 + $0x30] sm:$0xf]
      %v1117 = vld [vmem:[%s1103 + $0x34] sm:$0xf]
      %v1118 = vld [vmem:[%s1103 + $0x38] sm:$0xf]
      %v1119 = vld [vmem:[%s1103 + $0x3c] sm:$0xf]
      %s1120 = scalar_lea.vmem %s4, 2
      %v1121 = vld [vmem:[%s1120] sm:$0x1]
      %v1123 = vperm.slane %v1121, 0
      %v1141 = vunpack.c.l.b16 %v1104
      %v1142 = vunpack.c.l.b16 %v1105
      %v1143 = vunpack.c.l.b16 %v1106
      %v1144 = vunpack.c.l.b16 %v1107
      %v1145 = vunpack.c.l.b16 %v1108
      %v1146 = vunpack.c.l.b16 %v1109
      %v1147 = vunpack.c.l.b16 %v1110
      %v1148 = vunpack.c.l.b16 %v1111
      %v1149 = vunpack.c.l.b16 %v1112
      %v1150 = vunpack.c.l.b16 %v1113
      %v1151 = vunpack.c.l.b16 %v1114
      %v1152 = vunpack.c.l.b16 %v1115
      %v1153 = vunpack.c.l.b16 %v1116
      %v1154 = vunpack.c.l.b16 %v1117
      %v1155 = vunpack.c.l.b16 %v1118
      %v1156 = vunpack.c.l.b16 %v1119
      %v1157 = vpack.c.b16 %v1142, %v1141
      %v1158 = vpack.c.b16 %v1144, %v1143
      %v1159 = vpack.c.b16 %v1146, %v1145
      %v1160 = vpack.c.b16 %v1148, %v1147
      %v1161 = vpack.c.b16 %v1150, %v1149
      %v1162 = vpack.c.b16 %v1152, %v1151
      %v1163 = vpack.c.b16 %v1154, %v1153
      %v1164 = vpack.c.b16 %v1156, %v1155
      %1173 = vmatpush.bf16.msra.mxu0 %v1164
      %1174 = vmatpush.bf16.msra.mxu0 %v1163
      %1175 = vmatpush.bf16.msra.mxu0 %v1162
      %1176 = vmatpush.bf16.msra.mxu0 %v1161
      %1177 = vmatpush.bf16.msra.mxu0 %v1160
      %1178 = vmatpush.bf16.msra.mxu0 %v1159
      %1179 = vmatpush.bf16.msra.mxu0 %v1158
      %1180 = vmatpush.bf16.msra.mxu0 %v1157
      %1181 = vmatmul.bf16.gmra.mxu0 %v1087
      %v1182 = vpop.f32.mrf.mxu0
      %v1183 = vadd.f32 %v1123, %v1182
      %v1184 = vpop.f32.mrf.mxu0
      %v1185 = vadd.f32 %v1123, %v1184
      %1186 = vmatmul.bf16.gmra.mxu0 %v1088
      %v1187 = vpop.f32.mrf.mxu0
      %v1188 = vadd.f32 %v1123, %v1187
      %v1189 = vpop.f32.mrf.mxu0
      %v1190 = vadd.f32 %v1123, %v1189
      %1191 = vmatmul.bf16.gmra.mxu0 %v1089
      %v1192 = vpop.f32.mrf.mxu0
      %v1193 = vadd.f32 %v1123, %v1192
      %v1194 = vpop.f32.mrf.mxu0
      %v1195 = vadd.f32 %v1123, %v1194
      %1196 = vmatmul.bf16.gmra.mxu0 %v1090
      %v1197 = vpop.f32.mrf.mxu0
      %v1198 = vadd.f32 %v1123, %v1197
      %v1199 = vpop.f32.mrf.mxu0
      %v1200 = vadd.f32 %v1123, %v1199
      %1201 = vmatmul.bf16.gmra.mxu0 %v1091
      %v1202 = vpop.f32.mrf.mxu0
      %v1203 = vadd.f32 %v1123, %v1202
      %v1204 = vpop.f32.mrf.mxu0
      %v1205 = vadd.f32 %v1123, %v1204
      %1206 = vmatmul.bf16.gmra.mxu0 %v1092
      %v1207 = vpop.f32.mrf.mxu0
      %v1208 = vadd.f32 %v1123, %v1207
      %v1209 = vpop.f32.mrf.mxu0
      %v1210 = vadd.f32 %v1123, %v1209
      %1211 = vmatmul.bf16.gmra.mxu0 %v1093
      %v1212 = vpop.f32.mrf.mxu0
      %v1213 = vadd.f32 %v1123, %v1212
      %v1214 = vpop.f32.mrf.mxu0
      %v1215 = vadd.f32 %v1123, %v1214
      %1216 = vmatmul.bf16.gmra.mxu0 %v1094
      %v1217 = vpop.f32.mrf.mxu0
      %v1218 = vadd.f32 %v1123, %v1217
      %v1219 = vpop.f32.mrf.mxu0
      %v1220 = vadd.f32 %v1123, %v1219
      %1221 = vmatmul.bf16.gmra.mxu0 %v1095
      %v1222 = vpop.f32.mrf.mxu0
      %v1223 = vadd.f32 %v1123, %v1222
      %v1224 = vpop.f32.mrf.mxu0
      %v1225 = vadd.f32 %v1123, %v1224
      %1226 = vmatmul.bf16.gmra.mxu0 %v1096
      %v1227 = vpop.f32.mrf.mxu0
      %v1228 = vadd.f32 %v1123, %v1227
      %v1229 = vpop.f32.mrf.mxu0
      %v1230 = vadd.f32 %v1123, %v1229
      %1231 = vmatmul.bf16.gmra.mxu0 %v1097
      %v1232 = vpop.f32.mrf.mxu0
      %v1233 = vadd.f32 %v1123, %v1232
      %v1234 = vpop.f32.mrf.mxu0
      %v1235 = vadd.f32 %v1123, %v1234
      %1236 = vmatmul.bf16.gmra.mxu0 %v1098
      %v1237 = vpop.f32.mrf.mxu0
      %v1238 = vadd.f32 %v1123, %v1237
      %v1239 = vpop.f32.mrf.mxu0
      %v1240 = vadd.f32 %v1123, %v1239
      %1241 = vmatmul.bf16.gmra.mxu0 %v1099
      %v1242 = vpop.f32.mrf.mxu0
      %v1243 = vadd.f32 %v1123, %v1242
      %v1244 = vpop.f32.mrf.mxu0
      %v1245 = vadd.f32 %v1123, %v1244
      %1246 = vmatmul.bf16.gmra.mxu0 %v1100
      %v1247 = vpop.f32.mrf.mxu0
      %v1248 = vadd.f32 %v1123, %v1247
      %v1249 = vpop.f32.mrf.mxu0
      %v1250 = vadd.f32 %v1123, %v1249
      %1251 = vmatmul.bf16.gmra.mxu0 %v1101
      %v1252 = vpop.f32.mrf.mxu0
      %v1253 = vadd.f32 %v1123, %v1252
      %v1254 = vpop.f32.mrf.mxu0
      %v1255 = vadd.f32 %v1123, %v1254
      %1256 = vmatmul.bf16.gmra.mxu0 %v1102
      %v1257 = vpop.f32.mrf.mxu0
      %v1258 = vadd.f32 %v1123, %v1257
      %v1259 = vpop.f32.mrf.mxu0
      %v1260 = vadd.f32 %v1123, %v1259
      %1261 = vdwg.mxu0
      %v1262 = vpack.c.bf16 %v1185, %v1183
      %v1263 = vpack.c.bf16 %v1190, %v1188
      %v1264 = vpack.c.bf16 %v1195, %v1193
      %v1265 = vpack.c.bf16 %v1200, %v1198
      %v1266 = vpack.c.bf16 %v1205, %v1203
      %v1267 = vpack.c.bf16 %v1210, %v1208
      %v1268 = vpack.c.bf16 %v1215, %v1213
      %v1269 = vpack.c.bf16 %v1220, %v1218
      %v1270 = vpack.c.bf16 %v1225, %v1223
      %v1271 = vpack.c.bf16 %v1230, %v1228
      %v1272 = vpack.c.bf16 %v1235, %v1233
      %v1273 = vpack.c.bf16 %v1240, %v1238
      %v1274 = vpack.c.bf16 %v1245, %v1243
      %v1275 = vpack.c.bf16 %v1250, %v1248
      %v1276 = vpack.c.bf16 %v1255, %v1253
      %v1277 = vpack.c.bf16 %v1260, %v1258
      %s1278 = scalar_lea.vmem %s3, 192
      %v1279 = vld [vmem:[%s1278] sm:$0xf]
      %v1280 = vld [vmem:[%s1278 + $0x4] sm:$0xf]
      %v1281 = vld [vmem:[%s1278 + $0x8] sm:$0xf]
      %v1282 = vld [vmem:[%s1278 + $0xc] sm:$0xf]
      %v1283 = vld [vmem:[%s1278 + $0x10] sm:$0xf]
      %v1284 = vld [vmem:[%s1278 + $0x14] sm:$0xf]
      %v1285 = vld [vmem:[%s1278 + $0x18] sm:$0xf]
      %v1286 = vld [vmem:[%s1278 + $0x1c] sm:$0xf]
      %v1287 = vld [vmem:[%s1278 + $0x20] sm:$0xf]
      %v1288 = vld [vmem:[%s1278 + $0x24] sm:$0xf]
      %v1289 = vld [vmem:[%s1278 + $0x28] sm:$0xf]
      %v1290 = vld [vmem:[%s1278 + $0x2c] sm:$0xf]
      %v1291 = vld [vmem:[%s1278 + $0x30] sm:$0xf]
      %v1292 = vld [vmem:[%s1278 + $0x34] sm:$0xf]
      %v1293 = vld [vmem:[%s1278 + $0x38] sm:$0xf]
      %v1294 = vld [vmem:[%s1278 + $0x3c] sm:$0xf]
      %s1295 = scalar_lea.vmem %s4, 3
      %v1296 = vld [vmem:[%s1295] sm:$0x1]
      %v1298 = vperm.slane %v1296, 0
      %v1316 = vunpack.c.l.b16 %v1279
      %v1317 = vunpack.c.l.b16 %v1280
      %v1318 = vunpack.c.l.b16 %v1281
      %v1319 = vunpack.c.l.b16 %v1282
      %v1320 = vunpack.c.l.b16 %v1283
      %v1321 = vunpack.c.l.b16 %v1284
      %v1322 = vunpack.c.l.b16 %v1285
      %v1323 = vunpack.c.l.b16 %v1286
      %v1324 = vunpack.c.l.b16 %v1287
      %v1325 = vunpack.c.l.b16 %v1288
      %v1326 = vunpack.c.l.b16 %v1289
      %v1327 = vunpack.c.l.b16 %v1290
      %v1328 = vunpack.c.l.b16 %v1291
      %v1329 = vunpack.c.l.b16 %v1292
      %v1330 = vunpack.c.l.b16 %v1293
      %v1331 = vunpack.c.l.b16 %v1294
      %v1332 = vpack.c.b16 %v1317, %v1316
      %v1333 = vpack.c.b16 %v1319, %v1318
      %v1334 = vpack.c.b16 %v1321, %v1320
      %v1335 = vpack.c.b16 %v1323, %v1322
      %v1336 = vpack.c.b16 %v1325, %v1324
      %v1337 = vpack.c.b16 %v1327, %v1326
      %v1338 = vpack.c.b16 %v1329, %v1328
      %v1339 = vpack.c.b16 %v1331, %v1330
      %1348 = vmatpush.bf16.msra.mxu0 %v1339
      %1349 = vmatpush.bf16.msra.mxu0 %v1338
      %1350 = vmatpush.bf16.msra.mxu0 %v1337
      %1351 = vmatpush.bf16.msra.mxu0 %v1336
      %1352 = vmatpush.bf16.msra.mxu0 %v1335
      %1353 = vmatpush.bf16.msra.mxu0 %v1334
      %1354 = vmatpush.bf16.msra.mxu0 %v1333
      %1355 = vmatpush.bf16.msra.mxu0 %v1332
      %1356 = vmatmul.bf16.gmra.mxu0 %v1262
      %v1357 = vpop.f32.mrf.mxu0
      %v1358 = vadd.f32 %v1298, %v1357
      %v1359 = vpop.f32.mrf.mxu0
      %v1360 = vadd.f32 %v1298, %v1359
      %1361 = vmatmul.bf16.gmra.mxu0 %v1263
      %v1362 = vpop.f32.mrf.mxu0
      %v1363 = vadd.f32 %v1298, %v1362
      %v1364 = vpop.f32.mrf.mxu0
      %v1365 = vadd.f32 %v1298, %v1364
      %1366 = vmatmul.bf16.gmra.mxu0 %v1264
      %v1367 = vpop.f32.mrf.mxu0
      %v1368 = vadd.f32 %v1298, %v1367
      %v1369 = vpop.f32.mrf.mxu0
      %v1370 = vadd.f32 %v1298, %v1369
      %1371 = vmatmul.bf16.gmra.mxu0 %v1265
      %v1372 = vpop.f32.mrf.mxu0
      %v1373 = vadd.f32 %v1298, %v1372
      %v1374 = vpop.f32.mrf.mxu0
      %v1375 = vadd.f32 %v1298, %v1374
      %1376 = vmatmul.bf16.gmra.mxu0 %v1266
      %v1377 = vpop.f32.mrf.mxu0
      %v1378 = vadd.f32 %v1298, %v1377
      %v1379 = vpop.f32.mrf.mxu0
      %v1380 = vadd.f32 %v1298, %v1379
      %1381 = vmatmul.bf16.gmra.mxu0 %v1267
      %v1382 = vpop.f32.mrf.mxu0
      %v1383 = vadd.f32 %v1298, %v1382
      %v1384 = vpop.f32.mrf.mxu0
      %v1385 = vadd.f32 %v1298, %v1384
      %1386 = vmatmul.bf16.gmra.mxu0 %v1268
      %v1387 = vpop.f32.mrf.mxu0
      %v1388 = vadd.f32 %v1298, %v1387
      %v1389 = vpop.f32.mrf.mxu0
      %v1390 = vadd.f32 %v1298, %v1389
      %1391 = vmatmul.bf16.gmra.mxu0 %v1269
      %v1392 = vpop.f32.mrf.mxu0
      %v1393 = vadd.f32 %v1298, %v1392
      %v1394 = vpop.f32.mrf.mxu0
      %v1395 = vadd.f32 %v1298, %v1394
      %1396 = vmatmul.bf16.gmra.mxu0 %v1270
      %v1397 = vpop.f32.mrf.mxu0
      %v1398 = vadd.f32 %v1298, %v1397
      %v1399 = vpop.f32.mrf.mxu0
      %v1400 = vadd.f32 %v1298, %v1399
      %1401 = vmatmul.bf16.gmra.mxu0 %v1271
      %v1402 = vpop.f32.mrf.mxu0
      %v1403 = vadd.f32 %v1298, %v1402
      %v1404 = vpop.f32.mrf.mxu0
      %v1405 = vadd.f32 %v1298, %v1404
      %1406 = vmatmul.bf16.gmra.mxu0 %v1272
      %v1407 = vpop.f32.mrf.mxu0
      %v1408 = vadd.f32 %v1298, %v1407
      %v1409 = vpop.f32.mrf.mxu0
      %v1410 = vadd.f32 %v1298, %v1409
      %1411 = vmatmul.bf16.gmra.mxu0 %v1273
      %v1412 = vpop.f32.mrf.mxu0
      %v1413 = vadd.f32 %v1298, %v1412
      %v1414 = vpop.f32.mrf.mxu0
      %v1415 = vadd.f32 %v1298, %v1414
      %1416 = vmatmul.bf16.gmra.mxu0 %v1274
      %v1417 = vpop.f32.mrf.mxu0
      %v1418 = vadd.f32 %v1298, %v1417
      %v1419 = vpop.f32.mrf.mxu0
      %v1420 = vadd.f32 %v1298, %v1419
      %1421 = vmatmul.bf16.gmra.mxu0 %v1275
      %v1422 = vpop.f32.mrf.mxu0
      %v1423 = vadd.f32 %v1298, %v1422
      %v1424 = vpop.f32.mrf.mxu0
      %v1425 = vadd.f32 %v1298, %v1424
      %1426 = vmatmul.bf16.gmra.mxu0 %v1276
      %v1427 = vpop.f32.mrf.mxu0
      %v1428 = vadd.f32 %v1298, %v1427
      %v1429 = vpop.f32.mrf.mxu0
      %v1430 = vadd.f32 %v1298, %v1429
      %1431 = vmatmul.bf16.gmra.mxu0 %v1277
      %v1432 = vpop.f32.mrf.mxu0
      %v1433 = vadd.f32 %v1298, %v1432
      %v1434 = vpop.f32.mrf.mxu0
      %v1435 = vadd.f32 %v1298, %v1434
      %1436 = vdwg.mxu0
      %vm1437 = vcmp.gt.f32.partialorder %v1358, 0.0
      %vm1438 = vcmp.gt.f32.partialorder %v1360, 0.0
      %vm1439 = vcmp.gt.f32.partialorder %v1363, 0.0
      %vm1440 = vcmp.gt.f32.partialorder %v1365, 0.0
      %vm1441 = vcmp.gt.f32.partialorder %v1368, 0.0
      %vm1442 = vcmp.gt.f32.partialorder %v1370, 0.0
      %vm1443 = vcmp.gt.f32.partialorder %v1373, 0.0
      %vm1444 = vcmp.gt.f32.partialorder %v1375, 0.0
      %vm1445 = vcmp.gt.f32.partialorder %v1378, 0.0
      %vm1446 = vcmp.gt.f32.partialorder %v1380, 0.0
      %vm1447 = vcmp.gt.f32.partialorder %v1383, 0.0
      %vm1448 = vcmp.gt.f32.partialorder %v1385, 0.0
      %vm1449 = vcmp.gt.f32.partialorder %v1388, 0.0
      %vm1450 = vcmp.gt.f32.partialorder %v1390, 0.0
      %vm1451 = vcmp.gt.f32.partialorder %v1393, 0.0
      %vm1452 = vcmp.gt.f32.partialorder %v1395, 0.0
      %vm1453 = vcmp.gt.f32.partialorder %v1398, 0.0
      %vm1454 = vcmp.gt.f32.partialorder %v1400, 0.0
      %vm1455 = vcmp.gt.f32.partialorder %v1403, 0.0
      %vm1456 = vcmp.gt.f32.partialorder %v1405, 0.0
      %vm1457 = vcmp.gt.f32.partialorder %v1408, 0.0
      %vm1458 = vcmp.gt.f32.partialorder %v1410, 0.0
      %vm1459 = vcmp.gt.f32.partialorder %v1413, 0.0
      %vm1460 = vcmp.gt.f32.partialorder %v1415, 0.0
      %vm1461 = vcmp.gt.f32.partialorder %v1418, 0.0
      %vm1462 = vcmp.gt.f32.partialorder %v1420, 0.0
      %vm1463 = vcmp.gt.f32.partialorder %v1423, 0.0
      %vm1464 = vcmp.gt.f32.partialorder %v1425, 0.0
      %vm1465 = vcmp.gt.f32.partialorder %v1428, 0.0
      %vm1466 = vcmp.gt.f32.partialorder %v1430, 0.0
      %vm1467 = vcmp.gt.f32.partialorder %v1433, 0.0
      %vm1468 = vcmp.gt.f32.partialorder %v1435, 0.0
      %v1469 = vmul.f32 %v1358, 0.01
      %v1470 = vmul.f32 %v1360, 0.01
      %v1471 = vmul.f32 %v1363, 0.01
      %v1472 = vmul.f32 %v1365, 0.01
      %v1473 = vmul.f32 %v1368, 0.01
      %v1474 = vmul.f32 %v1370, 0.01
      %v1475 = vmul.f32 %v1373, 0.01
      %v1476 = vmul.f32 %v1375, 0.01
      %v1477 = vmul.f32 %v1378, 0.01
      %v1478 = vmul.f32 %v1380, 0.01
      %v1479 = vmul.f32 %v1383, 0.01
      %v1480 = vmul.f32 %v1385, 0.01
      %v1481 = vmul.f32 %v1388, 0.01
      %v1482 = vmul.f32 %v1390, 0.01
      %v1483 = vmul.f32 %v1393, 0.01
      %v1484 = vmul.f32 %v1395, 0.01
      %v1485 = vmul.f32 %v1398, 0.01
      %v1486 = vmul.f32 %v1400, 0.01
      %v1487 = vmul.f32 %v1403, 0.01
      %v1488 = vmul.f32 %v1405, 0.01
      %v1489 = vmul.f32 %v1408, 0.01
      %v1490 = vmul.f32 %v1410, 0.01
      %v1491 = vmul.f32 %v1413, 0.01
      %v1492 = vmul.f32 %v1415, 0.01
      %v1493 = vmul.f32 %v1418, 0.01
      %v1494 = vmul.f32 %v1420, 0.01
      %v1495 = vmul.f32 %v1423, 0.01
      %v1496 = vmul.f32 %v1425, 0.01
      %v1497 = vmul.f32 %v1428, 0.01
      %v1498 = vmul.f32 %v1430, 0.01
      %v1499 = vmul.f32 %v1433, 0.01
      %v1500 = vmul.f32 %v1435, 0.01
      %v1501 = vsel %vm1437, %v1358, %v1469
      %v1502 = vsel %vm1438, %v1360, %v1470
      %v1503 = vsel %vm1439, %v1363, %v1471
      %v1504 = vsel %vm1440, %v1365, %v1472
      %v1505 = vsel %vm1441, %v1368, %v1473
      %v1506 = vsel %vm1442, %v1370, %v1474
      %v1507 = vsel %vm1443, %v1373, %v1475
      %v1508 = vsel %vm1444, %v1375, %v1476
      %v1509 = vsel %vm1445, %v1378, %v1477
      %v1510 = vsel %vm1446, %v1380, %v1478
      %v1511 = vsel %vm1447, %v1383, %v1479
      %v1512 = vsel %vm1448, %v1385, %v1480
      %v1513 = vsel %vm1449, %v1388, %v1481
      %v1514 = vsel %vm1450, %v1390, %v1482
      %v1515 = vsel %vm1451, %v1393, %v1483
      %v1516 = vsel %vm1452, %v1395, %v1484
      %v1517 = vsel %vm1453, %v1398, %v1485
      %v1518 = vsel %vm1454, %v1400, %v1486
      %v1519 = vsel %vm1455, %v1403, %v1487
      %v1520 = vsel %vm1456, %v1405, %v1488
      %v1521 = vsel %vm1457, %v1408, %v1489
      %v1522 = vsel %vm1458, %v1410, %v1490
      %v1523 = vsel %vm1459, %v1413, %v1491
      %v1524 = vsel %vm1460, %v1415, %v1492
      %v1525 = vsel %vm1461, %v1418, %v1493
      %v1526 = vsel %vm1462, %v1420, %v1494
      %v1527 = vsel %vm1463, %v1423, %v1495
      %v1528 = vsel %vm1464, %v1425, %v1496
      %v1529 = vsel %vm1465, %v1428, %v1497
      %v1530 = vsel %vm1466, %v1430, %v1498
      %v1531 = vsel %vm1467, %v1433, %v1499
      %v1532 = vsel %vm1468, %v1435, %v1500
      %v1533 = vpack.c.bf16 %v1502, %v1501
      %v1534 = vpack.c.bf16 %v1504, %v1503
      %v1535 = vpack.c.bf16 %v1506, %v1505
      %v1536 = vpack.c.bf16 %v1508, %v1507
      %v1537 = vpack.c.bf16 %v1510, %v1509
      %v1538 = vpack.c.bf16 %v1512, %v1511
      %v1539 = vpack.c.bf16 %v1514, %v1513
      %v1540 = vpack.c.bf16 %v1516, %v1515
      %v1541 = vpack.c.bf16 %v1518, %v1517
      %v1542 = vpack.c.bf16 %v1520, %v1519
      %v1543 = vpack.c.bf16 %v1522, %v1521
      %v1544 = vpack.c.bf16 %v1524, %v1523
      %v1545 = vpack.c.bf16 %v1526, %v1525
      %v1546 = vpack.c.bf16 %v1528, %v1527
      %v1547 = vpack.c.bf16 %v1530, %v1529
      %v1548 = vpack.c.bf16 %v1532, %v1531
      %s1549 = scalar_lea.vmem %s3, 256
      %v1550 = vld [vmem:[%s1549] sm:$0xf]
      %v1551 = vld [vmem:[%s1549 + $0x4] sm:$0xf]
      %v1552 = vld [vmem:[%s1549 + $0x8] sm:$0xf]
      %v1553 = vld [vmem:[%s1549 + $0xc] sm:$0xf]
      %v1554 = vld [vmem:[%s1549 + $0x10] sm:$0xf]
      %v1555 = vld [vmem:[%s1549 + $0x14] sm:$0xf]
      %v1556 = vld [vmem:[%s1549 + $0x18] sm:$0xf]
      %v1557 = vld [vmem:[%s1549 + $0x1c] sm:$0xf]
      %v1558 = vld [vmem:[%s1549 + $0x20] sm:$0xf]
      %v1559 = vld [vmem:[%s1549 + $0x24] sm:$0xf]
      %v1560 = vld [vmem:[%s1549 + $0x28] sm:$0xf]
      %v1561 = vld [vmem:[%s1549 + $0x2c] sm:$0xf]
      %v1562 = vld [vmem:[%s1549 + $0x30] sm:$0xf]
      %v1563 = vld [vmem:[%s1549 + $0x34] sm:$0xf]
      %v1564 = vld [vmem:[%s1549 + $0x38] sm:$0xf]
      %v1565 = vld [vmem:[%s1549 + $0x3c] sm:$0xf]
      %s1566 = scalar_lea.vmem %s4, 4
      %v1567 = vld [vmem:[%s1566] sm:$0x1]
      %v1569 = vperm.slane %v1567, 0
      %v1587 = vunpack.c.l.b16 %v1550
      %v1588 = vunpack.c.l.b16 %v1551
      %v1589 = vunpack.c.l.b16 %v1552
      %v1590 = vunpack.c.l.b16 %v1553
      %v1591 = vunpack.c.l.b16 %v1554
      %v1592 = vunpack.c.l.b16 %v1555
      %v1593 = vunpack.c.l.b16 %v1556
      %v1594 = vunpack.c.l.b16 %v1557
      %v1595 = vunpack.c.l.b16 %v1558
      %v1596 = vunpack.c.l.b16 %v1559
      %v1597 = vunpack.c.l.b16 %v1560
      %v1598 = vunpack.c.l.b16 %v1561
      %v1599 = vunpack.c.l.b16 %v1562
      %v1600 = vunpack.c.l.b16 %v1563
      %v1601 = vunpack.c.l.b16 %v1564
      %v1602 = vunpack.c.l.b16 %v1565
      %v1603 = vpack.c.b16 %v1588, %v1587
      %v1604 = vpack.c.b16 %v1590, %v1589
      %v1605 = vpack.c.b16 %v1592, %v1591
      %v1606 = vpack.c.b16 %v1594, %v1593
      %v1607 = vpack.c.b16 %v1596, %v1595
      %v1608 = vpack.c.b16 %v1598, %v1597
      %v1609 = vpack.c.b16 %v1600, %v1599
      %v1610 = vpack.c.b16 %v1602, %v1601
      %1619 = vmatpush.bf16.msra.mxu0 %v1610
      %1620 = vmatpush.bf16.msra.mxu0 %v1609
      %1621 = vmatpush.bf16.msra.mxu0 %v1608
      %1622 = vmatpush.bf16.msra.mxu0 %v1607
      %1623 = vmatpush.bf16.msra.mxu0 %v1606
      %1624 = vmatpush.bf16.msra.mxu0 %v1605
      %1625 = vmatpush.bf16.msra.mxu0 %v1604
      %1626 = vmatpush.bf16.msra.mxu0 %v1603
      %1627 = vmatmul.bf16.gmra.mxu0 %v1533
      %v1628 = vpop.f32.mrf.mxu0
      %v1629 = vadd.f32 %v1569, %v1628
      %v1630 = vpop.f32.mrf.mxu0
      %v1631 = vadd.f32 %v1569, %v1630
      %1632 = vmatmul.bf16.gmra.mxu0 %v1534
      %v1633 = vpop.f32.mrf.mxu0
      %v1634 = vadd.f32 %v1569, %v1633
      %v1635 = vpop.f32.mrf.mxu0
      %v1636 = vadd.f32 %v1569, %v1635
      %1637 = vmatmul.bf16.gmra.mxu0 %v1535
      %v1638 = vpop.f32.mrf.mxu0
      %v1639 = vadd.f32 %v1569, %v1638
      %v1640 = vpop.f32.mrf.mxu0
      %v1641 = vadd.f32 %v1569, %v1640
      %1642 = vmatmul.bf16.gmra.mxu0 %v1536
      %v1643 = vpop.f32.mrf.mxu0
      %v1644 = vadd.f32 %v1569, %v1643
      %v1645 = vpop.f32.mrf.mxu0
      %v1646 = vadd.f32 %v1569, %v1645
      %1647 = vmatmul.bf16.gmra.mxu0 %v1537
      %v1648 = vpop.f32.mrf.mxu0
      %v1649 = vadd.f32 %v1569, %v1648
      %v1650 = vpop.f32.mrf.mxu0
      %v1651 = vadd.f32 %v1569, %v1650
      %1652 = vmatmul.bf16.gmra.mxu0 %v1538
      %v1653 = vpop.f32.mrf.mxu0
      %v1654 = vadd.f32 %v1569, %v1653
      %v1655 = vpop.f32.mrf.mxu0
      %v1656 = vadd.f32 %v1569, %v1655
      %1657 = vmatmul.bf16.gmra.mxu0 %v1539
      %v1658 = vpop.f32.mrf.mxu0
      %v1659 = vadd.f32 %v1569, %v1658
      %v1660 = vpop.f32.mrf.mxu0
      %v1661 = vadd.f32 %v1569, %v1660
      %1662 = vmatmul.bf16.gmra.mxu0 %v1540
      %v1663 = vpop.f32.mrf.mxu0
      %v1664 = vadd.f32 %v1569, %v1663
      %v1665 = vpop.f32.mrf.mxu0
      %v1666 = vadd.f32 %v1569, %v1665
      %1667 = vmatmul.bf16.gmra.mxu0 %v1541
      %v1668 = vpop.f32.mrf.mxu0
      %v1669 = vadd.f32 %v1569, %v1668
      %v1670 = vpop.f32.mrf.mxu0
      %v1671 = vadd.f32 %v1569, %v1670
      %1672 = vmatmul.bf16.gmra.mxu0 %v1542
      %v1673 = vpop.f32.mrf.mxu0
      %v1674 = vadd.f32 %v1569, %v1673
      %v1675 = vpop.f32.mrf.mxu0
      %v1676 = vadd.f32 %v1569, %v1675
      %1677 = vmatmul.bf16.gmra.mxu0 %v1543
      %v1678 = vpop.f32.mrf.mxu0
      %v1679 = vadd.f32 %v1569, %v1678
      %v1680 = vpop.f32.mrf.mxu0
      %v1681 = vadd.f32 %v1569, %v1680
      %1682 = vmatmul.bf16.gmra.mxu0 %v1544
      %v1683 = vpop.f32.mrf.mxu0
      %v1684 = vadd.f32 %v1569, %v1683
      %v1685 = vpop.f32.mrf.mxu0
      %v1686 = vadd.f32 %v1569, %v1685
      %1687 = vmatmul.bf16.gmra.mxu0 %v1545
      %v1688 = vpop.f32.mrf.mxu0
      %v1689 = vadd.f32 %v1569, %v1688
      %v1690 = vpop.f32.mrf.mxu0
      %v1691 = vadd.f32 %v1569, %v1690
      %1692 = vmatmul.bf16.gmra.mxu0 %v1546
      %v1693 = vpop.f32.mrf.mxu0
      %v1694 = vadd.f32 %v1569, %v1693
      %v1695 = vpop.f32.mrf.mxu0
      %v1696 = vadd.f32 %v1569, %v1695
      %1697 = vmatmul.bf16.gmra.mxu0 %v1547
      %v1698 = vpop.f32.mrf.mxu0
      %v1699 = vadd.f32 %v1569, %v1698
      %v1700 = vpop.f32.mrf.mxu0
      %v1701 = vadd.f32 %v1569, %v1700
      %1702 = vmatmul.bf16.gmra.mxu0 %v1548
      %v1703 = vpop.f32.mrf.mxu0
      %v1704 = vadd.f32 %v1569, %v1703
      %v1705 = vpop.f32.mrf.mxu0
      %v1706 = vadd.f32 %v1569, %v1705
      %1707 = vdwg.mxu0
      %vm1708 = vcmp.gt.f32.partialorder %v1629, 0.0
      %vm1709 = vcmp.gt.f32.partialorder %v1631, 0.0
      %vm1710 = vcmp.gt.f32.partialorder %v1634, 0.0
      %vm1711 = vcmp.gt.f32.partialorder %v1636, 0.0
      %vm1712 = vcmp.gt.f32.partialorder %v1639, 0.0
      %vm1713 = vcmp.gt.f32.partialorder %v1641, 0.0
      %vm1714 = vcmp.gt.f32.partialorder %v1644, 0.0
      %vm1715 = vcmp.gt.f32.partialorder %v1646, 0.0
      %vm1716 = vcmp.gt.f32.partialorder %v1649, 0.0
      %vm1717 = vcmp.gt.f32.partialorder %v1651, 0.0
      %vm1718 = vcmp.gt.f32.partialorder %v1654, 0.0
      %vm1719 = vcmp.gt.f32.partialorder %v1656, 0.0
      %vm1720 = vcmp.gt.f32.partialorder %v1659, 0.0
      %vm1721 = vcmp.gt.f32.partialorder %v1661, 0.0
      %vm1722 = vcmp.gt.f32.partialorder %v1664, 0.0
      %vm1723 = vcmp.gt.f32.partialorder %v1666, 0.0
      %vm1724 = vcmp.gt.f32.partialorder %v1669, 0.0
      %vm1725 = vcmp.gt.f32.partialorder %v1671, 0.0
      %vm1726 = vcmp.gt.f32.partialorder %v1674, 0.0
      %vm1727 = vcmp.gt.f32.partialorder %v1676, 0.0
      %vm1728 = vcmp.gt.f32.partialorder %v1679, 0.0
      %vm1729 = vcmp.gt.f32.partialorder %v1681, 0.0
      %vm1730 = vcmp.gt.f32.partialorder %v1684, 0.0
      %vm1731 = vcmp.gt.f32.partialorder %v1686, 0.0
      %vm1732 = vcmp.gt.f32.partialorder %v1689, 0.0
      %vm1733 = vcmp.gt.f32.partialorder %v1691, 0.0
      %vm1734 = vcmp.gt.f32.partialorder %v1694, 0.0
      %vm1735 = vcmp.gt.f32.partialorder %v1696, 0.0
      %vm1736 = vcmp.gt.f32.partialorder %v1699, 0.0
      %vm1737 = vcmp.gt.f32.partialorder %v1701, 0.0
      %vm1738 = vcmp.gt.f32.partialorder %v1704, 0.0
      %vm1739 = vcmp.gt.f32.partialorder %v1706, 0.0
      %v1740 = vmul.f32 %v1629, 0.01
      %v1741 = vmul.f32 %v1631, 0.01
      %v1742 = vmul.f32 %v1634, 0.01
      %v1743 = vmul.f32 %v1636, 0.01
      %v1744 = vmul.f32 %v1639, 0.01
      %v1745 = vmul.f32 %v1641, 0.01
      %v1746 = vmul.f32 %v1644, 0.01
      %v1747 = vmul.f32 %v1646, 0.01
      %v1748 = vmul.f32 %v1649, 0.01
      %v1749 = vmul.f32 %v1651, 0.01
      %v1750 = vmul.f32 %v1654, 0.01
      %v1751 = vmul.f32 %v1656, 0.01
      %v1752 = vmul.f32 %v1659, 0.01
      %v1753 = vmul.f32 %v1661, 0.01
      %v1754 = vmul.f32 %v1664, 0.01
      %v1755 = vmul.f32 %v1666, 0.01
      %v1756 = vmul.f32 %v1669, 0.01
      %v1757 = vmul.f32 %v1671, 0.01
      %v1758 = vmul.f32 %v1674, 0.01
      %v1759 = vmul.f32 %v1676, 0.01
      %v1760 = vmul.f32 %v1679, 0.01
      %v1761 = vmul.f32 %v1681, 0.01
      %v1762 = vmul.f32 %v1684, 0.01
      %v1763 = vmul.f32 %v1686, 0.01
      %v1764 = vmul.f32 %v1689, 0.01
      %v1765 = vmul.f32 %v1691, 0.01
      %v1766 = vmul.f32 %v1694, 0.01
      %v1767 = vmul.f32 %v1696, 0.01
      %v1768 = vmul.f32 %v1699, 0.01
      %v1769 = vmul.f32 %v1701, 0.01
      %v1770 = vmul.f32 %v1704, 0.01
      %v1771 = vmul.f32 %v1706, 0.01
      %v1772 = vsel %vm1708, %v1629, %v1740
      %v1773 = vsel %vm1709, %v1631, %v1741
      %v1774 = vsel %vm1710, %v1634, %v1742
      %v1775 = vsel %vm1711, %v1636, %v1743
      %v1776 = vsel %vm1712, %v1639, %v1744
      %v1777 = vsel %vm1713, %v1641, %v1745
      %v1778 = vsel %vm1714, %v1644, %v1746
      %v1779 = vsel %vm1715, %v1646, %v1747
      %v1780 = vsel %vm1716, %v1649, %v1748
      %v1781 = vsel %vm1717, %v1651, %v1749
      %v1782 = vsel %vm1718, %v1654, %v1750
      %v1783 = vsel %vm1719, %v1656, %v1751
      %v1784 = vsel %vm1720, %v1659, %v1752
      %v1785 = vsel %vm1721, %v1661, %v1753
      %v1786 = vsel %vm1722, %v1664, %v1754
      %v1787 = vsel %vm1723, %v1666, %v1755
      %v1788 = vsel %vm1724, %v1669, %v1756
      %v1789 = vsel %vm1725, %v1671, %v1757
      %v1790 = vsel %vm1726, %v1674, %v1758
      %v1791 = vsel %vm1727, %v1676, %v1759
      %v1792 = vsel %vm1728, %v1679, %v1760
      %v1793 = vsel %vm1729, %v1681, %v1761
      %v1794 = vsel %vm1730, %v1684, %v1762
      %v1795 = vsel %vm1731, %v1686, %v1763
      %v1796 = vsel %vm1732, %v1689, %v1764
      %v1797 = vsel %vm1733, %v1691, %v1765
      %v1798 = vsel %vm1734, %v1694, %v1766
      %v1799 = vsel %vm1735, %v1696, %v1767
      %v1800 = vsel %vm1736, %v1699, %v1768
      %v1801 = vsel %vm1737, %v1701, %v1769
      %v1802 = vsel %vm1738, %v1704, %v1770
      %v1803 = vsel %vm1739, %v1706, %v1771
      %v1804 = vpack.c.bf16 %v1773, %v1772
      %v1805 = vpack.c.bf16 %v1775, %v1774
      %v1806 = vpack.c.bf16 %v1777, %v1776
      %v1807 = vpack.c.bf16 %v1779, %v1778
      %v1808 = vpack.c.bf16 %v1781, %v1780
      %v1809 = vpack.c.bf16 %v1783, %v1782
      %v1810 = vpack.c.bf16 %v1785, %v1784
      %v1811 = vpack.c.bf16 %v1787, %v1786
      %v1812 = vpack.c.bf16 %v1789, %v1788
      %v1813 = vpack.c.bf16 %v1791, %v1790
      %v1814 = vpack.c.bf16 %v1793, %v1792
      %v1815 = vpack.c.bf16 %v1795, %v1794
      %v1816 = vpack.c.bf16 %v1797, %v1796
      %v1817 = vpack.c.bf16 %v1799, %v1798
      %v1818 = vpack.c.bf16 %v1801, %v1800
      %v1819 = vpack.c.bf16 %v1803, %v1802
      %s1820 = scalar_lea.vmem %s3, 320
      %v1821 = vld [vmem:[%s1820] sm:$0xf]
      %v1822 = vld [vmem:[%s1820 + $0x4] sm:$0xf]
      %v1823 = vld [vmem:[%s1820 + $0x8] sm:$0xf]
      %v1824 = vld [vmem:[%s1820 + $0xc] sm:$0xf]
      %v1825 = vld [vmem:[%s1820 + $0x10] sm:$0xf]
      %v1826 = vld [vmem:[%s1820 + $0x14] sm:$0xf]
      %v1827 = vld [vmem:[%s1820 + $0x18] sm:$0xf]
      %v1828 = vld [vmem:[%s1820 + $0x1c] sm:$0xf]
      %v1829 = vld [vmem:[%s1820 + $0x20] sm:$0xf]
      %v1830 = vld [vmem:[%s1820 + $0x24] sm:$0xf]
      %v1831 = vld [vmem:[%s1820 + $0x28] sm:$0xf]
      %v1832 = vld [vmem:[%s1820 + $0x2c] sm:$0xf]
      %v1833 = vld [vmem:[%s1820 + $0x30] sm:$0xf]
      %v1834 = vld [vmem:[%s1820 + $0x34] sm:$0xf]
      %v1835 = vld [vmem:[%s1820 + $0x38] sm:$0xf]
      %v1836 = vld [vmem:[%s1820 + $0x3c] sm:$0xf]
      %s1837 = scalar_lea.vmem %s4, 5
      %v1838 = vld [vmem:[%s1837] sm:$0x1]
      %v1840 = vperm.slane %v1838, 0
      %v1858 = vunpack.c.l.b16 %v1821
      %v1859 = vunpack.c.l.b16 %v1822
      %v1860 = vunpack.c.l.b16 %v1823
      %v1861 = vunpack.c.l.b16 %v1824
      %v1862 = vunpack.c.l.b16 %v1825
      %v1863 = vunpack.c.l.b16 %v1826
      %v1864 = vunpack.c.l.b16 %v1827
      %v1865 = vunpack.c.l.b16 %v1828
      %v1866 = vunpack.c.l.b16 %v1829
      %v1867 = vunpack.c.l.b16 %v1830
      %v1868 = vunpack.c.l.b16 %v1831
      %v1869 = vunpack.c.l.b16 %v1832
      %v1870 = vunpack.c.l.b16 %v1833
      %v1871 = vunpack.c.l.b16 %v1834
      %v1872 = vunpack.c.l.b16 %v1835
      %v1873 = vunpack.c.l.b16 %v1836
      %v1874 = vpack.c.b16 %v1859, %v1858
      %v1875 = vpack.c.b16 %v1861, %v1860
      %v1876 = vpack.c.b16 %v1863, %v1862
      %v1877 = vpack.c.b16 %v1865, %v1864
      %v1878 = vpack.c.b16 %v1867, %v1866
      %v1879 = vpack.c.b16 %v1869, %v1868
      %v1880 = vpack.c.b16 %v1871, %v1870
      %v1881 = vpack.c.b16 %v1873, %v1872
      %1890 = vmatpush.bf16.msra.mxu0 %v1881
      %1891 = vmatpush.bf16.msra.mxu0 %v1880
      %1892 = vmatpush.bf16.msra.mxu0 %v1879
      %1893 = vmatpush.bf16.msra.mxu0 %v1878
      %1894 = vmatpush.bf16.msra.mxu0 %v1877
      %1895 = vmatpush.bf16.msra.mxu0 %v1876
      %1896 = vmatpush.bf16.msra.mxu0 %v1875
      %1897 = vmatpush.bf16.msra.mxu0 %v1874
      %1898 = vmatmul.bf16.gmra.mxu0 %v1804
      %v1899 = vpop.f32.mrf.mxu0
      %v1900 = vadd.f32 %v1840, %v1899
      %v1901 = vpop.f32.mrf.mxu0
      %v1902 = vadd.f32 %v1840, %v1901
      %1903 = vmatmul.bf16.gmra.mxu0 %v1805
      %v1904 = vpop.f32.mrf.mxu0
      %v1905 = vadd.f32 %v1840, %v1904
      %v1906 = vpop.f32.mrf.mxu0
      %v1907 = vadd.f32 %v1840, %v1906
      %1908 = vmatmul.bf16.gmra.mxu0 %v1806
      %v1909 = vpop.f32.mrf.mxu0
      %v1910 = vadd.f32 %v1840, %v1909
      %v1911 = vpop.f32.mrf.mxu0
      %v1912 = vadd.f32 %v1840, %v1911
      %1913 = vmatmul.bf16.gmra.mxu0 %v1807
      %v1914 = vpop.f32.mrf.mxu0
      %v1915 = vadd.f32 %v1840, %v1914
      %v1916 = vpop.f32.mrf.mxu0
      %v1917 = vadd.f32 %v1840, %v1916
      %1918 = vmatmul.bf16.gmra.mxu0 %v1808
      %v1919 = vpop.f32.mrf.mxu0
      %v1920 = vadd.f32 %v1840, %v1919
      %v1921 = vpop.f32.mrf.mxu0
      %v1922 = vadd.f32 %v1840, %v1921
      %1923 = vmatmul.bf16.gmra.mxu0 %v1809
      %v1924 = vpop.f32.mrf.mxu0
      %v1925 = vadd.f32 %v1840, %v1924
      %v1926 = vpop.f32.mrf.mxu0
      %v1927 = vadd.f32 %v1840, %v1926
      %1928 = vmatmul.bf16.gmra.mxu0 %v1810
      %v1929 = vpop.f32.mrf.mxu0
      %v1930 = vadd.f32 %v1840, %v1929
      %v1931 = vpop.f32.mrf.mxu0
      %v1932 = vadd.f32 %v1840, %v1931
      %1933 = vmatmul.bf16.gmra.mxu0 %v1811
      %v1934 = vpop.f32.mrf.mxu0
      %v1935 = vadd.f32 %v1840, %v1934
      %v1936 = vpop.f32.mrf.mxu0
      %v1937 = vadd.f32 %v1840, %v1936
      %1938 = vmatmul.bf16.gmra.mxu0 %v1812
      %v1939 = vpop.f32.mrf.mxu0
      %v1940 = vadd.f32 %v1840, %v1939
      %v1941 = vpop.f32.mrf.mxu0
      %v1942 = vadd.f32 %v1840, %v1941
      %1943 = vmatmul.bf16.gmra.mxu0 %v1813
      %v1944 = vpop.f32.mrf.mxu0
      %v1945 = vadd.f32 %v1840, %v1944
      %v1946 = vpop.f32.mrf.mxu0
      %v1947 = vadd.f32 %v1840, %v1946
      %1948 = vmatmul.bf16.gmra.mxu0 %v1814
      %v1949 = vpop.f32.mrf.mxu0
      %v1950 = vadd.f32 %v1840, %v1949
      %v1951 = vpop.f32.mrf.mxu0
      %v1952 = vadd.f32 %v1840, %v1951
      %1953 = vmatmul.bf16.gmra.mxu0 %v1815
      %v1954 = vpop.f32.mrf.mxu0
      %v1955 = vadd.f32 %v1840, %v1954
      %v1956 = vpop.f32.mrf.mxu0
      %v1957 = vadd.f32 %v1840, %v1956
      %1958 = vmatmul.bf16.gmra.mxu0 %v1816
      %v1959 = vpop.f32.mrf.mxu0
      %v1960 = vadd.f32 %v1840, %v1959
      %v1961 = vpop.f32.mrf.mxu0
      %v1962 = vadd.f32 %v1840, %v1961
      %1963 = vmatmul.bf16.gmra.mxu0 %v1817
      %v1964 = vpop.f32.mrf.mxu0
      %v1965 = vadd.f32 %v1840, %v1964
      %v1966 = vpop.f32.mrf.mxu0
      %v1967 = vadd.f32 %v1840, %v1966
      %1968 = vmatmul.bf16.gmra.mxu0 %v1818
      %v1969 = vpop.f32.mrf.mxu0
      %v1970 = vadd.f32 %v1840, %v1969
      %v1971 = vpop.f32.mrf.mxu0
      %v1972 = vadd.f32 %v1840, %v1971
      %1973 = vmatmul.bf16.gmra.mxu0 %v1819
      %v1974 = vpop.f32.mrf.mxu0
      %v1975 = vadd.f32 %v1840, %v1974
      %v1976 = vpop.f32.mrf.mxu0
      %v1977 = vadd.f32 %v1840, %v1976
      %1978 = vdwg.mxu0
      %vm1979 = vcmp.gt.f32.partialorder %v1900, 0.0
      %vm1980 = vcmp.gt.f32.partialorder %v1902, 0.0
      %vm1981 = vcmp.gt.f32.partialorder %v1905, 0.0
      %vm1982 = vcmp.gt.f32.partialorder %v1907, 0.0
      %vm1983 = vcmp.gt.f32.partialorder %v1910, 0.0
      %vm1984 = vcmp.gt.f32.partialorder %v1912, 0.0
      %vm1985 = vcmp.gt.f32.partialorder %v1915, 0.0
      %vm1986 = vcmp.gt.f32.partialorder %v1917, 0.0
      %vm1987 = vcmp.gt.f32.partialorder %v1920, 0.0
      %vm1988 = vcmp.gt.f32.partialorder %v1922, 0.0
      %vm1989 = vcmp.gt.f32.partialorder %v1925, 0.0
      %vm1990 = vcmp.gt.f32.partialorder %v1927, 0.0
      %vm1991 = vcmp.gt.f32.partialorder %v1930, 0.0
      %vm1992 = vcmp.gt.f32.partialorder %v1932, 0.0
      %vm1993 = vcmp.gt.f32.partialorder %v1935, 0.0
      %vm1994 = vcmp.gt.f32.partialorder %v1937, 0.0
      %vm1995 = vcmp.gt.f32.partialorder %v1940, 0.0
      %vm1996 = vcmp.gt.f32.partialorder %v1942, 0.0
      %vm1997 = vcmp.gt.f32.partialorder %v1945, 0.0
      %vm1998 = vcmp.gt.f32.partialorder %v1947, 0.0
      %vm1999 = vcmp.gt.f32.partialorder %v1950, 0.0
      %vm2000 = vcmp.gt.f32.partialorder %v1952, 0.0
      %vm2001 = vcmp.gt.f32.partialorder %v1955, 0.0
      %vm2002 = vcmp.gt.f32.partialorder %v1957, 0.0
      %vm2003 = vcmp.gt.f32.partialorder %v1960, 0.0
      %vm2004 = vcmp.gt.f32.partialorder %v1962, 0.0
      %vm2005 = vcmp.gt.f32.partialorder %v1965, 0.0
      %vm2006 = vcmp.gt.f32.partialorder %v1967, 0.0
      %vm2007 = vcmp.gt.f32.partialorder %v1970, 0.0
      %vm2008 = vcmp.gt.f32.partialorder %v1972, 0.0
      %vm2009 = vcmp.gt.f32.partialorder %v1975, 0.0
      %vm2010 = vcmp.gt.f32.partialorder %v1977, 0.0
      %v2011 = vmul.f32 %v1900, 0.01
      %v2012 = vmul.f32 %v1902, 0.01
      %v2013 = vmul.f32 %v1905, 0.01
      %v2014 = vmul.f32 %v1907, 0.01
      %v2015 = vmul.f32 %v1910, 0.01
      %v2016 = vmul.f32 %v1912, 0.01
      %v2017 = vmul.f32 %v1915, 0.01
      %v2018 = vmul.f32 %v1917, 0.01
      %v2019 = vmul.f32 %v1920, 0.01
      %v2020 = vmul.f32 %v1922, 0.01
      %v2021 = vmul.f32 %v1925, 0.01
      %v2022 = vmul.f32 %v1927, 0.01
      %v2023 = vmul.f32 %v1930, 0.01
      %v2024 = vmul.f32 %v1932, 0.01
      %v2025 = vmul.f32 %v1935, 0.01
      %v2026 = vmul.f32 %v1937, 0.01
      %v2027 = vmul.f32 %v1940, 0.01
      %v2028 = vmul.f32 %v1942, 0.01
      %v2029 = vmul.f32 %v1945, 0.01
      %v2030 = vmul.f32 %v1947, 0.01
      %v2031 = vmul.f32 %v1950, 0.01
      %v2032 = vmul.f32 %v1952, 0.01
      %v2033 = vmul.f32 %v1955, 0.01
      %v2034 = vmul.f32 %v1957, 0.01
      %v2035 = vmul.f32 %v1960, 0.01
      %v2036 = vmul.f32 %v1962, 0.01
      %v2037 = vmul.f32 %v1965, 0.01
      %v2038 = vmul.f32 %v1967, 0.01
      %v2039 = vmul.f32 %v1970, 0.01
      %v2040 = vmul.f32 %v1972, 0.01
      %v2041 = vmul.f32 %v1975, 0.01
      %v2042 = vmul.f32 %v1977, 0.01
      %v2043 = vsel %vm1979, %v1900, %v2011
      %v2044 = vsel %vm1980, %v1902, %v2012
      %v2045 = vsel %vm1981, %v1905, %v2013
      %v2046 = vsel %vm1982, %v1907, %v2014
      %v2047 = vsel %vm1983, %v1910, %v2015
      %v2048 = vsel %vm1984, %v1912, %v2016
      %v2049 = vsel %vm1985, %v1915, %v2017
      %v2050 = vsel %vm1986, %v1917, %v2018
      %v2051 = vsel %vm1987, %v1920, %v2019
      %v2052 = vsel %vm1988, %v1922, %v2020
      %v2053 = vsel %vm1989, %v1925, %v2021
      %v2054 = vsel %vm1990, %v1927, %v2022
      %v2055 = vsel %vm1991, %v1930, %v2023
      %v2056 = vsel %vm1992, %v1932, %v2024
      %v2057 = vsel %vm1993, %v1935, %v2025
      %v2058 = vsel %vm1994, %v1937, %v2026
      %v2059 = vsel %vm1995, %v1940, %v2027
      %v2060 = vsel %vm1996, %v1942, %v2028
      %v2061 = vsel %vm1997, %v1945, %v2029
      %v2062 = vsel %vm1998, %v1947, %v2030
      %v2063 = vsel %vm1999, %v1950, %v2031
      %v2064 = vsel %vm2000, %v1952, %v2032
      %v2065 = vsel %vm2001, %v1955, %v2033
      %v2066 = vsel %vm2002, %v1957, %v2034
      %v2067 = vsel %vm2003, %v1960, %v2035
      %v2068 = vsel %vm2004, %v1962, %v2036
      %v2069 = vsel %vm2005, %v1965, %v2037
      %v2070 = vsel %vm2006, %v1967, %v2038
      %v2071 = vsel %vm2007, %v1970, %v2039
      %v2072 = vsel %vm2008, %v1972, %v2040
      %v2073 = vsel %vm2009, %v1975, %v2041
      %v2074 = vsel %vm2010, %v1977, %v2042
      %v2075 = vpack.c.bf16 %v2044, %v2043
      %v2076 = vpack.c.bf16 %v2046, %v2045
      %v2077 = vpack.c.bf16 %v2048, %v2047
      %v2078 = vpack.c.bf16 %v2050, %v2049
      %v2079 = vpack.c.bf16 %v2052, %v2051
      %v2080 = vpack.c.bf16 %v2054, %v2053
      %v2081 = vpack.c.bf16 %v2056, %v2055
      %v2082 = vpack.c.bf16 %v2058, %v2057
      %v2083 = vpack.c.bf16 %v2060, %v2059
      %v2084 = vpack.c.bf16 %v2062, %v2061
      %v2085 = vpack.c.bf16 %v2064, %v2063
      %v2086 = vpack.c.bf16 %v2066, %v2065
      %v2087 = vpack.c.bf16 %v2068, %v2067
      %v2088 = vpack.c.bf16 %v2070, %v2069
      %v2089 = vpack.c.bf16 %v2072, %v2071
      %v2090 = vpack.c.bf16 %v2074, %v2073
      %s2091 = scalar_lea.vmem %s3, 384
      %v2092 = vld [vmem:[%s2091] sm:$0xf]
      %v2093 = vld [vmem:[%s2091 + $0x4] sm:$0xf]
      %v2094 = vld [vmem:[%s2091 + $0x8] sm:$0xf]
      %v2095 = vld [vmem:[%s2091 + $0xc] sm:$0xf]
      %v2096 = vld [vmem:[%s2091 + $0x10] sm:$0xf]
      %v2097 = vld [vmem:[%s2091 + $0x14] sm:$0xf]
      %v2098 = vld [vmem:[%s2091 + $0x18] sm:$0xf]
      %v2099 = vld [vmem:[%s2091 + $0x1c] sm:$0xf]
      %v2100 = vld [vmem:[%s2091 + $0x20] sm:$0xf]
      %v2101 = vld [vmem:[%s2091 + $0x24] sm:$0xf]
      %v2102 = vld [vmem:[%s2091 + $0x28] sm:$0xf]
      %v2103 = vld [vmem:[%s2091 + $0x2c] sm:$0xf]
      %v2104 = vld [vmem:[%s2091 + $0x30] sm:$0xf]
      %v2105 = vld [vmem:[%s2091 + $0x34] sm:$0xf]
      %v2106 = vld [vmem:[%s2091 + $0x38] sm:$0xf]
      %v2107 = vld [vmem:[%s2091 + $0x3c] sm:$0xf]
      %s2108 = scalar_lea.vmem %s4, 6
      %v2109 = vld [vmem:[%s2108] sm:$0x1]
      %v2111 = vperm.slane %v2109, 0
      %v2129 = vunpack.c.l.b16 %v2092
      %v2130 = vunpack.c.l.b16 %v2093
      %v2131 = vunpack.c.l.b16 %v2094
      %v2132 = vunpack.c.l.b16 %v2095
      %v2133 = vunpack.c.l.b16 %v2096
      %v2134 = vunpack.c.l.b16 %v2097
      %v2135 = vunpack.c.l.b16 %v2098
      %v2136 = vunpack.c.l.b16 %v2099
      %v2137 = vunpack.c.l.b16 %v2100
      %v2138 = vunpack.c.l.b16 %v2101
      %v2139 = vunpack.c.l.b16 %v2102
      %v2140 = vunpack.c.l.b16 %v2103
      %v2141 = vunpack.c.l.b16 %v2104
      %v2142 = vunpack.c.l.b16 %v2105
      %v2143 = vunpack.c.l.b16 %v2106
      %v2144 = vunpack.c.l.b16 %v2107
      %v2145 = vpack.c.b16 %v2130, %v2129
      %v2146 = vpack.c.b16 %v2132, %v2131
      %v2147 = vpack.c.b16 %v2134, %v2133
      %v2148 = vpack.c.b16 %v2136, %v2135
      %v2149 = vpack.c.b16 %v2138, %v2137
      %v2150 = vpack.c.b16 %v2140, %v2139
      %v2151 = vpack.c.b16 %v2142, %v2141
      %v2152 = vpack.c.b16 %v2144, %v2143
      %2161 = vmatpush.bf16.msra.mxu0 %v2152
      %2162 = vmatpush.bf16.msra.mxu0 %v2151
      %2163 = vmatpush.bf16.msra.mxu0 %v2150
      %2164 = vmatpush.bf16.msra.mxu0 %v2149
      %2165 = vmatpush.bf16.msra.mxu0 %v2148
      %2166 = vmatpush.bf16.msra.mxu0 %v2147
      %2167 = vmatpush.bf16.msra.mxu0 %v2146
      %2168 = vmatpush.bf16.msra.mxu0 %v2145
      %2169 = vmatmul.bf16.gmra.mxu0 %v2075
      %v2170 = vpop.f32.mrf.mxu0
      %v2171 = vadd.f32 %v2111, %v2170
      %v2172 = vpop.f32.mrf.mxu0
      %v2173 = vadd.f32 %v2111, %v2172
      %2174 = vmatmul.bf16.gmra.mxu0 %v2076
      %v2175 = vpop.f32.mrf.mxu0
      %v2176 = vadd.f32 %v2111, %v2175
      %v2177 = vpop.f32.mrf.mxu0
      %v2178 = vadd.f32 %v2111, %v2177
      %2179 = vmatmul.bf16.gmra.mxu0 %v2077
      %v2180 = vpop.f32.mrf.mxu0
      %v2181 = vadd.f32 %v2111, %v2180
      %v2182 = vpop.f32.mrf.mxu0
      %v2183 = vadd.f32 %v2111, %v2182
      %2184 = vmatmul.bf16.gmra.mxu0 %v2078
      %v2185 = vpop.f32.mrf.mxu0
      %v2186 = vadd.f32 %v2111, %v2185
      %v2187 = vpop.f32.mrf.mxu0
      %v2188 = vadd.f32 %v2111, %v2187
      %2189 = vmatmul.bf16.gmra.mxu0 %v2079
      %v2190 = vpop.f32.mrf.mxu0
      %v2191 = vadd.f32 %v2111, %v2190
      %v2192 = vpop.f32.mrf.mxu0
      %v2193 = vadd.f32 %v2111, %v2192
      %2194 = vmatmul.bf16.gmra.mxu0 %v2080
      %v2195 = vpop.f32.mrf.mxu0
      %v2196 = vadd.f32 %v2111, %v2195
      %v2197 = vpop.f32.mrf.mxu0
      %v2198 = vadd.f32 %v2111, %v2197
      %2199 = vmatmul.bf16.gmra.mxu0 %v2081
      %v2200 = vpop.f32.mrf.mxu0
      %v2201 = vadd.f32 %v2111, %v2200
      %v2202 = vpop.f32.mrf.mxu0
      %v2203 = vadd.f32 %v2111, %v2202
      %2204 = vmatmul.bf16.gmra.mxu0 %v2082
      %v2205 = vpop.f32.mrf.mxu0
      %v2206 = vadd.f32 %v2111, %v2205
      %v2207 = vpop.f32.mrf.mxu0
      %v2208 = vadd.f32 %v2111, %v2207
      %2209 = vmatmul.bf16.gmra.mxu0 %v2083
      %v2210 = vpop.f32.mrf.mxu0
      %v2211 = vadd.f32 %v2111, %v2210
      %v2212 = vpop.f32.mrf.mxu0
      %v2213 = vadd.f32 %v2111, %v2212
      %2214 = vmatmul.bf16.gmra.mxu0 %v2084
      %v2215 = vpop.f32.mrf.mxu0
      %v2216 = vadd.f32 %v2111, %v2215
      %v2217 = vpop.f32.mrf.mxu0
      %v2218 = vadd.f32 %v2111, %v2217
      %2219 = vmatmul.bf16.gmra.mxu0 %v2085
      %v2220 = vpop.f32.mrf.mxu0
      %v2221 = vadd.f32 %v2111, %v2220
      %v2222 = vpop.f32.mrf.mxu0
      %v2223 = vadd.f32 %v2111, %v2222
      %2224 = vmatmul.bf16.gmra.mxu0 %v2086
      %v2225 = vpop.f32.mrf.mxu0
      %v2226 = vadd.f32 %v2111, %v2225
      %v2227 = vpop.f32.mrf.mxu0
      %v2228 = vadd.f32 %v2111, %v2227
      %2229 = vmatmul.bf16.gmra.mxu0 %v2087
      %v2230 = vpop.f32.mrf.mxu0
      %v2231 = vadd.f32 %v2111, %v2230
      %v2232 = vpop.f32.mrf.mxu0
      %v2233 = vadd.f32 %v2111, %v2232
      %2234 = vmatmul.bf16.gmra.mxu0 %v2088
      %v2235 = vpop.f32.mrf.mxu0
      %v2236 = vadd.f32 %v2111, %v2235
      %v2237 = vpop.f32.mrf.mxu0
      %v2238 = vadd.f32 %v2111, %v2237
      %2239 = vmatmul.bf16.gmra.mxu0 %v2089
      %v2240 = vpop.f32.mrf.mxu0
      %v2241 = vadd.f32 %v2111, %v2240
      %v2242 = vpop.f32.mrf.mxu0
      %v2243 = vadd.f32 %v2111, %v2242
      %2244 = vmatmul.bf16.gmra.mxu0 %v2090
      %v2245 = vpop.f32.mrf.mxu0
      %v2246 = vadd.f32 %v2111, %v2245
      %v2247 = vpop.f32.mrf.mxu0
      %v2248 = vadd.f32 %v2111, %v2247
      %2249 = vdwg.mxu0
      %s2250 = scalar_lea.vmem %s3, 448
      %v2251 = vld [vmem:[%s2250] sm:$0xf]
      %v2252 = vld [vmem:[%s2250 + $0x4] sm:$0xf]
      %v2253 = vld [vmem:[%s2250 + $0x8] sm:$0xf]
      %v2254 = vld [vmem:[%s2250 + $0xc] sm:$0xf]
      %v2255 = vld [vmem:[%s2250 + $0x10] sm:$0xf]
      %v2256 = vld [vmem:[%s2250 + $0x14] sm:$0xf]
      %v2257 = vld [vmem:[%s2250 + $0x18] sm:$0xf]
      %v2258 = vld [vmem:[%s2250 + $0x1c] sm:$0xf]
      %v2259 = vld [vmem:[%s2250 + $0x20] sm:$0xf]
      %v2260 = vld [vmem:[%s2250 + $0x24] sm:$0xf]
      %v2261 = vld [vmem:[%s2250 + $0x28] sm:$0xf]
      %v2262 = vld [vmem:[%s2250 + $0x2c] sm:$0xf]
      %v2263 = vld [vmem:[%s2250 + $0x30] sm:$0xf]
      %v2264 = vld [vmem:[%s2250 + $0x34] sm:$0xf]
      %v2265 = vld [vmem:[%s2250 + $0x38] sm:$0xf]
      %v2266 = vld [vmem:[%s2250 + $0x3c] sm:$0xf]
      %s2267 = scalar_lea.vmem %s4, 7
      %v2268 = vld [vmem:[%s2267] sm:$0x1]
      %v2270 = vperm.slane %v2268, 0
      %v2288 = vunpack.c.l.b16 %v2251
      %v2289 = vunpack.c.l.b16 %v2252
      %v2290 = vunpack.c.l.b16 %v2253
      %v2291 = vunpack.c.l.b16 %v2254
      %v2292 = vunpack.c.l.b16 %v2255
      %v2293 = vunpack.c.l.b16 %v2256
      %v2294 = vunpack.c.l.b16 %v2257
      %v2295 = vunpack.c.l.b16 %v2258
      %v2296 = vunpack.c.l.b16 %v2259
      %v2297 = vunpack.c.l.b16 %v2260
      %v2298 = vunpack.c.l.b16 %v2261
      %v2299 = vunpack.c.l.b16 %v2262
      %v2300 = vunpack.c.l.b16 %v2263
      %v2301 = vunpack.c.l.b16 %v2264
      %v2302 = vunpack.c.l.b16 %v2265
      %v2303 = vunpack.c.l.b16 %v2266
      %v2304 = vpack.c.b16 %v2289, %v2288
      %v2305 = vpack.c.b16 %v2291, %v2290
      %v2306 = vpack.c.b16 %v2293, %v2292
      %v2307 = vpack.c.b16 %v2295, %v2294
      %v2308 = vpack.c.b16 %v2297, %v2296
      %v2309 = vpack.c.b16 %v2299, %v2298
      %v2310 = vpack.c.b16 %v2301, %v2300
      %v2311 = vpack.c.b16 %v2303, %v2302
      %2320 = vmatpush.bf16.msra.mxu0 %v2311
      %2321 = vmatpush.bf16.msra.mxu0 %v2310
      %2322 = vmatpush.bf16.msra.mxu0 %v2309
      %2323 = vmatpush.bf16.msra.mxu0 %v2308
      %2324 = vmatpush.bf16.msra.mxu0 %v2307
      %2325 = vmatpush.bf16.msra.mxu0 %v2306
      %2326 = vmatpush.bf16.msra.mxu0 %v2305
      %2327 = vmatpush.bf16.msra.mxu0 %v2304
      %2328 = vmatmul.bf16.gmra.mxu0 %v1533
      %v2329 = vpop.f32.mrf.mxu0
      %v2330 = vadd.f32 %v2270, %v2329
      %v2331 = vpop.f32.mrf.mxu0
      %v2332 = vadd.f32 %v2270, %v2331
      %2333 = vmatmul.bf16.gmra.mxu0 %v1534
      %v2334 = vpop.f32.mrf.mxu0
      %v2335 = vadd.f32 %v2270, %v2334
      %v2336 = vpop.f32.mrf.mxu0
      %v2337 = vadd.f32 %v2270, %v2336
      %2338 = vmatmul.bf16.gmra.mxu0 %v1535
      %v2339 = vpop.f32.mrf.mxu0
      %v2340 = vadd.f32 %v2270, %v2339
      %v2341 = vpop.f32.mrf.mxu0
      %v2342 = vadd.f32 %v2270, %v2341
      %2343 = vmatmul.bf16.gmra.mxu0 %v1536
      %v2344 = vpop.f32.mrf.mxu0
      %v2345 = vadd.f32 %v2270, %v2344
      %v2346 = vpop.f32.mrf.mxu0
      %v2347 = vadd.f32 %v2270, %v2346
      %2348 = vmatmul.bf16.gmra.mxu0 %v1537
      %v2349 = vpop.f32.mrf.mxu0
      %v2350 = vadd.f32 %v2270, %v2349
      %v2351 = vpop.f32.mrf.mxu0
      %v2352 = vadd.f32 %v2270, %v2351
      %2353 = vmatmul.bf16.gmra.mxu0 %v1538
      %v2354 = vpop.f32.mrf.mxu0
      %v2355 = vadd.f32 %v2270, %v2354
      %v2356 = vpop.f32.mrf.mxu0
      %v2357 = vadd.f32 %v2270, %v2356
      %2358 = vmatmul.bf16.gmra.mxu0 %v1539
      %v2359 = vpop.f32.mrf.mxu0
      %v2360 = vadd.f32 %v2270, %v2359
      %v2361 = vpop.f32.mrf.mxu0
      %v2362 = vadd.f32 %v2270, %v2361
      %2363 = vmatmul.bf16.gmra.mxu0 %v1540
      %v2364 = vpop.f32.mrf.mxu0
      %v2365 = vadd.f32 %v2270, %v2364
      %v2366 = vpop.f32.mrf.mxu0
      %v2367 = vadd.f32 %v2270, %v2366
      %2368 = vmatmul.bf16.gmra.mxu0 %v1541
      %v2369 = vpop.f32.mrf.mxu0
      %v2370 = vadd.f32 %v2270, %v2369
      %v2371 = vpop.f32.mrf.mxu0
      %v2372 = vadd.f32 %v2270, %v2371
      %2373 = vmatmul.bf16.gmra.mxu0 %v1542
      %v2374 = vpop.f32.mrf.mxu0
      %v2375 = vadd.f32 %v2270, %v2374
      %v2376 = vpop.f32.mrf.mxu0
      %v2377 = vadd.f32 %v2270, %v2376
      %2378 = vmatmul.bf16.gmra.mxu0 %v1543
      %v2379 = vpop.f32.mrf.mxu0
      %v2380 = vadd.f32 %v2270, %v2379
      %v2381 = vpop.f32.mrf.mxu0
      %v2382 = vadd.f32 %v2270, %v2381
      %2383 = vmatmul.bf16.gmra.mxu0 %v1544
      %v2384 = vpop.f32.mrf.mxu0
      %v2385 = vadd.f32 %v2270, %v2384
      %v2386 = vpop.f32.mrf.mxu0
      %v2387 = vadd.f32 %v2270, %v2386
      %2388 = vmatmul.bf16.gmra.mxu0 %v1545
      %v2389 = vpop.f32.mrf.mxu0
      %v2390 = vadd.f32 %v2270, %v2389
      %v2391 = vpop.f32.mrf.mxu0
      %v2392 = vadd.f32 %v2270, %v2391
      %2393 = vmatmul.bf16.gmra.mxu0 %v1546
      %v2394 = vpop.f32.mrf.mxu0
      %v2395 = vadd.f32 %v2270, %v2394
      %v2396 = vpop.f32.mrf.mxu0
      %v2397 = vadd.f32 %v2270, %v2396
      %2398 = vmatmul.bf16.gmra.mxu0 %v1547
      %v2399 = vpop.f32.mrf.mxu0
      %v2400 = vadd.f32 %v2270, %v2399
      %v2401 = vpop.f32.mrf.mxu0
      %v2402 = vadd.f32 %v2270, %v2401
      %2403 = vmatmul.bf16.gmra.mxu0 %v1548
      %v2404 = vpop.f32.mrf.mxu0
      %v2405 = vadd.f32 %v2270, %v2404
      %v2406 = vpop.f32.mrf.mxu0
      %v2407 = vadd.f32 %v2270, %v2406
      %2408 = vdwg.mxu0
      %vm2409 = vcmp.gt.f32.partialorder %v2330, 0.0
      %vm2410 = vcmp.gt.f32.partialorder %v2332, 0.0
      %vm2411 = vcmp.gt.f32.partialorder %v2335, 0.0
      %vm2412 = vcmp.gt.f32.partialorder %v2337, 0.0
      %vm2413 = vcmp.gt.f32.partialorder %v2340, 0.0
      %vm2414 = vcmp.gt.f32.partialorder %v2342, 0.0
      %vm2415 = vcmp.gt.f32.partialorder %v2345, 0.0
      %vm2416 = vcmp.gt.f32.partialorder %v2347, 0.0
      %vm2417 = vcmp.gt.f32.partialorder %v2350, 0.0
      %vm2418 = vcmp.gt.f32.partialorder %v2352, 0.0
      %vm2419 = vcmp.gt.f32.partialorder %v2355, 0.0
      %vm2420 = vcmp.gt.f32.partialorder %v2357, 0.0
      %vm2421 = vcmp.gt.f32.partialorder %v2360, 0.0
      %vm2422 = vcmp.gt.f32.partialorder %v2362, 0.0
      %vm2423 = vcmp.gt.f32.partialorder %v2365, 0.0
      %vm2424 = vcmp.gt.f32.partialorder %v2367, 0.0
      %vm2425 = vcmp.gt.f32.partialorder %v2370, 0.0
      %vm2426 = vcmp.gt.f32.partialorder %v2372, 0.0
      %vm2427 = vcmp.gt.f32.partialorder %v2375, 0.0
      %vm2428 = vcmp.gt.f32.partialorder %v2377, 0.0
      %vm2429 = vcmp.gt.f32.partialorder %v2380, 0.0
      %vm2430 = vcmp.gt.f32.partialorder %v2382, 0.0
      %vm2431 = vcmp.gt.f32.partialorder %v2385, 0.0
      %vm2432 = vcmp.gt.f32.partialorder %v2387, 0.0
      %vm2433 = vcmp.gt.f32.partialorder %v2390, 0.0
      %vm2434 = vcmp.gt.f32.partialorder %v2392, 0.0
      %vm2435 = vcmp.gt.f32.partialorder %v2395, 0.0
      %vm2436 = vcmp.gt.f32.partialorder %v2397, 0.0
      %vm2437 = vcmp.gt.f32.partialorder %v2400, 0.0
      %vm2438 = vcmp.gt.f32.partialorder %v2402, 0.0
      %vm2439 = vcmp.gt.f32.partialorder %v2405, 0.0
      %vm2440 = vcmp.gt.f32.partialorder %v2407, 0.0
      %v2441 = vmul.f32 %v2330, 0.01
      %v2442 = vmul.f32 %v2332, 0.01
      %v2443 = vmul.f32 %v2335, 0.01
      %v2444 = vmul.f32 %v2337, 0.01
      %v2445 = vmul.f32 %v2340, 0.01
      %v2446 = vmul.f32 %v2342, 0.01
      %v2447 = vmul.f32 %v2345, 0.01
      %v2448 = vmul.f32 %v2347, 0.01
      %v2449 = vmul.f32 %v2350, 0.01
      %v2450 = vmul.f32 %v2352, 0.01
      %v2451 = vmul.f32 %v2355, 0.01
      %v2452 = vmul.f32 %v2357, 0.01
      %v2453 = vmul.f32 %v2360, 0.01
      %v2454 = vmul.f32 %v2362, 0.01
      %v2455 = vmul.f32 %v2365, 0.01
      %v2456 = vmul.f32 %v2367, 0.01
      %v2457 = vmul.f32 %v2370, 0.01
      %v2458 = vmul.f32 %v2372, 0.01
      %v2459 = vmul.f32 %v2375, 0.01
      %v2460 = vmul.f32 %v2377, 0.01
      %v2461 = vmul.f32 %v2380, 0.01
      %v2462 = vmul.f32 %v2382, 0.01
      %v2463 = vmul.f32 %v2385, 0.01
      %v2464 = vmul.f32 %v2387, 0.01
      %v2465 = vmul.f32 %v2390, 0.01
      %v2466 = vmul.f32 %v2392, 0.01
      %v2467 = vmul.f32 %v2395, 0.01
      %v2468 = vmul.f32 %v2397, 0.01
      %v2469 = vmul.f32 %v2400, 0.01
      %v2470 = vmul.f32 %v2402, 0.01
      %v2471 = vmul.f32 %v2405, 0.01
      %v2472 = vmul.f32 %v2407, 0.01
      %v2473 = vsel %vm2409, %v2330, %v2441
      %v2474 = vsel %vm2410, %v2332, %v2442
      %v2475 = vsel %vm2411, %v2335, %v2443
      %v2476 = vsel %vm2412, %v2337, %v2444
      %v2477 = vsel %vm2413, %v2340, %v2445
      %v2478 = vsel %vm2414, %v2342, %v2446
      %v2479 = vsel %vm2415, %v2345, %v2447
      %v2480 = vsel %vm2416, %v2347, %v2448
      %v2481 = vsel %vm2417, %v2350, %v2449
      %v2482 = vsel %vm2418, %v2352, %v2450
      %v2483 = vsel %vm2419, %v2355, %v2451
      %v2484 = vsel %vm2420, %v2357, %v2452
      %v2485 = vsel %vm2421, %v2360, %v2453
      %v2486 = vsel %vm2422, %v2362, %v2454
      %v2487 = vsel %vm2423, %v2365, %v2455
      %v2488 = vsel %vm2424, %v2367, %v2456
      %v2489 = vsel %vm2425, %v2370, %v2457
      %v2490 = vsel %vm2426, %v2372, %v2458
      %v2491 = vsel %vm2427, %v2375, %v2459
      %v2492 = vsel %vm2428, %v2377, %v2460
      %v2493 = vsel %vm2429, %v2380, %v2461
      %v2494 = vsel %vm2430, %v2382, %v2462
      %v2495 = vsel %vm2431, %v2385, %v2463
      %v2496 = vsel %vm2432, %v2387, %v2464
      %v2497 = vsel %vm2433, %v2390, %v2465
      %v2498 = vsel %vm2434, %v2392, %v2466
      %v2499 = vsel %vm2435, %v2395, %v2467
      %v2500 = vsel %vm2436, %v2397, %v2468
      %v2501 = vsel %vm2437, %v2400, %v2469
      %v2502 = vsel %vm2438, %v2402, %v2470
      %v2503 = vsel %vm2439, %v2405, %v2471
      %v2504 = vsel %vm2440, %v2407, %v2472
      %v2505 = vpack.c.bf16 %v2474, %v2473
      %v2506 = vpack.c.bf16 %v2476, %v2475
      %v2507 = vpack.c.bf16 %v2478, %v2477
      %v2508 = vpack.c.bf16 %v2480, %v2479
      %v2509 = vpack.c.bf16 %v2482, %v2481
      %v2510 = vpack.c.bf16 %v2484, %v2483
      %v2511 = vpack.c.bf16 %v2486, %v2485
      %v2512 = vpack.c.bf16 %v2488, %v2487
      %v2513 = vpack.c.bf16 %v2490, %v2489
      %v2514 = vpack.c.bf16 %v2492, %v2491
      %v2515 = vpack.c.bf16 %v2494, %v2493
      %v2516 = vpack.c.bf16 %v2496, %v2495
      %v2517 = vpack.c.bf16 %v2498, %v2497
      %v2518 = vpack.c.bf16 %v2500, %v2499
      %v2519 = vpack.c.bf16 %v2502, %v2501
      %v2520 = vpack.c.bf16 %v2504, %v2503
      %s2521 = scalar_lea.vmem %s3, 512
      %v2522 = vld [vmem:[%s2521] sm:$0xf]
      %v2523 = vld [vmem:[%s2521 + $0x4] sm:$0xf]
      %v2524 = vld [vmem:[%s2521 + $0x8] sm:$0xf]
      %v2525 = vld [vmem:[%s2521 + $0xc] sm:$0xf]
      %v2526 = vld [vmem:[%s2521 + $0x10] sm:$0xf]
      %v2527 = vld [vmem:[%s2521 + $0x14] sm:$0xf]
      %v2528 = vld [vmem:[%s2521 + $0x18] sm:$0xf]
      %v2529 = vld [vmem:[%s2521 + $0x1c] sm:$0xf]
      %v2530 = vld [vmem:[%s2521 + $0x20] sm:$0xf]
      %v2531 = vld [vmem:[%s2521 + $0x24] sm:$0xf]
      %v2532 = vld [vmem:[%s2521 + $0x28] sm:$0xf]
      %v2533 = vld [vmem:[%s2521 + $0x2c] sm:$0xf]
      %v2534 = vld [vmem:[%s2521 + $0x30] sm:$0xf]
      %v2535 = vld [vmem:[%s2521 + $0x34] sm:$0xf]
      %v2536 = vld [vmem:[%s2521 + $0x38] sm:$0xf]
      %v2537 = vld [vmem:[%s2521 + $0x3c] sm:$0xf]
      %s2538 = scalar_lea.vmem %s4, 8
      %v2539 = vld [vmem:[%s2538] sm:$0x1]
      %v2541 = vperm.slane %v2539, 0
      %v2559 = vunpack.c.l.b16 %v2522
      %v2560 = vunpack.c.l.b16 %v2523
      %v2561 = vunpack.c.l.b16 %v2524
      %v2562 = vunpack.c.l.b16 %v2525
      %v2563 = vunpack.c.l.b16 %v2526
      %v2564 = vunpack.c.l.b16 %v2527
      %v2565 = vunpack.c.l.b16 %v2528
      %v2566 = vunpack.c.l.b16 %v2529
      %v2567 = vunpack.c.l.b16 %v2530
      %v2568 = vunpack.c.l.b16 %v2531
      %v2569 = vunpack.c.l.b16 %v2532
      %v2570 = vunpack.c.l.b16 %v2533
      %v2571 = vunpack.c.l.b16 %v2534
      %v2572 = vunpack.c.l.b16 %v2535
      %v2573 = vunpack.c.l.b16 %v2536
      %v2574 = vunpack.c.l.b16 %v2537
      %v2575 = vpack.c.b16 %v2560, %v2559
      %v2576 = vpack.c.b16 %v2562, %v2561
      %v2577 = vpack.c.b16 %v2564, %v2563
      %v2578 = vpack.c.b16 %v2566, %v2565
      %v2579 = vpack.c.b16 %v2568, %v2567
      %v2580 = vpack.c.b16 %v2570, %v2569
      %v2581 = vpack.c.b16 %v2572, %v2571
      %v2582 = vpack.c.b16 %v2574, %v2573
      %2591 = vmatpush.bf16.msra.mxu0 %v2582
      %2592 = vmatpush.bf16.msra.mxu0 %v2581
      %2593 = vmatpush.bf16.msra.mxu0 %v2580
      %2594 = vmatpush.bf16.msra.mxu0 %v2579
      %2595 = vmatpush.bf16.msra.mxu0 %v2578
      %2596 = vmatpush.bf16.msra.mxu0 %v2577
      %2597 = vmatpush.bf16.msra.mxu0 %v2576
      %2598 = vmatpush.bf16.msra.mxu0 %v2575
      %2599 = vmatmul.bf16.gmra.mxu0 %v2505
      %v2600 = vpop.f32.mrf.mxu0
      %v2601 = vadd.f32 %v2541, %v2600
      %v2602 = vpop.f32.mrf.mxu0
      %v2603 = vadd.f32 %v2541, %v2602
      %2604 = vmatmul.bf16.gmra.mxu0 %v2506
      %v2605 = vpop.f32.mrf.mxu0
      %v2606 = vadd.f32 %v2541, %v2605
      %v2607 = vpop.f32.mrf.mxu0
      %v2608 = vadd.f32 %v2541, %v2607
      %2609 = vmatmul.bf16.gmra.mxu0 %v2507
      %v2610 = vpop.f32.mrf.mxu0
      %v2611 = vadd.f32 %v2541, %v2610
      %v2612 = vpop.f32.mrf.mxu0
      %v2613 = vadd.f32 %v2541, %v2612
      %2614 = vmatmul.bf16.gmra.mxu0 %v2508
      %v2615 = vpop.f32.mrf.mxu0
      %v2616 = vadd.f32 %v2541, %v2615
      %v2617 = vpop.f32.mrf.mxu0
      %v2618 = vadd.f32 %v2541, %v2617
      %2619 = vmatmul.bf16.gmra.mxu0 %v2509
      %v2620 = vpop.f32.mrf.mxu0
      %v2621 = vadd.f32 %v2541, %v2620
      %v2622 = vpop.f32.mrf.mxu0
      %v2623 = vadd.f32 %v2541, %v2622
      %2624 = vmatmul.bf16.gmra.mxu0 %v2510
      %v2625 = vpop.f32.mrf.mxu0
      %v2626 = vadd.f32 %v2541, %v2625
      %v2627 = vpop.f32.mrf.mxu0
      %v2628 = vadd.f32 %v2541, %v2627
      %2629 = vmatmul.bf16.gmra.mxu0 %v2511
      %v2630 = vpop.f32.mrf.mxu0
      %v2631 = vadd.f32 %v2541, %v2630
      %v2632 = vpop.f32.mrf.mxu0
      %v2633 = vadd.f32 %v2541, %v2632
      %2634 = vmatmul.bf16.gmra.mxu0 %v2512
      %v2635 = vpop.f32.mrf.mxu0
      %v2636 = vadd.f32 %v2541, %v2635
      %v2637 = vpop.f32.mrf.mxu0
      %v2638 = vadd.f32 %v2541, %v2637
      %2639 = vmatmul.bf16.gmra.mxu0 %v2513
      %v2640 = vpop.f32.mrf.mxu0
      %v2641 = vadd.f32 %v2541, %v2640
      %v2642 = vpop.f32.mrf.mxu0
      %v2643 = vadd.f32 %v2541, %v2642
      %2644 = vmatmul.bf16.gmra.mxu0 %v2514
      %v2645 = vpop.f32.mrf.mxu0
      %v2646 = vadd.f32 %v2541, %v2645
      %v2647 = vpop.f32.mrf.mxu0
      %v2648 = vadd.f32 %v2541, %v2647
      %2649 = vmatmul.bf16.gmra.mxu0 %v2515
      %v2650 = vpop.f32.mrf.mxu0
      %v2651 = vadd.f32 %v2541, %v2650
      %v2652 = vpop.f32.mrf.mxu0
      %v2653 = vadd.f32 %v2541, %v2652
      %2654 = vmatmul.bf16.gmra.mxu0 %v2516
      %v2655 = vpop.f32.mrf.mxu0
      %v2656 = vadd.f32 %v2541, %v2655
      %v2657 = vpop.f32.mrf.mxu0
      %v2658 = vadd.f32 %v2541, %v2657
      %2659 = vmatmul.bf16.gmra.mxu0 %v2517
      %v2660 = vpop.f32.mrf.mxu0
      %v2661 = vadd.f32 %v2541, %v2660
      %v2662 = vpop.f32.mrf.mxu0
      %v2663 = vadd.f32 %v2541, %v2662
      %2664 = vmatmul.bf16.gmra.mxu0 %v2518
      %v2665 = vpop.f32.mrf.mxu0
      %v2666 = vadd.f32 %v2541, %v2665
      %v2667 = vpop.f32.mrf.mxu0
      %v2668 = vadd.f32 %v2541, %v2667
      %2669 = vmatmul.bf16.gmra.mxu0 %v2519
      %v2670 = vpop.f32.mrf.mxu0
      %v2671 = vadd.f32 %v2541, %v2670
      %v2672 = vpop.f32.mrf.mxu0
      %v2673 = vadd.f32 %v2541, %v2672
      %2674 = vmatmul.bf16.gmra.mxu0 %v2520
      %v2675 = vpop.f32.mrf.mxu0
      %v2676 = vadd.f32 %v2541, %v2675
      %v2677 = vpop.f32.mrf.mxu0
      %v2678 = vadd.f32 %v2541, %v2677
      %2679 = vdwg.mxu0
      %vm2680 = vcmp.gt.f32.partialorder %v2601, 0.0
      %vm2681 = vcmp.gt.f32.partialorder %v2603, 0.0
      %vm2682 = vcmp.gt.f32.partialorder %v2606, 0.0
      %vm2683 = vcmp.gt.f32.partialorder %v2608, 0.0
      %vm2684 = vcmp.gt.f32.partialorder %v2611, 0.0
      %vm2685 = vcmp.gt.f32.partialorder %v2613, 0.0
      %vm2686 = vcmp.gt.f32.partialorder %v2616, 0.0
      %vm2687 = vcmp.gt.f32.partialorder %v2618, 0.0
      %vm2688 = vcmp.gt.f32.partialorder %v2621, 0.0
      %vm2689 = vcmp.gt.f32.partialorder %v2623, 0.0
      %vm2690 = vcmp.gt.f32.partialorder %v2626, 0.0
      %vm2691 = vcmp.gt.f32.partialorder %v2628, 0.0
      %vm2692 = vcmp.gt.f32.partialorder %v2631, 0.0
      %vm2693 = vcmp.gt.f32.partialorder %v2633, 0.0
      %vm2694 = vcmp.gt.f32.partialorder %v2636, 0.0
      %vm2695 = vcmp.gt.f32.partialorder %v2638, 0.0
      %vm2696 = vcmp.gt.f32.partialorder %v2641, 0.0
      %vm2697 = vcmp.gt.f32.partialorder %v2643, 0.0
      %vm2698 = vcmp.gt.f32.partialorder %v2646, 0.0
      %vm2699 = vcmp.gt.f32.partialorder %v2648, 0.0
      %vm2700 = vcmp.gt.f32.partialorder %v2651, 0.0
      %vm2701 = vcmp.gt.f32.partialorder %v2653, 0.0
      %vm2702 = vcmp.gt.f32.partialorder %v2656, 0.0
      %vm2703 = vcmp.gt.f32.partialorder %v2658, 0.0
      %vm2704 = vcmp.gt.f32.partialorder %v2661, 0.0
      %vm2705 = vcmp.gt.f32.partialorder %v2663, 0.0
      %vm2706 = vcmp.gt.f32.partialorder %v2666, 0.0
      %vm2707 = vcmp.gt.f32.partialorder %v2668, 0.0
      %vm2708 = vcmp.gt.f32.partialorder %v2671, 0.0
      %vm2709 = vcmp.gt.f32.partialorder %v2673, 0.0
      %vm2710 = vcmp.gt.f32.partialorder %v2676, 0.0
      %vm2711 = vcmp.gt.f32.partialorder %v2678, 0.0
      %v2712 = vmul.f32 %v2601, 0.01
      %v2713 = vmul.f32 %v2603, 0.01
      %v2714 = vmul.f32 %v2606, 0.01
      %v2715 = vmul.f32 %v2608, 0.01
      %v2716 = vmul.f32 %v2611, 0.01
      %v2717 = vmul.f32 %v2613, 0.01
      %v2718 = vmul.f32 %v2616, 0.01
      %v2719 = vmul.f32 %v2618, 0.01
      %v2720 = vmul.f32 %v2621, 0.01
      %v2721 = vmul.f32 %v2623, 0.01
      %v2722 = vmul.f32 %v2626, 0.01
      %v2723 = vmul.f32 %v2628, 0.01
      %v2724 = vmul.f32 %v2631, 0.01
      %v2725 = vmul.f32 %v2633, 0.01
      %v2726 = vmul.f32 %v2636, 0.01
      %v2727 = vmul.f32 %v2638, 0.01
      %v2728 = vmul.f32 %v2641, 0.01
      %v2729 = vmul.f32 %v2643, 0.01
      %v2730 = vmul.f32 %v2646, 0.01
      %v2731 = vmul.f32 %v2648, 0.01
      %v2732 = vmul.f32 %v2651, 0.01
      %v2733 = vmul.f32 %v2653, 0.01
      %v2734 = vmul.f32 %v2656, 0.01
      %v2735 = vmul.f32 %v2658, 0.01
      %v2736 = vmul.f32 %v2661, 0.01
      %v2737 = vmul.f32 %v2663, 0.01
      %v2738 = vmul.f32 %v2666, 0.01
      %v2739 = vmul.f32 %v2668, 0.01
      %v2740 = vmul.f32 %v2671, 0.01
      %v2741 = vmul.f32 %v2673, 0.01
      %v2742 = vmul.f32 %v2676, 0.01
      %v2743 = vmul.f32 %v2678, 0.01
      %v2744 = vsel %vm2680, %v2601, %v2712
      %v2745 = vsel %vm2681, %v2603, %v2713
      %v2746 = vsel %vm2682, %v2606, %v2714
      %v2747 = vsel %vm2683, %v2608, %v2715
      %v2748 = vsel %vm2684, %v2611, %v2716
      %v2749 = vsel %vm2685, %v2613, %v2717
      %v2750 = vsel %vm2686, %v2616, %v2718
      %v2751 = vsel %vm2687, %v2618, %v2719
      %v2752 = vsel %vm2688, %v2621, %v2720
      %v2753 = vsel %vm2689, %v2623, %v2721
      %v2754 = vsel %vm2690, %v2626, %v2722
      %v2755 = vsel %vm2691, %v2628, %v2723
      %v2756 = vsel %vm2692, %v2631, %v2724
      %v2757 = vsel %vm2693, %v2633, %v2725
      %v2758 = vsel %vm2694, %v2636, %v2726
      %v2759 = vsel %vm2695, %v2638, %v2727
      %v2760 = vsel %vm2696, %v2641, %v2728
      %v2761 = vsel %vm2697, %v2643, %v2729
      %v2762 = vsel %vm2698, %v2646, %v2730
      %v2763 = vsel %vm2699, %v2648, %v2731
      %v2764 = vsel %vm2700, %v2651, %v2732
      %v2765 = vsel %vm2701, %v2653, %v2733
      %v2766 = vsel %vm2702, %v2656, %v2734
      %v2767 = vsel %vm2703, %v2658, %v2735
      %v2768 = vsel %vm2704, %v2661, %v2736
      %v2769 = vsel %vm2705, %v2663, %v2737
      %v2770 = vsel %vm2706, %v2666, %v2738
      %v2771 = vsel %vm2707, %v2668, %v2739
      %v2772 = vsel %vm2708, %v2671, %v2740
      %v2773 = vsel %vm2709, %v2673, %v2741
      %v2774 = vsel %vm2710, %v2676, %v2742
      %v2775 = vsel %vm2711, %v2678, %v2743
      %v2776 = vpack.c.bf16 %v2745, %v2744
      %v2777 = vpack.c.bf16 %v2747, %v2746
      %v2778 = vpack.c.bf16 %v2749, %v2748
      %v2779 = vpack.c.bf16 %v2751, %v2750
      %v2780 = vpack.c.bf16 %v2753, %v2752
      %v2781 = vpack.c.bf16 %v2755, %v2754
      %v2782 = vpack.c.bf16 %v2757, %v2756
      %v2783 = vpack.c.bf16 %v2759, %v2758
      %v2784 = vpack.c.bf16 %v2761, %v2760
      %v2785 = vpack.c.bf16 %v2763, %v2762
      %v2786 = vpack.c.bf16 %v2765, %v2764
      %v2787 = vpack.c.bf16 %v2767, %v2766
      %v2788 = vpack.c.bf16 %v2769, %v2768
      %v2789 = vpack.c.bf16 %v2771, %v2770
      %v2790 = vpack.c.bf16 %v2773, %v2772
      %v2791 = vpack.c.bf16 %v2775, %v2774
      %s2792 = scalar_lea.vmem %s3, 576
      %v2793 = vld [vmem:[%s2792] sm:$0xf]
      %v2794 = vld [vmem:[%s2792 + $0x4] sm:$0xf]
      %v2795 = vld [vmem:[%s2792 + $0x8] sm:$0xf]
      %v2796 = vld [vmem:[%s2792 + $0xc] sm:$0xf]
      %v2797 = vld [vmem:[%s2792 + $0x10] sm:$0xf]
      %v2798 = vld [vmem:[%s2792 + $0x14] sm:$0xf]
      %v2799 = vld [vmem:[%s2792 + $0x18] sm:$0xf]
      %v2800 = vld [vmem:[%s2792 + $0x1c] sm:$0xf]
      %v2801 = vld [vmem:[%s2792 + $0x20] sm:$0xf]
      %v2802 = vld [vmem:[%s2792 + $0x24] sm:$0xf]
      %v2803 = vld [vmem:[%s2792 + $0x28] sm:$0xf]
      %v2804 = vld [vmem:[%s2792 + $0x2c] sm:$0xf]
      %v2805 = vld [vmem:[%s2792 + $0x30] sm:$0xf]
      %v2806 = vld [vmem:[%s2792 + $0x34] sm:$0xf]
      %v2807 = vld [vmem:[%s2792 + $0x38] sm:$0xf]
      %v2808 = vld [vmem:[%s2792 + $0x3c] sm:$0xf]
      %s2809 = scalar_lea.vmem %s4, 9
      %v2810 = vld [vmem:[%s2809] sm:$0x1]
      %v2812 = vperm.slane %v2810, 0
      %v2830 = vunpack.c.l.b16 %v2793
      %v2831 = vunpack.c.l.b16 %v2794
      %v2832 = vunpack.c.l.b16 %v2795
      %v2833 = vunpack.c.l.b16 %v2796
      %v2834 = vunpack.c.l.b16 %v2797
      %v2835 = vunpack.c.l.b16 %v2798
      %v2836 = vunpack.c.l.b16 %v2799
      %v2837 = vunpack.c.l.b16 %v2800
      %v2838 = vunpack.c.l.b16 %v2801
      %v2839 = vunpack.c.l.b16 %v2802
      %v2840 = vunpack.c.l.b16 %v2803
      %v2841 = vunpack.c.l.b16 %v2804
      %v2842 = vunpack.c.l.b16 %v2805
      %v2843 = vunpack.c.l.b16 %v2806
      %v2844 = vunpack.c.l.b16 %v2807
      %v2845 = vunpack.c.l.b16 %v2808
      %v2846 = vpack.c.b16 %v2831, %v2830
      %v2847 = vpack.c.b16 %v2833, %v2832
      %v2848 = vpack.c.b16 %v2835, %v2834
      %v2849 = vpack.c.b16 %v2837, %v2836
      %v2850 = vpack.c.b16 %v2839, %v2838
      %v2851 = vpack.c.b16 %v2841, %v2840
      %v2852 = vpack.c.b16 %v2843, %v2842
      %v2853 = vpack.c.b16 %v2845, %v2844
      %2862 = vmatpush.bf16.msra.mxu0 %v2853
      %2863 = vmatpush.bf16.msra.mxu0 %v2852
      %2864 = vmatpush.bf16.msra.mxu0 %v2851
      %2865 = vmatpush.bf16.msra.mxu0 %v2850
      %2866 = vmatpush.bf16.msra.mxu0 %v2849
      %2867 = vmatpush.bf16.msra.mxu0 %v2848
      %2868 = vmatpush.bf16.msra.mxu0 %v2847
      %2869 = vmatpush.bf16.msra.mxu0 %v2846
      %2870 = vmatmul.bf16.gmra.mxu0 %v2776
      %v2871 = vpop.f32.mrf.mxu0
      %v2872 = vadd.f32 %v2812, %v2871
      %v2873 = vpop.f32.mrf.mxu0
      %v2874 = vadd.f32 %v2812, %v2873
      %2875 = vmatmul.bf16.gmra.mxu0 %v2777
      %v2876 = vpop.f32.mrf.mxu0
      %v2877 = vadd.f32 %v2812, %v2876
      %v2878 = vpop.f32.mrf.mxu0
      %v2879 = vadd.f32 %v2812, %v2878
      %2880 = vmatmul.bf16.gmra.mxu0 %v2778
      %v2881 = vpop.f32.mrf.mxu0
      %v2882 = vadd.f32 %v2812, %v2881
      %v2883 = vpop.f32.mrf.mxu0
      %v2884 = vadd.f32 %v2812, %v2883
      %2885 = vmatmul.bf16.gmra.mxu0 %v2779
      %v2886 = vpop.f32.mrf.mxu0
      %v2887 = vadd.f32 %v2812, %v2886
      %v2888 = vpop.f32.mrf.mxu0
      %v2889 = vadd.f32 %v2812, %v2888
      %2890 = vmatmul.bf16.gmra.mxu0 %v2780
      %v2891 = vpop.f32.mrf.mxu0
      %v2892 = vadd.f32 %v2812, %v2891
      %v2893 = vpop.f32.mrf.mxu0
      %v2894 = vadd.f32 %v2812, %v2893
      %2895 = vmatmul.bf16.gmra.mxu0 %v2781
      %v2896 = vpop.f32.mrf.mxu0
      %v2897 = vadd.f32 %v2812, %v2896
      %v2898 = vpop.f32.mrf.mxu0
      %v2899 = vadd.f32 %v2812, %v2898
      %2900 = vmatmul.bf16.gmra.mxu0 %v2782
      %v2901 = vpop.f32.mrf.mxu0
      %v2902 = vadd.f32 %v2812, %v2901
      %v2903 = vpop.f32.mrf.mxu0
      %v2904 = vadd.f32 %v2812, %v2903
      %2905 = vmatmul.bf16.gmra.mxu0 %v2783
      %v2906 = vpop.f32.mrf.mxu0
      %v2907 = vadd.f32 %v2812, %v2906
      %v2908 = vpop.f32.mrf.mxu0
      %v2909 = vadd.f32 %v2812, %v2908
      %2910 = vmatmul.bf16.gmra.mxu0 %v2784
      %v2911 = vpop.f32.mrf.mxu0
      %v2912 = vadd.f32 %v2812, %v2911
      %v2913 = vpop.f32.mrf.mxu0
      %v2914 = vadd.f32 %v2812, %v2913
      %2915 = vmatmul.bf16.gmra.mxu0 %v2785
      %v2916 = vpop.f32.mrf.mxu0
      %v2917 = vadd.f32 %v2812, %v2916
      %v2918 = vpop.f32.mrf.mxu0
      %v2919 = vadd.f32 %v2812, %v2918
      %2920 = vmatmul.bf16.gmra.mxu0 %v2786
      %v2921 = vpop.f32.mrf.mxu0
      %v2922 = vadd.f32 %v2812, %v2921
      %v2923 = vpop.f32.mrf.mxu0
      %v2924 = vadd.f32 %v2812, %v2923
      %2925 = vmatmul.bf16.gmra.mxu0 %v2787
      %v2926 = vpop.f32.mrf.mxu0
      %v2927 = vadd.f32 %v2812, %v2926
      %v2928 = vpop.f32.mrf.mxu0
      %v2929 = vadd.f32 %v2812, %v2928
      %2930 = vmatmul.bf16.gmra.mxu0 %v2788
      %v2931 = vpop.f32.mrf.mxu0
      %v2932 = vadd.f32 %v2812, %v2931
      %v2933 = vpop.f32.mrf.mxu0
      %v2934 = vadd.f32 %v2812, %v2933
      %2935 = vmatmul.bf16.gmra.mxu0 %v2789
      %v2936 = vpop.f32.mrf.mxu0
      %v2937 = vadd.f32 %v2812, %v2936
      %v2938 = vpop.f32.mrf.mxu0
      %v2939 = vadd.f32 %v2812, %v2938
      %2940 = vmatmul.bf16.gmra.mxu0 %v2790
      %v2941 = vpop.f32.mrf.mxu0
      %v2942 = vadd.f32 %v2812, %v2941
      %v2943 = vpop.f32.mrf.mxu0
      %v2944 = vadd.f32 %v2812, %v2943
      %2945 = vmatmul.bf16.gmra.mxu0 %v2791
      %v2946 = vpop.f32.mrf.mxu0
      %v2947 = vadd.f32 %v2812, %v2946
      %v2948 = vpop.f32.mrf.mxu0
      %v2949 = vadd.f32 %v2812, %v2948
      %2950 = vdwg.mxu0
      %v2951 = vadd.f32 %v1183, %v2171
      %v2952 = vadd.f32 %v1185, %v2173
      %v2953 = vadd.f32 %v1188, %v2176
      %v2954 = vadd.f32 %v1190, %v2178
      %v2955 = vadd.f32 %v1193, %v2181
      %v2956 = vadd.f32 %v1195, %v2183
      %v2957 = vadd.f32 %v1198, %v2186
      %v2958 = vadd.f32 %v1200, %v2188
      %v2959 = vadd.f32 %v1203, %v2191
      %v2960 = vadd.f32 %v1205, %v2193
      %v2961 = vadd.f32 %v1208, %v2196
      %v2962 = vadd.f32 %v1210, %v2198
      %v2963 = vadd.f32 %v1213, %v2201
      %v2964 = vadd.f32 %v1215, %v2203
      %v2965 = vadd.f32 %v1218, %v2206
      %v2966 = vadd.f32 %v1220, %v2208
      %v2967 = vadd.f32 %v1223, %v2211
      %v2968 = vadd.f32 %v1225, %v2213
      %v2969 = vadd.f32 %v1228, %v2216
      %v2970 = vadd.f32 %v1230, %v2218
      %v2971 = vadd.f32 %v1233, %v2221
      %v2972 = vadd.f32 %v1235, %v2223
      %v2973 = vadd.f32 %v1238, %v2226
      %v2974 = vadd.f32 %v1240, %v2228
      %v2975 = vadd.f32 %v1243, %v2231
      %v2976 = vadd.f32 %v1245, %v2233
      %v2977 = vadd.f32 %v1248, %v2236
      %v2978 = vadd.f32 %v1250, %v2238
      %v2979 = vadd.f32 %v1253, %v2241
      %v2980 = vadd.f32 %v1255, %v2243
      %v2981 = vadd.f32 %v1258, %v2246
      %v2982 = vadd.f32 %v1260, %v2248
      %v2983 = vadd.f32 %v2951, %v2872
      %v2984 = vadd.f32 %v2952, %v2874
      %v2985 = vadd.f32 %v2953, %v2877
      %v2986 = vadd.f32 %v2954, %v2879
      %v2987 = vadd.f32 %v2955, %v2882
      %v2988 = vadd.f32 %v2956, %v2884
      %v2989 = vadd.f32 %v2957, %v2887
      %v2990 = vadd.f32 %v2958, %v2889
      %v2991 = vadd.f32 %v2959, %v2892
      %v2992 = vadd.f32 %v2960, %v2894
      %v2993 = vadd.f32 %v2961, %v2897
      %v2994 = vadd.f32 %v2962, %v2899
      %v2995 = vadd.f32 %v2963, %v2902
      %v2996 = vadd.f32 %v2964, %v2904
      %v2997 = vadd.f32 %v2965, %v2907
      %v2998 = vadd.f32 %v2966, %v2909
      %v2999 = vadd.f32 %v2967, %v2912
      %v3000 = vadd.f32 %v2968, %v2914
      %v3001 = vadd.f32 %v2969, %v2917
      %v3002 = vadd.f32 %v2970, %v2919
      %v3003 = vadd.f32 %v2971, %v2922
      %v3004 = vadd.f32 %v2972, %v2924
      %v3005 = vadd.f32 %v2973, %v2927
      %v3006 = vadd.f32 %v2974, %v2929
      %v3007 = vadd.f32 %v2975, %v2932
      %v3008 = vadd.f32 %v2976, %v2934
      %v3009 = vadd.f32 %v2977, %v2937
      %v3010 = vadd.f32 %v2978, %v2939
      %v3011 = vadd.f32 %v2979, %v2942
      %v3012 = vadd.f32 %v2980, %v2944
      %v3013 = vadd.f32 %v2981, %v2947
      %v3014 = vadd.f32 %v2982, %v2949
      %3015 = vst [vmem:[%s226] sm:$0xff] %v2983
      %3016 = vst [vmem:[%s226 + $0x8] sm:$0xff] %v2984
      %3017 = vst [vmem:[%s226 + $0x10] sm:$0xff] %v2985
      %3018 = vst [vmem:[%s226 + $0x18] sm:$0xff] %v2986
      %3019 = vst [vmem:[%s226 + $0x20] sm:$0xff] %v2987
      %3020 = vst [vmem:[%s226 + $0x28] sm:$0xff] %v2988
      %3021 = vst [vmem:[%s226 + $0x30] sm:$0xff] %v2989
      %3022 = vst [vmem:[%s226 + $0x38] sm:$0xff] %v2990
      %3023 = vst [vmem:[%s226 + $0x40] sm:$0xff] %v2991
      %3024 = vst [vmem:[%s226 + $0x48] sm:$0xff] %v2992
      %3025 = vst [vmem:[%s226 + $0x50] sm:$0xff] %v2993
      %3026 = vst [vmem:[%s226 + $0x58] sm:$0xff] %v2994
      %3027 = vst [vmem:[%s226 + $0x60] sm:$0xff] %v2995
      %3028 = vst [vmem:[%s226 + $0x68] sm:$0xff] %v2996
      %3029 = vst [vmem:[%s226 + $0x70] sm:$0xff] %v2997
      %3030 = vst [vmem:[%s226 + $0x78] sm:$0xff] %v2998
      %3031 = vst [vmem:[%s226 + $0x80] sm:$0xff] %v2999
      %3032 = vst [vmem:[%s226 + $0x88] sm:$0xff] %v3000
      %3033 = vst [vmem:[%s226 + $0x90] sm:$0xff] %v3001
      %3034 = vst [vmem:[%s226 + $0x98] sm:$0xff] %v3002
      %3035 = vst [vmem:[%s226 + $0xa0] sm:$0xff] %v3003
      %3036 = vst [vmem:[%s226 + $0xa8] sm:$0xff] %v3004
      %3037 = vst [vmem:[%s226 + $0xb0] sm:$0xff] %v3005
      %3038 = vst [vmem:[%s226 + $0xb8] sm:$0xff] %v3006
      %3039 = vst [vmem:[%s226 + $0xc0] sm:$0xff] %v3007
      %3040 = vst [vmem:[%s226 + $0xc8] sm:$0xff] %v3008
      %3041 = vst [vmem:[%s226 + $0xd0] sm:$0xff] %v3009
      %3042 = vst [vmem:[%s226 + $0xd8] sm:$0xff] %v3010
      %3043 = vst [vmem:[%s226 + $0xe0] sm:$0xff] %v3011
      %3044 = vst [vmem:[%s226 + $0xe8] sm:$0xff] %v3012
      %3045 = vst [vmem:[%s226 + $0xf0] sm:$0xff] %v3013
      %3046 = vst [vmem:[%s226 + $0xf8] sm:$0xff] %v3014
      %s3047 = smul.u32 32, %s16
      %p3048 = scmp.lt.s32.totalorder %s3047, 63
      %s3049 = scalar_select %p3048, %s3047, 63
      %s3050 = smul.addr %s3049, 8
      %s3051 = scalar_lea.vmem %s5, %s3050
      // Predicated region
      $region41: #{fcsae_forward.1} parent=39 // pred_check
        %p3052 = pneg %p144
      $region42: #{fcsae_forward.1} parent=39 // pred_check_branch
        %3054 = sbr.rel (%p3052) target = $region44
      $region43: #{fcsae_forward.1} parent=39 // pred_region
        %s3055 = smul.u32 32, %s16
      $region44: #{fcsae_forward.1} parent=39 // pred_fallthru
        _
    $region40: #{fcsae_forward.1} parent=5 // pred_fallthru
      _
    %p3056 = scmp.le.s32.totalorder 2, %s11
    // Predicated region
    $region45: #{fcsae_forward.1} parent=5 // pred_check
      %p3057 = pneg %p3056
    $region46: #{fcsae_forward.1} parent=5 // pred_check_branch
      %3059 = sbr.rel (%p3057) target = $region48
    $region47: #{fcsae_forward.1} parent=5 // pred_region
      %s3060 = ssub.s32 %s11, 2
      // Predicated region
      $region49: #{fcsae_forward.1} parent=47 // pred_check
        %p3061 = pneg %p150
      $region50: #{fcsae_forward.1} parent=47 // pred_check_branch
        %3063 = sbr.rel (%p3061) target = $region52
      $region51: #{fcsae_forward.1} parent=47 // pred_region
        %s3064 = smul.u32 32, %s17
        %p3065 = scmp.lt.s32.totalorder %s3064, 63
        %s3066 = scalar_select %p3065, %s3064, 63
        %s3067 = smul.addr %s3066, 8
        %s3068 = scalar_lea.vmem %s5, %s3067
      $region52: #{fcsae_forward.1} parent=47 // pred_fallthru
        _
    $region48: #{fcsae_forward.1} parent=5 // pred_fallthru
      _
  $region6: #{fcsae_forward.1} parent=0 // loop_footer
    %s15 = sadd.s32 1, %s11
  $region7: #{fcsae_forward.1} parent=0 // loop_footer_branch
    %10 = sbr.rel target = $region3
  $region8: #{fcsae_forward.1} parent=0 // loop_exit
    _

</llo_original>
